<compile_context>
chip_gen: v7x
topology: tpu7x:2x2x1
jax: 0.10.0
libtpu: 0.0.40
codegen_flags: <defaults>
</compile_context>

<pallas_src>
import jax
import jax.numpy as jnp
from jax.experimental import pallas as pl
from jax.experimental.pallas import tpu as pltpu


# ----------------------------------------------------------------------------
# Fused whole-network kernel (one grid step == one batch element)
# ----------------------------------------------------------------------------
def _cnn4_kernel(x_ref,                              # (L, 1) raw features
                 w0_ref, b0_ref, s0_ref, t0_ref,     # block 0: (5,64), (1,64)x3
                 wb_ref, bb_ref, sb_ref, tb_ref,     # blocks 1-4: (4,5,64,64), (4,1,64)x3
                 wh_ref, bh_ref,                     # head: (64,NC), (1,NC)
                 o_ref,                              # (1, NC)
                 xpad0_ref,                          # (L+4, 1)      scratch
                 xpad_ref,                           # (L//2+4, 64)  scratch
                 y_ref):                             # (L, 64)       scratch
    L0 = x_ref.shape[0]
    C = 64

    zeros2_1 = jnp.zeros((2, 1), jnp.float32)
    zeros2_c = jnp.zeros((2, C), jnp.float32)

    # ---------------- Block 0 (Cin = 1): VPU broadcast path -----------------
    # Zero only the 2-row halos, then write the interior.
    xpad0_ref[0:2, :] = zeros2_1
    xpad0_ref[2:2 + L0, :] = x_ref[...]
    xpad0_ref[2 + L0:4 + L0, :] = zeros2_1

    acc = jnp.zeros((L0, C), jnp.float32)
    for t in range(5):                               # conv(k=1,3,5) fused per tap
        acc = acc + xpad0_ref[pl.ds(t, L0), :] * w0_ref[pl.ds(t, 1), :]
    z = jnp.maximum(acc + b0_ref[...], 0.0) * s0_ref[...] + t0_ref[...]

    # MaxPool1d(2): single contiguous store, then stride-2 sublane reads.
    y_ref[0:L0, :] = z
    Lc = L0 // 2
    h = jnp.maximum(y_ref[pl.ds(0, Lc, 2), :], y_ref[pl.ds(1, Lc, 2), :])

    # Stage as padded input of block 1 (halo rows zeroed, interior written).
    xpad_ref[0:2, :] = zeros2_c
    xpad_ref[2:2 + Lc, :] = h
    xpad_ref[2 + Lc:4 + Lc, :] = zeros2_c

    # ---------------- Blocks 1..4 (Cin = 64): MXU path -----------------------
    for blk in range(4):
        acc = jnp.zeros((Lc, C), jnp.float32)
        for t in range(5):                           # 5 branch-fused (64,64) taps
            acc = acc + jnp.dot(xpad_ref[pl.ds(t, Lc), :], wb_ref[blk, t],
                                preferred_element_type=jnp.float32)
        z = jnp.maximum(acc + bb_ref[blk], 0.0) * sb_ref[blk] + tb_ref[blk]

        y_ref[0:Lc, :] = z
        Lc = Lc // 2
        h = jnp.maximum(y_ref[pl.ds(0, Lc, 2), :], y_ref[pl.ds(1, Lc, 2), :])

        if blk < 3:                                  # stage next block's input
            xpad_ref[2:2 + Lc, :] = h
            xpad_ref[2 + Lc:4 + Lc, :] = zeros2_c

    # ---------------- Head: AdaptiveAvgPool1d(1) + Conv1d(64, NC, k=1) -------
    # mean(xW + b) == mean(x)W + b : reduce first, then one tiny matmul.
    m = jnp.mean(h, axis=0, keepdims=True)                       # (1, 64)
    o_ref[...] = (jnp.dot(m, wh_ref[...], preferred_element_type=jnp.float32)
                  + bh_ref[...]).astype(o_ref.dtype)


# ----------------------------------------------------------------------------
# Wrapper (pure glue: reshape + BlockSpecs)
# ----------------------------------------------------------------------------
def cnn4_pallas(x, p):
    """x: (B, L) float features -> (B, 1, num_class)."""
    B, L = x.shape
    assert L % 32 == 0 and L >= 32, "num_feat must be a multiple of 32"
    NC = p["wh"].shape[-1]
    xc = x.astype(jnp.float32)[:, :, None]           # (B, L, 1) channels-last

    def rep(a):                                       # whole array, replicated
        return pl.BlockSpec(a.shape, lambda b, _n=a.ndim: (0,) * _n)

    args = (xc, p["w0"], p["b0"], p["s0"], p["t0"],
            p["wb"], p["bb"], p["sb"], p["tb"], p["wh"], p["bh"])
    in_specs = [pl.BlockSpec((None, L, 1), lambda b: (b, 0, 0))]
    in_specs += [rep(a) for a in args[1:]]

    return pl.pallas_call(
        _cnn4_kernel,
        out_shape=jax.ShapeDtypeStruct((B, 1, NC), jnp.float32),
        grid=(B,),
        in_specs=in_specs,
        out_specs=pl.BlockSpec((None, 1, NC), lambda b: (b, 0, 0)),
        scratch_shapes=[
            pltpu.VMEM((L + 4, 1), jnp.float32),       # block-0 padded input
            pltpu.VMEM((L // 2 + 4, 64), jnp.float32), # padded input, blocks 1..4
            pltpu.VMEM((L, 64), jnp.float32),          # pre-pool activations
        ],
        compiler_params=pltpu.CompilerParams(
            dimension_semantics=("parallel",)),        # batch -> megacore on v7x
    )(*args)


@jax.jit
def cnn4_forward(x, params):
    # torch: x.unsqueeze(1) -> conv stack -> squeeze(-1)
    return cnn4_pallas(x, params)[:, 0, :]


# ----------------------------------------------------------------------------
# Deterministic synthetic parameters (torch layouts), fused for the kernel
# ----------------------------------------------------------------------------
def _fold_bn(key, c):
    k1, k2, k3, k4 = jax.random.split(key, 4)
    gamma = 1.0 + 0.1 * jax.random.normal(k1, (c,), jnp.float32)
    beta = 0.1 * jax.random.normal(k2, (c,), jnp.float32)
    mean = 0.1 * jax.random.normal(k3, (c,), jnp.float32)
    var = jax.random.uniform(k4, (c,), jnp.float32, minval=0.5, maxval=1.5)
    s = gamma * jax.lax.rsqrt(var + 1e-5)
    return s, beta - mean * s


def _init_conv(key, cout, cin, k):
    kw, kb = jax.random.split(key)
    bound = 1.0 / jnp.sqrt(jnp.float32(cin * k))
    w = jax.random.uniform(kw, (cout, cin, k), jnp.float32, -bound, bound)
    b = jax.random.uniform(kb, (cout,), jnp.float32, -bound, bound)
    return w, b


def _fuse_block(key, cin):
    """Branch-fused per-tap weights: W (5, cin, 64) plus b/s/t (1, 64)."""
    ks = jax.random.split(key, 6)
    w1, b1 = _init_conv(ks[0], 32, cin, 1)            # conv_1
    w3, b3 = _init_conv(ks[1], 16, cin, 3)            # conv_3
    w5, b5 = _init_conv(ks[2], 16, cin, 5)            # conv_5
    s1, t1 = _fold_bn(ks[3], 32)
    s3, t3 = _fold_bn(ks[4], 16)
    s5, t5 = _fold_bn(ks[5], 16)

    # out[l] = sum_t xpad[l+t] @ W[t]  with xpad = pad(x, 2):
    #   conv_1 (pad 0) -> tap 2, conv_3 (pad 1) -> taps 1..3, conv_5 -> taps 0..4
    # Channel order matches torch.concat((y1, y2, y3), dim=1): [32 | 16 | 16].
    W = jnp.zeros((5, cin, 64), jnp.float32)
    W = W.at[2, :, 0:32].set(w1[:, :, 0].T)
    for k in range(3):
        W = W.at[k + 1, :, 32:48].set(w3[:, :, k].T)
    for k in range(5):
        W = W.at[k, :, 48:64].set(w5[:, :, k].T)
    b = jnp.concatenate([b1, b3, b5])[None, :]
    s = jnp.concatenate([s1, s3, s5])[None, :]
    t = jnp.concatenate([t1, t3, t5])[None, :]
    return W, b, s, t


def init_params(key, num_class):
    keys = jax.random.split(key, 6)
    blocks = [_fuse_block(keys[i], 1 if i == 0 else 64) for i in range(5)]
    W0, b0, s0, t0 = blocks[0]

    kw, kb = jax.random.split(keys[5])
    bound = 1.0 / 8.0                                  # 1/sqrt(64*1)
    wh = jax.random.uniform(kw, (num_class, 64, 1), jnp.float32, -bound, bound)
    bh = jax.random.uniform(kb, (num_class,), jnp.float32, -bound, bound)

    return {
        "w0": W0[:, 0, :], "b0": b0, "s0": s0, "t0": t0,        # block 0 (Cin=1)
        "wb": jnp.stack([blk[0] for blk in blocks[1:]]),        # (4, 5, 64, 64)
        "bb": jnp.stack([blk[1] for blk in blocks[1:]]),        # (4, 1, 64)
        "sb": jnp.stack([blk[2] for blk in blocks[1:]]),
        "tb": jnp.stack([blk[3] for blk in blocks[1:]]),
        "wh": wh[:, :, 0].T, "bh": bh[None, :],                 # head
    }


# ----------------------------------------------------------------------------
# Pure-jnp reference of the same (eval-mode) network, for a correctness check
# ----------------------------------------------------------------------------
def cnn4_reference(x, p):
    def block(h, W, b, s, t):
        B, L, _ = h.shape
        hp = jnp.pad(h, ((0, 0), (2, 2), (0, 0)))
        acc = jnp.zeros((B, L, 64), jnp.float32)
        for tap in range(5):
            acc = acc + jnp.einsum("blc,cd->bld", hp[:, tap:tap + L, :], W[tap])
        z = jnp.maximum(acc + b, 0.0) * s + t
        return z.reshape(B, L // 2, 2, 64).max(axis=2)

    h = x.astype(jnp.float32)[:, :, None]
    h = block(h, p["w0"][:, None, :], p["b0"], p["s0"], p["t0"])
    for i in range(4):
        h = block(h, p["wb"][i], p["bb"][i], p["sb"][i], p["tb"][i])
    return h.mean(axis=1) @ p["wh"] + p["bh"]


if __name__ == "__main__":
    key = jax.random.PRNGKey(0)
    kx, kp = jax.random.split(key)

    B, num_feat, num_class = 2, 128, 8        # length halves 5 times: 128 -> 4
    x = jax.random.normal(kx, (B, num_feat), jnp.float32)
    params = init_params(kp, num_class)

    out = cnn4_forward(x, params)
    jax.block_until_ready(out)
    assert out.shape == (B, num_class), out.shape

    ref = cnn4_reference(x, params)
    err = float(jnp.max(jnp.abs(out - ref)))
    assert err < 5e-2, f"kernel/reference mismatch: max abs err = {err}"

    print("KERNEL_OK")
</pallas_src>

<mosaic_0001>
module attributes {stable_mosaic.version = 11 : i64} {
  func.func @_cnn4_kernel(%arg0: i32, %arg1: memref<1x128x1xf32, #tpu.memory_space<vmem>>, %arg2: memref<5x64xf32, #tpu.memory_space<vmem>>, %arg3: memref<1x64xf32, #tpu.memory_space<vmem>>, %arg4: memref<1x64xf32, #tpu.memory_space<vmem>>, %arg5: memref<1x64xf32, #tpu.memory_space<vmem>>, %arg6: memref<4x5x64x64xf32, #tpu.memory_space<vmem>>, %arg7: memref<4x1x64xf32, #tpu.memory_space<vmem>>, %arg8: memref<4x1x64xf32, #tpu.memory_space<vmem>>, %arg9: memref<4x1x64xf32, #tpu.memory_space<vmem>>, %arg10: memref<64x8xf32, #tpu.memory_space<vmem>>, %arg11: memref<1x8xf32, #tpu.memory_space<vmem>>, %arg12: memref<1x1x8xf32, #tpu.memory_space<vmem>>, %arg13: memref<132x1xf32, #tpu.memory_space<vmem>>, %arg14: memref<68x64xf32, #tpu.memory_space<vmem>>, %arg15: memref<128x64xf32, #tpu.memory_space<vmem>>) attributes {dimension_semantics = [#tpu.dimension_semantics<parallel>], iteration_bounds = array<i64: 2>, scalar_prefetch = 0 : i64, scratch_operands = 3 : i64, tpu.core_type = #tpu.core_type<tc>, window_params = [{transform_indices = @transform_0, window_bounds = array<i64: 1, 128, 1>}, {pipeline_mode = #tpu.pipeline_mode<synchronous>, transform_indices = @transform_1, window_bounds = array<i64: 5, 64>}, {pipeline_mode = #tpu.pipeline_mode<synchronous>, transform_indices = @transform_2, window_bounds = array<i64: 1, 64>}, {pipeline_mode = #tpu.pipeline_mode<synchronous>, transform_indices = @transform_3, window_bounds = array<i64: 1, 64>}, {pipeline_mode = #tpu.pipeline_mode<synchronous>, transform_indices = @transform_4, window_bounds = array<i64: 1, 64>}, {pipeline_mode = #tpu.pipeline_mode<synchronous>, transform_indices = @transform_5, window_bounds = array<i64: 4, 5, 64, 64>}, {pipeline_mode = #tpu.pipeline_mode<synchronous>, transform_indices = @transform_6, window_bounds = array<i64: 4, 1, 64>}, {pipeline_mode = #tpu.pipeline_mode<synchronous>, transform_indices = @transform_7, window_bounds = array<i64: 4, 1, 64>}, {pipeline_mode = #tpu.pipeline_mode<synchronous>, transform_indices = @transform_8, window_bounds = array<i64: 4, 1, 64>}, {pipeline_mode = #tpu.pipeline_mode<synchronous>, transform_indices = @transform_9, window_bounds = array<i64: 64, 8>}, {pipeline_mode = #tpu.pipeline_mode<synchronous>, transform_indices = @transform_10, window_bounds = array<i64: 1, 8>}, {transform_indices = @transform_11, window_bounds = array<i64: 1, 1, 8>}]} {
    %cst = arith.constant 0.000000e+00 : f32
    %0 = vector.broadcast %cst : f32 to vector<2x1xf32>
    %cst_0 = arith.constant 0.000000e+00 : f32
    %1 = vector.broadcast %cst_0 : f32 to vector<2x64xf32>
    %c0 = arith.constant 0 : index
    %c0_1 = arith.constant 0 : index
    %2 = vector.load %arg13[%c0, %c0_1] : memref<132x1xf32, #tpu.memory_space<vmem>>, vector<2x1xf32>
    tpu.vector_store %arg13[%c0, %c0_1], %0 {strides = array<i32>} : memref<132x1xf32, #tpu.memory_space<vmem>>, vector<2x1xf32>,
    %c0_2 = arith.constant 0 : index
    %c0_3 = arith.constant 0 : index
    %c0_4 = arith.constant 0 : index
    %3 = vector.load %arg1[%c0_2, %c0_3, %c0_4] : memref<1x128x1xf32, #tpu.memory_space<vmem>>, vector<1x128x1xf32>
    %4 = vector.shape_cast %3 : vector<1x128x1xf32> to vector<128x1xf32>
    %c2 = arith.constant 2 : index
    %c0_5 = arith.constant 0 : index
    %5 = vector.load %arg13[%c2, %c0_5] : memref<132x1xf32, #tpu.memory_space<vmem>>, vector<128x1xf32>
    tpu.vector_store %arg13[%c2, %c0_5], %4 {strides = array<i32>} : memref<132x1xf32, #tpu.memory_space<vmem>>, vector<128x1xf32>,
    %c130 = arith.constant 130 : index
    %c0_6 = arith.constant 0 : index
    %6 = vector.load %arg13[%c130, %c0_6] : memref<132x1xf32, #tpu.memory_space<vmem>>, vector<2x1xf32>
    tpu.vector_store %arg13[%c130, %c0_6], %0 {strides = array<i32>} : memref<132x1xf32, #tpu.memory_space<vmem>>, vector<2x1xf32>,
    %cst_7 = arith.constant 0.000000e+00 : f32
    %7 = vector.broadcast %cst_7 : f32 to vector<128x64xf32>
    %c0_8 = arith.constant 0 : index
    %c0_9 = arith.constant 0 : index
    %8 = vector.load %arg13[%c0_8, %c0_9] : memref<132x1xf32, #tpu.memory_space<vmem>>, vector<128x1xf32>
    %c0_10 = arith.constant 0 : index
    %c0_11 = arith.constant 0 : index
    %9 = vector.load %arg2[%c0_10, %c0_11] : memref<5x64xf32, #tpu.memory_space<vmem>>, vector<1x64xf32>
    %10 = vector.broadcast %8 : vector<128x1xf32> to vector<128x64xf32>
    %11 = vector.broadcast %9 : vector<1x64xf32> to vector<128x64xf32>
    %12 = arith.mulf %10, %11 : vector<128x64xf32>
    %13 = arith.addf %7, %12 : vector<128x64xf32>
    %c1 = arith.constant 1 : index
    %c0_12 = arith.constant 0 : index
    %14 = vector.load %arg13[%c1, %c0_12] : memref<132x1xf32, #tpu.memory_space<vmem>>, vector<128x1xf32>
    %c1_13 = arith.constant 1 : index
    %c0_14 = arith.constant 0 : index
    %15 = vector.load %arg2[%c1_13, %c0_14] : memref<5x64xf32, #tpu.memory_space<vmem>>, vector<1x64xf32>
    %16 = vector.broadcast %14 : vector<128x1xf32> to vector<128x64xf32>
    %17 = vector.broadcast %15 : vector<1x64xf32> to vector<128x64xf32>
    %18 = arith.mulf %16, %17 : vector<128x64xf32>
    %19 = arith.addf %13, %18 : vector<128x64xf32>
    %c2_15 = arith.constant 2 : index
    %c0_16 = arith.constant 0 : index
    %20 = vector.load %arg13[%c2_15, %c0_16] : memref<132x1xf32, #tpu.memory_space<vmem>>, vector<128x1xf32>
    %c2_17 = arith.constant 2 : index
    %c0_18 = arith.constant 0 : index
    %21 = vector.load %arg2[%c2_17, %c0_18] : memref<5x64xf32, #tpu.memory_space<vmem>>, vector<1x64xf32>
    %22 = vector.broadcast %20 : vector<128x1xf32> to vector<128x64xf32>
    %23 = vector.broadcast %21 : vector<1x64xf32> to vector<128x64xf32>
    %24 = arith.mulf %22, %23 : vector<128x64xf32>
    %25 = arith.addf %19, %24 : vector<128x64xf32>
    %c3 = arith.constant 3 : index
    %c0_19 = arith.constant 0 : index
    %26 = vector.load %arg13[%c3, %c0_19] : memref<132x1xf32, #tpu.memory_space<vmem>>, vector<128x1xf32>
    %c3_20 = arith.constant 3 : index
    %c0_21 = arith.constant 0 : index
    %27 = vector.load %arg2[%c3_20, %c0_21] : memref<5x64xf32, #tpu.memory_space<vmem>>, vector<1x64xf32>
    %28 = vector.broadcast %26 : vector<128x1xf32> to vector<128x64xf32>
    %29 = vector.broadcast %27 : vector<1x64xf32> to vector<128x64xf32>
    %30 = arith.mulf %28, %29 : vector<128x64xf32>
    %31 = arith.addf %25, %30 : vector<128x64xf32>
    %c4 = arith.constant 4 : index
    %c0_22 = arith.constant 0 : index
    %32 = vector.load %arg13[%c4, %c0_22] : memref<132x1xf32, #tpu.memory_space<vmem>>, vector<128x1xf32>
    %c4_23 = arith.constant 4 : index
    %c0_24 = arith.constant 0 : index
    %33 = vector.load %arg2[%c4_23, %c0_24] : memref<5x64xf32, #tpu.memory_space<vmem>>, vector<1x64xf32>
    %34 = vector.broadcast %32 : vector<128x1xf32> to vector<128x64xf32>
    %35 = vector.broadcast %33 : vector<1x64xf32> to vector<128x64xf32>
    %36 = arith.mulf %34, %35 : vector<128x64xf32>
    %37 = arith.addf %31, %36 : vector<128x64xf32>
    %c0_25 = arith.constant 0 : index
    %c0_26 = arith.constant 0 : index
    %38 = vector.load %arg3[%c0_25, %c0_26] : memref<1x64xf32, #tpu.memory_space<vmem>>, vector<1x64xf32>
    %39 = vector.broadcast %38 : vector<1x64xf32> to vector<128x64xf32>
    %40 = arith.addf %37, %39 : vector<128x64xf32>
    %cst_27 = arith.constant 0.000000e+00 : f32
    %41 = vector.broadcast %cst_27 : f32 to vector<128x64xf32>
    %42 = arith.maximumf %40, %41 : vector<128x64xf32>
    %c0_28 = arith.constant 0 : index
    %c0_29 = arith.constant 0 : index
    %43 = vector.load %arg4[%c0_28, %c0_29] : memref<1x64xf32, #tpu.memory_space<vmem>>, vector<1x64xf32>
    %44 = vector.broadcast %43 : vector<1x64xf32> to vector<128x64xf32>
    %45 = arith.mulf %42, %44 : vector<128x64xf32>
    %c0_30 = arith.constant 0 : index
    %c0_31 = arith.constant 0 : index
    %46 = vector.load %arg5[%c0_30, %c0_31] : memref<1x64xf32, #tpu.memory_space<vmem>>, vector<1x64xf32>
    %47 = vector.broadcast %46 : vector<1x64xf32> to vector<128x64xf32>
    %48 = arith.addf %45, %47 : vector<128x64xf32>
    %c0_32 = arith.constant 0 : index
    %c0_33 = arith.constant 0 : index
    %49 = vector.load %arg15[%c0_32, %c0_33] : memref<128x64xf32, #tpu.memory_space<vmem>>, vector<128x64xf32>
    tpu.vector_store %arg15[%c0_32, %c0_33], %48 {strides = array<i32>} : memref<128x64xf32, #tpu.memory_space<vmem>>, vector<128x64xf32>,
    %c0_34 = arith.constant 0 : index
    %c0_35 = arith.constant 0 : index
    %50 = tpu.strided_load %arg15[%c0_34, %c0_35] {strides = array<i32: 2, 1>} : memref<128x64xf32, #tpu.memory_space<vmem>>, vector<64x64xf32>
    %c1_36 = arith.constant 1 : index
    %c0_37 = arith.constant 0 : index
    %51 = tpu.strided_load %arg15[%c1_36, %c0_37] {strides = array<i32: 2, 1>} : memref<128x64xf32, #tpu.memory_space<vmem>>, vector<64x64xf32>
    %52 = arith.maximumf %50, %51 : vector<64x64xf32>
    %c0_38 = arith.constant 0 : index
    %c0_39 = arith.constant 0 : index
    %53 = vector.load %arg14[%c0_38, %c0_39] : memref<68x64xf32, #tpu.memory_space<vmem>>, vector<2x64xf32>
    tpu.vector_store %arg14[%c0_38, %c0_39], %1 {strides = array<i32>} : memref<68x64xf32, #tpu.memory_space<vmem>>, vector<2x64xf32>,
    %c2_40 = arith.constant 2 : index
    %c0_41 = arith.constant 0 : index
    %54 = vector.load %arg14[%c2_40, %c0_41] : memref<68x64xf32, #tpu.memory_space<vmem>>, vector<64x64xf32>
    tpu.vector_store %arg14[%c2_40, %c0_41], %52 {strides = array<i32>} : memref<68x64xf32, #tpu.memory_space<vmem>>, vector<64x64xf32>,
    %c66 = arith.constant 66 : index
    %c0_42 = arith.constant 0 : index
    %55 = vector.load %arg14[%c66, %c0_42] : memref<68x64xf32, #tpu.memory_space<vmem>>, vector<2x64xf32>
    tpu.vector_store %arg14[%c66, %c0_42], %1 {strides = array<i32>} : memref<68x64xf32, #tpu.memory_space<vmem>>, vector<2x64xf32>,
    %cst_43 = arith.constant 0.000000e+00 : f32
    %56 = vector.broadcast %cst_43 : f32 to vector<64x64xf32>
    %c0_44 = arith.constant 0 : index
    %c0_45 = arith.constant 0 : index
    %57 = vector.load %arg14[%c0_44, %c0_45] : memref<68x64xf32, #tpu.memory_space<vmem>>, vector<64x64xf32>
    %c0_46 = arith.constant 0 : index
    %c0_47 = arith.constant 0 : index
    %c0_48 = arith.constant 0 : index
    %c0_49 = arith.constant 0 : index
    %58 = vector.load %arg6[%c0_46, %c0_47, %c0_48, %c0_49] : memref<4x5x64x64xf32, #tpu.memory_space<vmem>>, vector<1x1x64x64xf32>
    %59 = vector.shape_cast %58 : vector<1x1x64x64xf32> to vector<64x64xf32>
    %cst_50 = arith.constant dense<0.000000e+00> : vector<64x64xf32>
    %60 = tpu.matmul %57, %59, %cst_50 {dimension_numbers = #tpu.dot_dimension_numbers<[1], [0], [0], [1], [0, 0, 1, 1], [], []>} : vector<64x64xf32>, vector<64x64xf32>, vector<64x64xf32> -> vector<64x64xf32>
    %61 = arith.addf %56, %60 : vector<64x64xf32>
    %c1_51 = arith.constant 1 : index
    %c0_52 = arith.constant 0 : index
    %62 = vector.load %arg14[%c1_51, %c0_52] : memref<68x64xf32, #tpu.memory_space<vmem>>, vector<64x64xf32>
    %c0_53 = arith.constant 0 : index
    %c1_54 = arith.constant 1 : index
    %c0_55 = arith.constant 0 : index
    %c0_56 = arith.constant 0 : index
    %63 = vector.load %arg6[%c0_53, %c1_54, %c0_55, %c0_56] : memref<4x5x64x64xf32, #tpu.memory_space<vmem>>, vector<1x1x64x64xf32>
    %64 = vector.shape_cast %63 : vector<1x1x64x64xf32> to vector<64x64xf32>
    %cst_57 = arith.constant dense<0.000000e+00> : vector<64x64xf32>
    %65 = tpu.matmul %62, %64, %cst_57 {dimension_numbers = #tpu.dot_dimension_numbers<[1], [0], [0], [1], [0, 0, 1, 1], [], []>} : vector<64x64xf32>, vector<64x64xf32>, vector<64x64xf32> -> vector<64x64xf32>
    %66 = arith.addf %61, %65 : vector<64x64xf32>
    %c2_58 = arith.constant 2 : index
    %c0_59 = arith.constant 0 : index
    %67 = vector.load %arg14[%c2_58, %c0_59] : memref<68x64xf32, #tpu.memory_space<vmem>>, vector<64x64xf32>
    %c0_60 = arith.constant 0 : index
    %c2_61 = arith.constant 2 : index
    %c0_62 = arith.constant 0 : index
    %c0_63 = arith.constant 0 : index
    %68 = vector.load %arg6[%c0_60, %c2_61, %c0_62, %c0_63] : memref<4x5x64x64xf32, #tpu.memory_space<vmem>>, vector<1x1x64x64xf32>
    %69 = vector.shape_cast %68 : vector<1x1x64x64xf32> to vector<64x64xf32>
    %cst_64 = arith.constant dense<0.000000e+00> : vector<64x64xf32>
    %70 = tpu.matmul %67, %69, %cst_64 {dimension_numbers = #tpu.dot_dimension_numbers<[1], [0], [0], [1], [0, 0, 1, 1], [], []>} : vector<64x64xf32>, vector<64x64xf32>, vector<64x64xf32> -> vector<64x64xf32>
    %71 = arith.addf %66, %70 : vector<64x64xf32>
    %c3_65 = arith.constant 3 : index
    %c0_66 = arith.constant 0 : index
    %72 = vector.load %arg14[%c3_65, %c0_66] : memref<68x64xf32, #tpu.memory_space<vmem>>, vector<64x64xf32>
    %c0_67 = arith.constant 0 : index
    %c3_68 = arith.constant 3 : index
    %c0_69 = arith.constant 0 : index
    %c0_70 = arith.constant 0 : index
    %73 = vector.load %arg6[%c0_67, %c3_68, %c0_69, %c0_70] : memref<4x5x64x64xf32, #tpu.memory_space<vmem>>, vector<1x1x64x64xf32>
    %74 = vector.shape_cast %73 : vector<1x1x64x64xf32> to vector<64x64xf32>
    %cst_71 = arith.constant dense<0.000000e+00> : vector<64x64xf32>
    %75 = tpu.matmul %72, %74, %cst_71 {dimension_numbers = #tpu.dot_dimension_numbers<[1], [0], [0], [1], [0, 0, 1, 1], [], []>} : vector<64x64xf32>, vector<64x64xf32>, vector<64x64xf32> -> vector<64x64xf32>
    %76 = arith.addf %71, %75 : vector<64x64xf32>
    %c4_72 = arith.constant 4 : index
    %c0_73 = arith.constant 0 : index
    %77 = vector.load %arg14[%c4_72, %c0_73] : memref<68x64xf32, #tpu.memory_space<vmem>>, vector<64x64xf32>
    %c0_74 = arith.constant 0 : index
    %c4_75 = arith.constant 4 : index
    %c0_76 = arith.constant 0 : index
    %c0_77 = arith.constant 0 : index
    %78 = vector.load %arg6[%c0_74, %c4_75, %c0_76, %c0_77] : memref<4x5x64x64xf32, #tpu.memory_space<vmem>>, vector<1x1x64x64xf32>
    %79 = vector.shape_cast %78 : vector<1x1x64x64xf32> to vector<64x64xf32>
    %cst_78 = arith.constant dense<0.000000e+00> : vector<64x64xf32>
    %80 = tpu.matmul %77, %79, %cst_78 {dimension_numbers = #tpu.dot_dimension_numbers<[1], [0], [0], [1], [0, 0, 1, 1], [], []>} : vector<64x64xf32>, vector<64x64xf32>, vector<64x64xf32> -> vector<64x64xf32>
    %81 = arith.addf %76, %80 : vector<64x64xf32>
    %c0_79 = arith.constant 0 : index
    %c0_80 = arith.constant 0 : index
    %c0_81 = arith.constant 0 : index
    %82 = vector.load %arg7[%c0_79, %c0_80, %c0_81] : memref<4x1x64xf32, #tpu.memory_space<vmem>>, vector<1x1x64xf32>
    %83 = vector.shape_cast %82 : vector<1x1x64xf32> to vector<1x64xf32>
    %84 = vector.broadcast %83 : vector<1x64xf32> to vector<64x64xf32>
    %85 = arith.addf %81, %84 : vector<64x64xf32>
    %cst_82 = arith.constant 0.000000e+00 : f32
    %86 = vector.broadcast %cst_82 : f32 to vector<64x64xf32>
    %87 = arith.maximumf %85, %86 : vector<64x64xf32>
    %c0_83 = arith.constant 0 : index
    %c0_84 = arith.constant 0 : index
    %c0_85 = arith.constant 0 : index
    %88 = vector.load %arg8[%c0_83, %c0_84, %c0_85] : memref<4x1x64xf32, #tpu.memory_space<vmem>>, vector<1x1x64xf32>
    %89 = vector.shape_cast %88 : vector<1x1x64xf32> to vector<1x64xf32>
    %90 = vector.broadcast %89 : vector<1x64xf32> to vector<64x64xf32>
    %91 = arith.mulf %87, %90 : vector<64x64xf32>
    %c0_86 = arith.constant 0 : index
    %c0_87 = arith.constant 0 : index
    %c0_88 = arith.constant 0 : index
    %92 = vector.load %arg9[%c0_86, %c0_87, %c0_88] : memref<4x1x64xf32, #tpu.memory_space<vmem>>, vector<1x1x64xf32>
    %93 = vector.shape_cast %92 : vector<1x1x64xf32> to vector<1x64xf32>
    %94 = vector.broadcast %93 : vector<1x64xf32> to vector<64x64xf32>
    %95 = arith.addf %91, %94 : vector<64x64xf32>
    %c0_89 = arith.constant 0 : index
    %c0_90 = arith.constant 0 : index
    %96 = vector.load %arg15[%c0_89, %c0_90] : memref<128x64xf32, #tpu.memory_space<vmem>>, vector<64x64xf32>
    tpu.vector_store %arg15[%c0_89, %c0_90], %95 {strides = array<i32>} : memref<128x64xf32, #tpu.memory_space<vmem>>, vector<64x64xf32>,
    %c0_91 = arith.constant 0 : index
    %c0_92 = arith.constant 0 : index
    %97 = tpu.strided_load %arg15[%c0_91, %c0_92] {strides = array<i32: 2, 1>} : memref<128x64xf32, #tpu.memory_space<vmem>>, vector<32x64xf32>
    %c1_93 = arith.constant 1 : index
    %c0_94 = arith.constant 0 : index
    %98 = tpu.strided_load %arg15[%c1_93, %c0_94] {strides = array<i32: 2, 1>} : memref<128x64xf32, #tpu.memory_space<vmem>>, vector<32x64xf32>
    %99 = arith.maximumf %97, %98 : vector<32x64xf32>
    %c2_95 = arith.constant 2 : index
    %c0_96 = arith.constant 0 : index
    %100 = vector.load %arg14[%c2_95, %c0_96] : memref<68x64xf32, #tpu.memory_space<vmem>>, vector<32x64xf32>
    tpu.vector_store %arg14[%c2_95, %c0_96], %99 {strides = array<i32>} : memref<68x64xf32, #tpu.memory_space<vmem>>, vector<32x64xf32>,
    %c34 = arith.constant 34 : index
    %c0_97 = arith.constant 0 : index
    %101 = vector.load %arg14[%c34, %c0_97] : memref<68x64xf32, #tpu.memory_space<vmem>>, vector<2x64xf32>
    tpu.vector_store %arg14[%c34, %c0_97], %1 {strides = array<i32>} : memref<68x64xf32, #tpu.memory_space<vmem>>, vector<2x64xf32>,
    %cst_98 = arith.constant 0.000000e+00 : f32
    %102 = vector.broadcast %cst_98 : f32 to vector<32x64xf32>
    %c0_99 = arith.constant 0 : index
    %c0_100 = arith.constant 0 : index
    %103 = vector.load %arg14[%c0_99, %c0_100] : memref<68x64xf32, #tpu.memory_space<vmem>>, vector<32x64xf32>
    %c1_101 = arith.constant 1 : index
    %c0_102 = arith.constant 0 : index
    %c0_103 = arith.constant 0 : index
    %c0_104 = arith.constant 0 : index
    %104 = vector.load %arg6[%c1_101, %c0_102, %c0_103, %c0_104] : memref<4x5x64x64xf32, #tpu.memory_space<vmem>>, vector<1x1x64x64xf32>
    %105 = vector.shape_cast %104 : vector<1x1x64x64xf32> to vector<64x64xf32>
    %cst_105 = arith.constant dense<0.000000e+00> : vector<32x64xf32>
    %106 = tpu.matmul %103, %105, %cst_105 {dimension_numbers = #tpu.dot_dimension_numbers<[1], [0], [0], [1], [0, 0, 1, 1], [], []>} : vector<32x64xf32>, vector<64x64xf32>, vector<32x64xf32> -> vector<32x64xf32>
    %107 = arith.addf %102, %106 : vector<32x64xf32>
    %c1_106 = arith.constant 1 : index
    %c0_107 = arith.constant 0 : index
    %108 = vector.load %arg14[%c1_106, %c0_107] : memref<68x64xf32, #tpu.memory_space<vmem>>, vector<32x64xf32>
    %c1_108 = arith.constant 1 : index
    %c1_109 = arith.constant 1 : index
    %c0_110 = arith.constant 0 : index
    %c0_111 = arith.constant 0 : index
    %109 = vector.load %arg6[%c1_108, %c1_109, %c0_110, %c0_111] : memref<4x5x64x64xf32, #tpu.memory_space<vmem>>, vector<1x1x64x64xf32>
    %110 = vector.shape_cast %109 : vector<1x1x64x64xf32> to vector<64x64xf32>
    %cst_112 = arith.constant dense<0.000000e+00> : vector<32x64xf32>
    %111 = tpu.matmul %108, %110, %cst_112 {dimension_numbers = #tpu.dot_dimension_numbers<[1], [0], [0], [1], [0, 0, 1, 1], [], []>} : vector<32x64xf32>, vector<64x64xf32>, vector<32x64xf32> -> vector<32x64xf32>
    %112 = arith.addf %107, %111 : vector<32x64xf32>
    %c2_113 = arith.constant 2 : index
    %c0_114 = arith.constant 0 : index
    %113 = vector.load %arg14[%c2_113, %c0_114] : memref<68x64xf32, #tpu.memory_space<vmem>>, vector<32x64xf32>
    %c1_115 = arith.constant 1 : index
    %c2_116 = arith.constant 2 : index
    %c0_117 = arith.constant 0 : index
    %c0_118 = arith.constant 0 : index
    %114 = vector.load %arg6[%c1_115, %c2_116, %c0_117, %c0_118] : memref<4x5x64x64xf32, #tpu.memory_space<vmem>>, vector<1x1x64x64xf32>
    %115 = vector.shape_cast %114 : vector<1x1x64x64xf32> to vector<64x64xf32>
    %cst_119 = arith.constant dense<0.000000e+00> : vector<32x64xf32>
    %116 = tpu.matmul %113, %115, %cst_119 {dimension_numbers = #tpu.dot_dimension_numbers<[1], [0], [0], [1], [0, 0, 1, 1], [], []>} : vector<32x64xf32>, vector<64x64xf32>, vector<32x64xf32> -> vector<32x64xf32>
    %117 = arith.addf %112, %116 : vector<32x64xf32>
    %c3_120 = arith.constant 3 : index
    %c0_121 = arith.constant 0 : index
    %118 = vector.load %arg14[%c3_120, %c0_121] : memref<68x64xf32, #tpu.memory_space<vmem>>, vector<32x64xf32>
    %c1_122 = arith.constant 1 : index
    %c3_123 = arith.constant 3 : index
    %c0_124 = arith.constant 0 : index
    %c0_125 = arith.constant 0 : index
    %119 = vector.load %arg6[%c1_122, %c3_123, %c0_124, %c0_125] : memref<4x5x64x64xf32, #tpu.memory_space<vmem>>, vector<1x1x64x64xf32>
    %120 = vector.shape_cast %119 : vector<1x1x64x64xf32> to vector<64x64xf32>
    %cst_126 = arith.constant dense<0.000000e+00> : vector<32x64xf32>
    %121 = tpu.matmul %118, %120, %cst_126 {dimension_numbers = #tpu.dot_dimension_numbers<[1], [0], [0], [1], [0, 0, 1, 1], [], []>} : vector<32x64xf32>, vector<64x64xf32>, vector<32x64xf32> -> vector<32x64xf32>
    %122 = arith.addf %117, %121 : vector<32x64xf32>
    %c4_127 = arith.constant 4 : index
    %c0_128 = arith.constant 0 : index
    %123 = vector.load %arg14[%c4_127, %c0_128] : memref<68x64xf32, #tpu.memory_space<vmem>>, vector<32x64xf32>
    %c1_129 = arith.constant 1 : index
    %c4_130 = arith.constant 4 : index
    %c0_131 = arith.constant 0 : index
    %c0_132 = arith.constant 0 : index
    %124 = vector.load %arg6[%c1_129, %c4_130, %c0_131, %c0_132] : memref<4x5x64x64xf32, #tpu.memory_space<vmem>>, vector<1x1x64x64xf32>
    %125 = vector.shape_cast %124 : vector<1x1x64x64xf32> to vector<64x64xf32>
    %cst_133 = arith.constant dense<0.000000e+00> : vector<32x64xf32>
    %126 = tpu.matmul %123, %125, %cst_133 {dimension_numbers = #tpu.dot_dimension_numbers<[1], [0], [0], [1], [0, 0, 1, 1], [], []>} : vector<32x64xf32>, vector<64x64xf32>, vector<32x64xf32> -> vector<32x64xf32>
    %127 = arith.addf %122, %126 : vector<32x64xf32>
    %c1_134 = arith.constant 1 : index
    %c0_135 = arith.constant 0 : index
    %c0_136 = arith.constant 0 : index
    %128 = vector.load %arg7[%c1_134, %c0_135, %c0_136] : memref<4x1x64xf32, #tpu.memory_space<vmem>>, vector<1x1x64xf32>
    %129 = vector.shape_cast %128 : vector<1x1x64xf32> to vector<1x64xf32>
    %130 = vector.broadcast %129 : vector<1x64xf32> to vector<32x64xf32>
    %131 = arith.addf %127, %130 : vector<32x64xf32>
    %cst_137 = arith.constant 0.000000e+00 : f32
    %132 = vector.broadcast %cst_137 : f32 to vector<32x64xf32>
    %133 = arith.maximumf %131, %132 : vector<32x64xf32>
    %c1_138 = arith.constant 1 : index
    %c0_139 = arith.constant 0 : index
    %c0_140 = arith.constant 0 : index
    %134 = vector.load %arg8[%c1_138, %c0_139, %c0_140] : memref<4x1x64xf32, #tpu.memory_space<vmem>>, vector<1x1x64xf32>
    %135 = vector.shape_cast %134 : vector<1x1x64xf32> to vector<1x64xf32>
    %136 = vector.broadcast %135 : vector<1x64xf32> to vector<32x64xf32>
    %137 = arith.mulf %133, %136 : vector<32x64xf32>
    %c1_141 = arith.constant 1 : index
    %c0_142 = arith.constant 0 : index
    %c0_143 = arith.constant 0 : index
    %138 = vector.load %arg9[%c1_141, %c0_142, %c0_143] : memref<4x1x64xf32, #tpu.memory_space<vmem>>, vector<1x1x64xf32>
    %139 = vector.shape_cast %138 : vector<1x1x64xf32> to vector<1x64xf32>
    %140 = vector.broadcast %139 : vector<1x64xf32> to vector<32x64xf32>
    %141 = arith.addf %137, %140 : vector<32x64xf32>
    %c0_144 = arith.constant 0 : index
    %c0_145 = arith.constant 0 : index
    %142 = vector.load %arg15[%c0_144, %c0_145] : memref<128x64xf32, #tpu.memory_space<vmem>>, vector<32x64xf32>
    tpu.vector_store %arg15[%c0_144, %c0_145], %141 {strides = array<i32>} : memref<128x64xf32, #tpu.memory_space<vmem>>, vector<32x64xf32>,
    %c0_146 = arith.constant 0 : index
    %c0_147 = arith.constant 0 : index
    %143 = tpu.strided_load %arg15[%c0_146, %c0_147] {strides = array<i32: 2, 1>} : memref<128x64xf32, #tpu.memory_space<vmem>>, vector<16x64xf32>
    %c1_148 = arith.constant 1 : index
    %c0_149 = arith.constant 0 : index
    %144 = tpu.strided_load %arg15[%c1_148, %c0_149] {strides = array<i32: 2, 1>} : memref<128x64xf32, #tpu.memory_space<vmem>>, vector<16x64xf32>
    %145 = arith.maximumf %143, %144 : vector<16x64xf32>
    %c2_150 = arith.constant 2 : index
    %c0_151 = arith.constant 0 : index
    %146 = vector.load %arg14[%c2_150, %c0_151] : memref<68x64xf32, #tpu.memory_space<vmem>>, vector<16x64xf32>
    tpu.vector_store %arg14[%c2_150, %c0_151], %145 {strides = array<i32>} : memref<68x64xf32, #tpu.memory_space<vmem>>, vector<16x64xf32>,
    %c18 = arith.constant 18 : index
    %c0_152 = arith.constant 0 : index
    %147 = vector.load %arg14[%c18, %c0_152] : memref<68x64xf32, #tpu.memory_space<vmem>>, vector<2x64xf32>
    tpu.vector_store %arg14[%c18, %c0_152], %1 {strides = array<i32>} : memref<68x64xf32, #tpu.memory_space<vmem>>, vector<2x64xf32>,
    %cst_153 = arith.constant 0.000000e+00 : f32
    %148 = vector.broadcast %cst_153 : f32 to vector<16x64xf32>
    %c0_154 = arith.constant 0 : index
    %c0_155 = arith.constant 0 : index
    %149 = vector.load %arg14[%c0_154, %c0_155] : memref<68x64xf32, #tpu.memory_space<vmem>>, vector<16x64xf32>
    %c2_156 = arith.constant 2 : index
    %c0_157 = arith.constant 0 : index
    %c0_158 = arith.constant 0 : index
    %c0_159 = arith.constant 0 : index
    %150 = vector.load %arg6[%c2_156, %c0_157, %c0_158, %c0_159] : memref<4x5x64x64xf32, #tpu.memory_space<vmem>>, vector<1x1x64x64xf32>
    %151 = vector.shape_cast %150 : vector<1x1x64x64xf32> to vector<64x64xf32>
    %cst_160 = arith.constant dense<0.000000e+00> : vector<16x64xf32>
    %152 = tpu.matmul %149, %151, %cst_160 {dimension_numbers = #tpu.dot_dimension_numbers<[1], [0], [0], [1], [0, 0, 1, 1], [], []>} : vector<16x64xf32>, vector<64x64xf32>, vector<16x64xf32> -> vector<16x64xf32>
    %153 = arith.addf %148, %152 : vector<16x64xf32>
    %c1_161 = arith.constant 1 : index
    %c0_162 = arith.constant 0 : index
    %154 = vector.load %arg14[%c1_161, %c0_162] : memref<68x64xf32, #tpu.memory_space<vmem>>, vector<16x64xf32>
    %c2_163 = arith.constant 2 : index
    %c1_164 = arith.constant 1 : index
    %c0_165 = arith.constant 0 : index
    %c0_166 = arith.constant 0 : index
    %155 = vector.load %arg6[%c2_163, %c1_164, %c0_165, %c0_166] : memref<4x5x64x64xf32, #tpu.memory_space<vmem>>, vector<1x1x64x64xf32>
    %156 = vector.shape_cast %155 : vector<1x1x64x64xf32> to vector<64x64xf32>
    %cst_167 = arith.constant dense<0.000000e+00> : vector<16x64xf32>
    %157 = tpu.matmul %154, %156, %cst_167 {dimension_numbers = #tpu.dot_dimension_numbers<[1], [0], [0], [1], [0, 0, 1, 1], [], []>} : vector<16x64xf32>, vector<64x64xf32>, vector<16x64xf32> -> vector<16x64xf32>
    %158 = arith.addf %153, %157 : vector<16x64xf32>
    %c2_168 = arith.constant 2 : index
    %c0_169 = arith.constant 0 : index
    %159 = vector.load %arg14[%c2_168, %c0_169] : memref<68x64xf32, #tpu.memory_space<vmem>>, vector<16x64xf32>
    %c2_170 = arith.constant 2 : index
    %c2_171 = arith.constant 2 : index
    %c0_172 = arith.constant 0 : index
    %c0_173 = arith.constant 0 : index
    %160 = vector.load %arg6[%c2_170, %c2_171, %c0_172, %c0_173] : memref<4x5x64x64xf32, #tpu.memory_space<vmem>>, vector<1x1x64x64xf32>
    %161 = vector.shape_cast %160 : vector<1x1x64x64xf32> to vector<64x64xf32>
    %cst_174 = arith.constant dense<0.000000e+00> : vector<16x64xf32>
    %162 = tpu.matmul %159, %161, %cst_174 {dimension_numbers = #tpu.dot_dimension_numbers<[1], [0], [0], [1], [0, 0, 1, 1], [], []>} : vector<16x64xf32>, vector<64x64xf32>, vector<16x64xf32> -> vector<16x64xf32>
    %163 = arith.addf %158, %162 : vector<16x64xf32>
    %c3_175 = arith.constant 3 : index
    %c0_176 = arith.constant 0 : index
    %164 = vector.load %arg14[%c3_175, %c0_176] : memref<68x64xf32, #tpu.memory_space<vmem>>, vector<16x64xf32>
    %c2_177 = arith.constant 2 : index
    %c3_178 = arith.constant 3 : index
    %c0_179 = arith.constant 0 : index
    %c0_180 = arith.constant 0 : index
    %165 = vector.load %arg6[%c2_177, %c3_178, %c0_179, %c0_180] : memref<4x5x64x64xf32, #tpu.memory_space<vmem>>, vector<1x1x64x64xf32>
    %166 = vector.shape_cast %165 : vector<1x1x64x64xf32> to vector<64x64xf32>
    %cst_181 = arith.constant dense<0.000000e+00> : vector<16x64xf32>
    %167 = tpu.matmul %164, %166, %cst_181 {dimension_numbers = #tpu.dot_dimension_numbers<[1], [0], [0], [1], [0, 0, 1, 1], [], []>} : vector<16x64xf32>, vector<64x64xf32>, vector<16x64xf32> -> vector<16x64xf32>
    %168 = arith.addf %163, %167 : vector<16x64xf32>
    %c4_182 = arith.constant 4 : index
    %c0_183 = arith.constant 0 : index
    %169 = vector.load %arg14[%c4_182, %c0_183] : memref<68x64xf32, #tpu.memory_space<vmem>>, vector<16x64xf32>
    %c2_184 = arith.constant 2 : index
    %c4_185 = arith.constant 4 : index
    %c0_186 = arith.constant 0 : index
    %c0_187 = arith.constant 0 : index
    %170 = vector.load %arg6[%c2_184, %c4_185, %c0_186, %c0_187] : memref<4x5x64x64xf32, #tpu.memory_space<vmem>>, vector<1x1x64x64xf32>
    %171 = vector.shape_cast %170 : vector<1x1x64x64xf32> to vector<64x64xf32>
    %cst_188 = arith.constant dense<0.000000e+00> : vector<16x64xf32>
    %172 = tpu.matmul %169, %171, %cst_188 {dimension_numbers = #tpu.dot_dimension_numbers<[1], [0], [0], [1], [0, 0, 1, 1], [], []>} : vector<16x64xf32>, vector<64x64xf32>, vector<16x64xf32> -> vector<16x64xf32>
    %173 = arith.addf %168, %172 : vector<16x64xf32>
    %c2_189 = arith.constant 2 : index
    %c0_190 = arith.constant 0 : index
    %c0_191 = arith.constant 0 : index
    %174 = vector.load %arg7[%c2_189, %c0_190, %c0_191] : memref<4x1x64xf32, #tpu.memory_space<vmem>>, vector<1x1x64xf32>
    %175 = vector.shape_cast %174 : vector<1x1x64xf32> to vector<1x64xf32>
    %176 = vector.broadcast %175 : vector<1x64xf32> to vector<16x64xf32>
    %177 = arith.addf %173, %176 : vector<16x64xf32>
    %cst_192 = arith.constant 0.000000e+00 : f32
    %178 = vector.broadcast %cst_192 : f32 to vector<16x64xf32>
    %179 = arith.maximumf %177, %178 : vector<16x64xf32>
    %c2_193 = arith.constant 2 : index
    %c0_194 = arith.constant 0 : index
    %c0_195 = arith.constant 0 : index
    %180 = vector.load %arg8[%c2_193, %c0_194, %c0_195] : memref<4x1x64xf32, #tpu.memory_space<vmem>>, vector<1x1x64xf32>
    %181 = vector.shape_cast %180 : vector<1x1x64xf32> to vector<1x64xf32>
    %182 = vector.broadcast %181 : vector<1x64xf32> to vector<16x64xf32>
    %183 = arith.mulf %179, %182 : vector<16x64xf32>
    %c2_196 = arith.constant 2 : index
    %c0_197 = arith.constant 0 : index
    %c0_198 = arith.constant 0 : index
    %184 = vector.load %arg9[%c2_196, %c0_197, %c0_198] : memref<4x1x64xf32, #tpu.memory_space<vmem>>, vector<1x1x64xf32>
    %185 = vector.shape_cast %184 : vector<1x1x64xf32> to vector<1x64xf32>
    %186 = vector.broadcast %185 : vector<1x64xf32> to vector<16x64xf32>
    %187 = arith.addf %183, %186 : vector<16x64xf32>
    %c0_199 = arith.constant 0 : index
    %c0_200 = arith.constant 0 : index
    %188 = vector.load %arg15[%c0_199, %c0_200] : memref<128x64xf32, #tpu.memory_space<vmem>>, vector<16x64xf32>
    tpu.vector_store %arg15[%c0_199, %c0_200], %187 {strides = array<i32>} : memref<128x64xf32, #tpu.memory_space<vmem>>, vector<16x64xf32>,
    %c0_201 = arith.constant 0 : index
    %c0_202 = arith.constant 0 : index
    %189 = tpu.strided_load %arg15[%c0_201, %c0_202] {strides = array<i32: 2, 1>} : memref<128x64xf32, #tpu.memory_space<vmem>>, vector<8x64xf32>
    %c1_203 = arith.constant 1 : index
    %c0_204 = arith.constant 0 : index
    %190 = tpu.strided_load %arg15[%c1_203, %c0_204] {strides = array<i32: 2, 1>} : memref<128x64xf32, #tpu.memory_space<vmem>>, vector<8x64xf32>
    %191 = arith.maximumf %189, %190 : vector<8x64xf32>
    %c2_205 = arith.constant 2 : index
    %c0_206 = arith.constant 0 : index
    %192 = vector.load %arg14[%c2_205, %c0_206] : memref<68x64xf32, #tpu.memory_space<vmem>>, vector<8x64xf32>
    tpu.vector_store %arg14[%c2_205, %c0_206], %191 {strides = array<i32>} : memref<68x64xf32, #tpu.memory_space<vmem>>, vector<8x64xf32>,
    %c10 = arith.constant 10 : index
    %c0_207 = arith.constant 0 : index
    %193 = vector.load %arg14[%c10, %c0_207] : memref<68x64xf32, #tpu.memory_space<vmem>>, vector<2x64xf32>
    tpu.vector_store %arg14[%c10, %c0_207], %1 {strides = array<i32>} : memref<68x64xf32, #tpu.memory_space<vmem>>, vector<2x64xf32>,
    %cst_208 = arith.constant 0.000000e+00 : f32
    %194 = vector.broadcast %cst_208 : f32 to vector<8x64xf32>
    %c0_209 = arith.constant 0 : index
    %c0_210 = arith.constant 0 : index
    %195 = vector.load %arg14[%c0_209, %c0_210] : memref<68x64xf32, #tpu.memory_space<vmem>>, vector<8x64xf32>
    %c3_211 = arith.constant 3 : index
    %c0_212 = arith.constant 0 : index
    %c0_213 = arith.constant 0 : index
    %c0_214 = arith.constant 0 : index
    %196 = vector.load %arg6[%c3_211, %c0_212, %c0_213, %c0_214] : memref<4x5x64x64xf32, #tpu.memory_space<vmem>>, vector<1x1x64x64xf32>
    %197 = vector.shape_cast %196 : vector<1x1x64x64xf32> to vector<64x64xf32>
    %cst_215 = arith.constant dense<0.000000e+00> : vector<8x64xf32>
    %198 = tpu.matmul %195, %197, %cst_215 {dimension_numbers = #tpu.dot_dimension_numbers<[1], [0], [0], [1], [0, 0, 1, 1], [], []>} : vector<8x64xf32>, vector<64x64xf32>, vector<8x64xf32> -> vector<8x64xf32>
    %199 = arith.addf %194, %198 : vector<8x64xf32>
    %c1_216 = arith.constant 1 : index
    %c0_217 = arith.constant 0 : index
    %200 = vector.load %arg14[%c1_216, %c0_217] : memref<68x64xf32, #tpu.memory_space<vmem>>, vector<8x64xf32>
    %c3_218 = arith.constant 3 : index
    %c1_219 = arith.constant 1 : index
    %c0_220 = arith.constant 0 : index
    %c0_221 = arith.constant 0 : index
    %201 = vector.load %arg6[%c3_218, %c1_219, %c0_220, %c0_221] : memref<4x5x64x64xf32, #tpu.memory_space<vmem>>, vector<1x1x64x64xf32>
    %202 = vector.shape_cast %201 : vector<1x1x64x64xf32> to vector<64x64xf32>
    %cst_222 = arith.constant dense<0.000000e+00> : vector<8x64xf32>
    %203 = tpu.matmul %200, %202, %cst_222 {dimension_numbers = #tpu.dot_dimension_numbers<[1], [0], [0], [1], [0, 0, 1, 1], [], []>} : vector<8x64xf32>, vector<64x64xf32>, vector<8x64xf32> -> vector<8x64xf32>
    %204 = arith.addf %199, %203 : vector<8x64xf32>
    %c2_223 = arith.constant 2 : index
    %c0_224 = arith.constant 0 : index
    %205 = vector.load %arg14[%c2_223, %c0_224] : memref<68x64xf32, #tpu.memory_space<vmem>>, vector<8x64xf32>
    %c3_225 = arith.constant 3 : index
    %c2_226 = arith.constant 2 : index
    %c0_227 = arith.constant 0 : index
    %c0_228 = arith.constant 0 : index
    %206 = vector.load %arg6[%c3_225, %c2_226, %c0_227, %c0_228] : memref<4x5x64x64xf32, #tpu.memory_space<vmem>>, vector<1x1x64x64xf32>
    %207 = vector.shape_cast %206 : vector<1x1x64x64xf32> to vector<64x64xf32>
    %cst_229 = arith.constant dense<0.000000e+00> : vector<8x64xf32>
    %208 = tpu.matmul %205, %207, %cst_229 {dimension_numbers = #tpu.dot_dimension_numbers<[1], [0], [0], [1], [0, 0, 1, 1], [], []>} : vector<8x64xf32>, vector<64x64xf32>, vector<8x64xf32> -> vector<8x64xf32>
    %209 = arith.addf %204, %208 : vector<8x64xf32>
    %c3_230 = arith.constant 3 : index
    %c0_231 = arith.constant 0 : index
    %210 = vector.load %arg14[%c3_230, %c0_231] : memref<68x64xf32, #tpu.memory_space<vmem>>, vector<8x64xf32>
    %c3_232 = arith.constant 3 : index
    %c3_233 = arith.constant 3 : index
    %c0_234 = arith.constant 0 : index
    %c0_235 = arith.constant 0 : index
    %211 = vector.load %arg6[%c3_232, %c3_233, %c0_234, %c0_235] : memref<4x5x64x64xf32, #tpu.memory_space<vmem>>, vector<1x1x64x64xf32>
    %212 = vector.shape_cast %211 : vector<1x1x64x64xf32> to vector<64x64xf32>
    %cst_236 = arith.constant dense<0.000000e+00> : vector<8x64xf32>
    %213 = tpu.matmul %210, %212, %cst_236 {dimension_numbers = #tpu.dot_dimension_numbers<[1], [0], [0], [1], [0, 0, 1, 1], [], []>} : vector<8x64xf32>, vector<64x64xf32>, vector<8x64xf32> -> vector<8x64xf32>
    %214 = arith.addf %209, %213 : vector<8x64xf32>
    %c4_237 = arith.constant 4 : index
    %c0_238 = arith.constant 0 : index
    %215 = vector.load %arg14[%c4_237, %c0_238] : memref<68x64xf32, #tpu.memory_space<vmem>>, vector<8x64xf32>
    %c3_239 = arith.constant 3 : index
    %c4_240 = arith.constant 4 : index
    %c0_241 = arith.constant 0 : index
    %c0_242 = arith.constant 0 : index
    %216 = vector.load %arg6[%c3_239, %c4_240, %c0_241, %c0_242] : memref<4x5x64x64xf32, #tpu.memory_space<vmem>>, vector<1x1x64x64xf32>
    %217 = vector.shape_cast %216 : vector<1x1x64x64xf32> to vector<64x64xf32>
    %cst_243 = arith.constant dense<0.000000e+00> : vector<8x64xf32>
    %218 = tpu.matmul %215, %217, %cst_243 {dimension_numbers = #tpu.dot_dimension_numbers<[1], [0], [0], [1], [0, 0, 1, 1], [], []>} : vector<8x64xf32>, vector<64x64xf32>, vector<8x64xf32> -> vector<8x64xf32>
    %219 = arith.addf %214, %218 : vector<8x64xf32>
    %c3_244 = arith.constant 3 : index
    %c0_245 = arith.constant 0 : index
    %c0_246 = arith.constant 0 : index
    %220 = vector.load %arg7[%c3_244, %c0_245, %c0_246] : memref<4x1x64xf32, #tpu.memory_space<vmem>>, vector<1x1x64xf32>
    %221 = vector.shape_cast %220 : vector<1x1x64xf32> to vector<1x64xf32>
    %222 = vector.broadcast %221 : vector<1x64xf32> to vector<8x64xf32>
    %223 = arith.addf %219, %222 : vector<8x64xf32>
    %cst_247 = arith.constant 0.000000e+00 : f32
    %224 = vector.broadcast %cst_247 : f32 to vector<8x64xf32>
    %225 = arith.maximumf %223, %224 : vector<8x64xf32>
    %c3_248 = arith.constant 3 : index
    %c0_249 = arith.constant 0 : index
    %c0_250 = arith.constant 0 : index
    %226 = vector.load %arg8[%c3_248, %c0_249, %c0_250] : memref<4x1x64xf32, #tpu.memory_space<vmem>>, vector<1x1x64xf32>
    %227 = vector.shape_cast %226 : vector<1x1x64xf32> to vector<1x64xf32>
    %228 = vector.broadcast %227 : vector<1x64xf32> to vector<8x64xf32>
    %229 = arith.mulf %225, %228 : vector<8x64xf32>
    %c3_251 = arith.constant 3 : index
    %c0_252 = arith.constant 0 : index
    %c0_253 = arith.constant 0 : index
    %230 = vector.load %arg9[%c3_251, %c0_252, %c0_253] : memref<4x1x64xf32, #tpu.memory_space<vmem>>, vector<1x1x64xf32>
    %231 = vector.shape_cast %230 : vector<1x1x64xf32> to vector<1x64xf32>
    %232 = vector.broadcast %231 : vector<1x64xf32> to vector<8x64xf32>
    %233 = arith.addf %229, %232 : vector<8x64xf32>
    %c0_254 = arith.constant 0 : index
    %c0_255 = arith.constant 0 : index
    %234 = vector.load %arg15[%c0_254, %c0_255] : memref<128x64xf32, #tpu.memory_space<vmem>>, vector<8x64xf32>
    tpu.vector_store %arg15[%c0_254, %c0_255], %233 {strides = array<i32>} : memref<128x64xf32, #tpu.memory_space<vmem>>, vector<8x64xf32>,
    %c0_256 = arith.constant 0 : index
    %c0_257 = arith.constant 0 : index
    %235 = tpu.strided_load %arg15[%c0_256, %c0_257] {strides = array<i32: 2, 1>} : memref<128x64xf32, #tpu.memory_space<vmem>>, vector<4x64xf32>
    %c1_258 = arith.constant 1 : index
    %c0_259 = arith.constant 0 : index
    %236 = tpu.strided_load %arg15[%c1_258, %c0_259] {strides = array<i32: 2, 1>} : memref<128x64xf32, #tpu.memory_space<vmem>>, vector<4x64xf32>
    %237 = arith.maximumf %235, %236 : vector<4x64xf32>
    %cst_260 = arith.constant dense<0.000000e+00> : vector<64xf32>
    %238 = vector.multi_reduction <add>, %237, %cst_260 [0] : vector<4x64xf32> to vector<64xf32>
    %239 = vector.shape_cast %238 : vector<64xf32> to vector<1x64xf32>
    %cst_261 = arith.constant 4.000000e+00 : f32
    %240 = vector.broadcast %cst_261 : f32 to vector<1x64xf32>
    %241 = arith.divf %239, %240 : vector<1x64xf32>
    %c0_262 = arith.constant 0 : index
    %c0_263 = arith.constant 0 : index
    %242 = vector.load %arg10[%c0_262, %c0_263] : memref<64x8xf32, #tpu.memory_space<vmem>>, vector<64x8xf32>
    %cst_264 = arith.constant dense<0.000000e+00> : vector<1x8xf32>
    %243 = tpu.matmul %241, %242, %cst_264 {dimension_numbers = #tpu.dot_dimension_numbers<[1], [0], [0], [1], [0, 0, 1, 1], [], []>} : vector<1x64xf32>, vector<64x8xf32>, vector<1x8xf32> -> vector<1x8xf32>
    %c0_265 = arith.constant 0 : index
    %c0_266 = arith.constant 0 : index
    %244 = vector.load %arg11[%c0_265, %c0_266] : memref<1x8xf32, #tpu.memory_space<vmem>>, vector<1x8xf32>
    %245 = arith.addf %243, %244 : vector<1x8xf32>
    %c0_267 = arith.constant 0 : index
    %c0_268 = arith.constant 0 : index
    %c0_269 = arith.constant 0 : index
    %246 = vector.load %arg12[%c0_267, %c0_268, %c0_269] : memref<1x1x8xf32, #tpu.memory_space<vmem>>, vector<1x1x8xf32>
    %247 = vector.shape_cast %246 : vector<1x1x8xf32> to vector<1x8xf32>
    %248 = vector.shape_cast %245 : vector<1x8xf32> to vector<1x1x8xf32>
    tpu.vector_store %arg12[%c0_267, %c0_268, %c0_269], %248 {strides = array<i32>} : memref<1x1x8xf32, #tpu.memory_space<vmem>>, vector<1x1x8xf32>,
    return
  }
  func.func @transform_0(%arg0: i32) -> (i32, i32, i32) {
    %c0_i32 = arith.constant 0 : i32
    %c0_i32_0 = arith.constant 0 : i32
    %c0_i32_1 = arith.constant 0 : i32
    return %arg0, %c0_i32, %c0_i32_0 : i32, i32, i32
  }
  func.func @transform_1(%arg0: i32) -> (i32, i32) {
    %c0_i32 = arith.constant 0 : i32
    %c0_i32_0 = arith.constant 0 : i32
    %c0_i32_1 = arith.constant 0 : i32
    return %c0_i32, %c0_i32_0 : i32, i32
  }
  func.func @transform_2(%arg0: i32) -> (i32, i32) {
    %c0_i32 = arith.constant 0 : i32
    %c0_i32_0 = arith.constant 0 : i32
    %c0_i32_1 = arith.constant 0 : i32
    return %c0_i32, %c0_i32_0 : i32, i32
  }
  func.func @transform_3(%arg0: i32) -> (i32, i32) {
    %c0_i32 = arith.constant 0 : i32
    %c0_i32_0 = arith.constant 0 : i32
    %c0_i32_1 = arith.constant 0 : i32
    return %c0_i32, %c0_i32_0 : i32, i32
  }
  func.func @transform_4(%arg0: i32) -> (i32, i32) {
    %c0_i32 = arith.constant 0 : i32
    %c0_i32_0 = arith.constant 0 : i32
    %c0_i32_1 = arith.constant 0 : i32
    return %c0_i32, %c0_i32_0 : i32, i32
  }
  func.func @transform_5(%arg0: i32) -> (i32, i32, i32, i32) {
    %c0_i32 = arith.constant 0 : i32
    %c0_i32_0 = arith.constant 0 : i32
    %c0_i32_1 = arith.constant 0 : i32
    %c0_i32_2 = arith.constant 0 : i32
    %c0_i32_3 = arith.constant 0 : i32
    return %c0_i32, %c0_i32_0, %c0_i32_1, %c0_i32_2 : i32, i32, i32, i32
  }
  func.func @transform_6(%arg0: i32) -> (i32, i32, i32) {
    %c0_i32 = arith.constant 0 : i32
    %c0_i32_0 = arith.constant 0 : i32
    %c0_i32_1 = arith.constant 0 : i32
    %c0_i32_2 = arith.constant 0 : i32
    return %c0_i32, %c0_i32_0, %c0_i32_1 : i32, i32, i32
  }
  func.func @transform_7(%arg0: i32) -> (i32, i32, i32) {
    %c0_i32 = arith.constant 0 : i32
    %c0_i32_0 = arith.constant 0 : i32
    %c0_i32_1 = arith.constant 0 : i32
    %c0_i32_2 = arith.constant 0 : i32
    return %c0_i32, %c0_i32_0, %c0_i32_1 : i32, i32, i32
  }
  func.func @transform_8(%arg0: i32) -> (i32, i32, i32) {
    %c0_i32 = arith.constant 0 : i32
    %c0_i32_0 = arith.constant 0 : i32
    %c0_i32_1 = arith.constant 0 : i32
    %c0_i32_2 = arith.constant 0 : i32
    return %c0_i32, %c0_i32_0, %c0_i32_1 : i32, i32, i32
  }
  func.func @transform_9(%arg0: i32) -> (i32, i32) {
    %c0_i32 = arith.constant 0 : i32
    %c0_i32_0 = arith.constant 0 : i32
    %c0_i32_1 = arith.constant 0 : i32
    return %c0_i32, %c0_i32_0 : i32, i32
  }
  func.func @transform_10(%arg0: i32) -> (i32, i32) {
    %c0_i32 = arith.constant 0 : i32
    %c0_i32_0 = arith.constant 0 : i32
    %c0_i32_1 = arith.constant 0 : i32
    return %c0_i32, %c0_i32_0 : i32, i32
  }
  func.func @transform_11(%arg0: i32) -> (i32, i32, i32) {
    %c0_i32 = arith.constant 0 : i32
    %c0_i32_0 = arith.constant 0 : i32
    %c0_i32_1 = arith.constant 0 : i32
    return %arg0, %c0_i32, %c0_i32_0 : i32, i32, i32
  }
}

</mosaic_0001>

<llo_original>
// kernel: cnn4_forward.1
$region0: #{cnn4_forward.1}
  #allocation0 [shape = 'u32[]', space=smem, size = 0x4, offset = 0x4, fixed_abs, tag = 'smem constant byte address 0x4 - core index']
  #allocation1 [shape = 'u32[144,128]{1,0:T(1,128)}', space=vmem, size = 0x12000, scoped, tag = 'internal scratch']
  #allocation2 [shape = 'f32[132,1]{1,0:T(8,128)}', space=vmem, size = 0x11000, scoped, tag = 'scratch operand']
  #allocation3 [shape = 'f32[68,64]{1,0:T(8,128)}', space=vmem, size = 0x9000, scoped, tag = 'scratch operand']
  #allocation4 [shape = 'f32[128,64]{1,0:T(8,128)}', space=vmem, size = 0x10000, scoped, tag = 'scratch operand']
  %s0 = inlined_call_operand.vmem [shape: f32[2,128,1], index: 0, kind: input, shape index: {}]
  %s1 = inlined_call_operand.vmem [shape: f32[5,64], index: 1, kind: input, shape index: {}]
  %s2 = inlined_call_operand.vmem [shape: f32[1,64], index: 2, kind: input, shape index: {}]
  %s3 = inlined_call_operand.vmem [shape: f32[1,64], index: 3, kind: input, shape index: {}]
  %s4 = inlined_call_operand.vmem [shape: f32[1,64], index: 4, kind: input, shape index: {}]
  %s5 = inlined_call_operand.hbm [shape: f32[4,5,64,64], index: 5, kind: input, shape index: {}]
  %s6 = inlined_call_operand.vmem [shape: f32[4,1,64], index: 6, kind: input, shape index: {}]
  %s7 = inlined_call_operand.vmem [shape: f32[4,1,64], index: 7, kind: input, shape index: {}]
  %s8 = inlined_call_operand.vmem [shape: f32[4,1,64], index: 8, kind: input, shape index: {}]
  %s9 = inlined_call_operand.vmem [shape: f32[64,8], index: 9, kind: input, shape index: {}]
  %s10 = inlined_call_operand.vmem [shape: f32[1,8], index: 10, kind: input, shape index: {}]
  %s11 = inlined_call_operand.hbm [shape: f32[2,1,8], index: 11, kind: output, shape index: {}]
  %s12 = sld [smem:[#allocation0]]
  $region81: #{cnn4_forward.1} parent=0
    _
  %s14 = ssub.s32 1, %s12
  %s15 = scalar_select 0, %s14, %s12
  $region1: #{cnn4_forward.1} parent=0
    #allocation5 [shape = 'u8[655360]{0}', space=vmem, size = 0xa0000, scoped, tag = 'input window, operand 5, single buffered']
    #allocation6 [shape = 's32[2]{0}', space=sflag, size = 0x8, scoped, tag = 'scoped memory for cnn4_forward.1']
    #allocation7 [shape = 's32[2]{0}', space=sflag, size = 0x8, scoped, tag = 'scoped memory for cnn4_forward.1']
    #allocation8 [shape = 'u8[1024]{0}', space=vmem, size = 0x400, scoped, tag = 'output window, operand 0']
    %16 = vsyncpa [#allocation6], 0
    %17 = vsyncpa [#allocation7], 0
    %s18 = scalar_lea.sflag [#allocation7], 1
    %19 = vsyncpa %s18, 0
    loop: start=0, step=1, limit=4
    $region2: #{cnn4_forward.1} parent=1 // loop_pre_header
      _
    $region3: #{cnn4_forward.1} parent=1 // loop_header
      %s21 = sphi 0, %s25
      %p22 = scmp.ge.s32.totalorder %s21, 4
      %s31 = sphi 0, %s33
      %s34 = sphi 0, %s31
      %s35 = sphi 0, %s34
      %s51 = sphi 0, %s35
      %s55 = sphi 0, %s55
      %s57 = sphi 0, %s55
      %s58 = sphi 0, %s57
      %s72 = sphi 0, %s58
      %s76 = sphi 0, %s76
      %s78 = sphi 0, %s76
      %s79 = sphi 0, %s78
      %s93 = sphi 0, %s79
      %s97 = sphi 0, %s97
      %s99 = sphi 0, %s97
      %s100 = sphi 0, %s99
      %s114 = sphi 0, %s100
      %s118 = sphi 0, %s118
      %s120 = sphi 0, %s118
      %s121 = sphi 0, %s120
      %s135 = sphi 0, %s121
      %s139 = sphi 0, %s139
      %s141 = sphi 0, %s139
      %s142 = sphi 0, %s141
      %s156 = sphi 0, %s142
      %s160 = sphi 0, %s160
      %s162 = sphi 0, %s160
      %s163 = sphi 0, %s162
      %s177 = sphi 0, %s163
      %s181 = sphi 0, %s181
      %s183 = sphi 0, %s181
      %s184 = sphi 0, %s183
      %s198 = sphi 0, %s184
      %s202 = sphi 0, %s202
      %s204 = sphi 0, %s202
      %s205 = sphi 0, %s204
      %s219 = sphi 0, %s205
      %s223 = sphi 0, %s223
      %s225 = sphi 0, %s223
      %s226 = sphi 0, %s225
      %s240 = sphi 0, %s226
      %s244 = sphi 0, %s244
      %s246 = sphi 0, %s244
      %s247 = sphi 0, %s246
      %s261 = sphi 0, %s247
      %s267 = sphi 0, %s269
      %s270 = sphi 0, %s267
      %s271 = sphi 0, %s270
      %s287 = sphi 0, %s271
    $region4: #{cnn4_forward.1} parent=1 // loop_header_branch
      %24 = sbr.rel (%p22) target = $region8
    $region5: #{cnn4_forward.1} parent=1 // loop_body
      %s26 = ssub.s32 %s21, 1
      %s27 = ssub.s32 %s21, 2
      %s28 = sadd.s32 %s21, 1
      %s29 = ssub.s32 %s21, %s28
      %p30 = scmp.eq.s32.totalorder %s29, 0
      %s32 = sadd.s32 %s31, 1
      %s33 = scalar_select %p30, %s31, %s32
      %p36 = pneg %p30
      %p37 = scmp.eq.s32.totalorder %s21, 1
      %p38 = por %p36, %p37
      %p39 = scmp.ne.s32.totalorder %s31, %s34
      %p40 = scmp.eq.s32.totalorder %s21, 0
      %p41 = por %p39, %p40
      %p42 = scmp.ne.s32.totalorder %s31, %s34
      %p43 = scmp.eq.s32.totalorder %s26, 1
      %p44 = por %p42, %p43
      %p45 = scmp.ne.s32.totalorder %s34, %s35
      %p46 = scmp.eq.s32.totalorder %s26, 0
      %p47 = por %p45, %p46
      %p48 = scmp.ne.s32.totalorder %s34, %s35
      %p49 = scmp.eq.s32.totalorder %s27, 1
      %p50 = por %p48, %p49
      %p52 = scmp.ne.s32.totalorder %s35, %s51
      %p53 = scmp.eq.s32.totalorder %s27, 0
      %p54 = por %p52, %p53
      %s56 = sadd.s32 %s55, 1
      %p59 = scmp.eq.s32.totalorder %s21, 1
      %p60 = scmp.ne.s32.totalorder %s55, %s57
      %p61 = scmp.eq.s32.totalorder %s21, 0
      %p62 = por %p60, %p61
      %p63 = scmp.ne.s32.totalorder %s55, %s57
      %p64 = scmp.eq.s32.totalorder %s26, 1
      %p65 = por %p63, %p64
      %p66 = scmp.ne.s32.totalorder %s57, %s58
      %p67 = scmp.eq.s32.totalorder %s26, 0
      %p68 = por %p66, %p67
      %p69 = scmp.ne.s32.totalorder %s57, %s58
      %p70 = scmp.eq.s32.totalorder %s27, 1
      %p71 = por %p69, %p70
      %p73 = scmp.ne.s32.totalorder %s58, %s72
      %p74 = scmp.eq.s32.totalorder %s27, 0
      %p75 = por %p73, %p74
      %s77 = sadd.s32 %s76, 1
      %p80 = scmp.eq.s32.totalorder %s21, 1
      %p81 = scmp.ne.s32.totalorder %s76, %s78
      %p82 = scmp.eq.s32.totalorder %s21, 0
      %p83 = por %p81, %p82
      %p84 = scmp.ne.s32.totalorder %s76, %s78
      %p85 = scmp.eq.s32.totalorder %s26, 1
      %p86 = por %p84, %p85
      %p87 = scmp.ne.s32.totalorder %s78, %s79
      %p88 = scmp.eq.s32.totalorder %s26, 0
      %p89 = por %p87, %p88
      %p90 = scmp.ne.s32.totalorder %s78, %s79
      %p91 = scmp.eq.s32.totalorder %s27, 1
      %p92 = por %p90, %p91
      %p94 = scmp.ne.s32.totalorder %s79, %s93
      %p95 = scmp.eq.s32.totalorder %s27, 0
      %p96 = por %p94, %p95
      %s98 = sadd.s32 %s97, 1
      %p101 = scmp.eq.s32.totalorder %s21, 1
      %p102 = scmp.ne.s32.totalorder %s97, %s99
      %p103 = scmp.eq.s32.totalorder %s21, 0
      %p104 = por %p102, %p103
      %p105 = scmp.ne.s32.totalorder %s97, %s99
      %p106 = scmp.eq.s32.totalorder %s26, 1
      %p107 = por %p105, %p106
      %p108 = scmp.ne.s32.totalorder %s99, %s100
      %p109 = scmp.eq.s32.totalorder %s26, 0
      %p110 = por %p108, %p109
      %p111 = scmp.ne.s32.totalorder %s99, %s100
      %p112 = scmp.eq.s32.totalorder %s27, 1
      %p113 = por %p111, %p112
      %p115 = scmp.ne.s32.totalorder %s100, %s114
      %p116 = scmp.eq.s32.totalorder %s27, 0
      %p117 = por %p115, %p116
      %s119 = sadd.s32 %s118, 1
      %p122 = scmp.eq.s32.totalorder %s21, 1
      %p123 = scmp.ne.s32.totalorder %s118, %s120
      %p124 = scmp.eq.s32.totalorder %s21, 0
      %p125 = por %p123, %p124
      %p126 = scmp.ne.s32.totalorder %s118, %s120
      %p127 = scmp.eq.s32.totalorder %s26, 1
      %p128 = por %p126, %p127
      %p129 = scmp.ne.s32.totalorder %s120, %s121
      %p130 = scmp.eq.s32.totalorder %s26, 0
      %p131 = por %p129, %p130
      %p132 = scmp.ne.s32.totalorder %s120, %s121
      %p133 = scmp.eq.s32.totalorder %s27, 1
      %p134 = por %p132, %p133
      %p136 = scmp.ne.s32.totalorder %s121, %s135
      %p137 = scmp.eq.s32.totalorder %s27, 0
      %p138 = por %p136, %p137
      %s140 = sadd.s32 %s139, 1
      %p143 = scmp.eq.s32.totalorder %s21, 1
      %p144 = scmp.ne.s32.totalorder %s139, %s141
      %p145 = scmp.eq.s32.totalorder %s21, 0
      %p146 = por %p144, %p145
      %p147 = scmp.ne.s32.totalorder %s139, %s141
      %p148 = scmp.eq.s32.totalorder %s26, 1
      %p149 = por %p147, %p148
      %p150 = scmp.ne.s32.totalorder %s141, %s142
      %p151 = scmp.eq.s32.totalorder %s26, 0
      %p152 = por %p150, %p151
      %p153 = scmp.ne.s32.totalorder %s141, %s142
      %p154 = scmp.eq.s32.totalorder %s27, 1
      %p155 = por %p153, %p154
      %p157 = scmp.ne.s32.totalorder %s142, %s156
      %p158 = scmp.eq.s32.totalorder %s27, 0
      %p159 = por %p157, %p158
      %s161 = sadd.s32 %s160, 1
      %p164 = scmp.eq.s32.totalorder %s21, 1
      %p165 = scmp.ne.s32.totalorder %s160, %s162
      %p166 = scmp.eq.s32.totalorder %s21, 0
      %p167 = por %p165, %p166
      %p168 = scmp.ne.s32.totalorder %s160, %s162
      %p169 = scmp.eq.s32.totalorder %s26, 1
      %p170 = por %p168, %p169
      %p171 = scmp.ne.s32.totalorder %s162, %s163
      %p172 = scmp.eq.s32.totalorder %s26, 0
      %p173 = por %p171, %p172
      %p174 = scmp.ne.s32.totalorder %s162, %s163
      %p175 = scmp.eq.s32.totalorder %s27, 1
      %p176 = por %p174, %p175
      %p178 = scmp.ne.s32.totalorder %s163, %s177
      %p179 = scmp.eq.s32.totalorder %s27, 0
      %p180 = por %p178, %p179
      %s182 = sadd.s32 %s181, 1
      %p185 = scmp.eq.s32.totalorder %s21, 1
      %p186 = scmp.ne.s32.totalorder %s181, %s183
      %p187 = scmp.eq.s32.totalorder %s21, 0
      %p188 = por %p186, %p187
      %p189 = scmp.ne.s32.totalorder %s181, %s183
      %p190 = scmp.eq.s32.totalorder %s26, 1
      %p191 = por %p189, %p190
      %p192 = scmp.ne.s32.totalorder %s183, %s184
      %p193 = scmp.eq.s32.totalorder %s26, 0
      %p194 = por %p192, %p193
      %p195 = scmp.ne.s32.totalorder %s183, %s184
      %p196 = scmp.eq.s32.totalorder %s27, 1
      %p197 = por %p195, %p196
      %p199 = scmp.ne.s32.totalorder %s184, %s198
      %p200 = scmp.eq.s32.totalorder %s27, 0
      %p201 = por %p199, %p200
      %s203 = sadd.s32 %s202, 1
      %p206 = scmp.eq.s32.totalorder %s21, 1
      %p207 = scmp.ne.s32.totalorder %s202, %s204
      %p208 = scmp.eq.s32.totalorder %s21, 0
      %p209 = por %p207, %p208
      %p210 = scmp.ne.s32.totalorder %s202, %s204
      %p211 = scmp.eq.s32.totalorder %s26, 1
      %p212 = por %p210, %p211
      %p213 = scmp.ne.s32.totalorder %s204, %s205
      %p214 = scmp.eq.s32.totalorder %s26, 0
      %p215 = por %p213, %p214
      %p216 = scmp.ne.s32.totalorder %s204, %s205
      %p217 = scmp.eq.s32.totalorder %s27, 1
      %p218 = por %p216, %p217
      %p220 = scmp.ne.s32.totalorder %s205, %s219
      %p221 = scmp.eq.s32.totalorder %s27, 0
      %p222 = por %p220, %p221
      %s224 = sadd.s32 %s223, 1
      %p227 = scmp.eq.s32.totalorder %s21, 1
      %p228 = scmp.ne.s32.totalorder %s223, %s225
      %p229 = scmp.eq.s32.totalorder %s21, 0
      %p230 = por %p228, %p229
      %p231 = scmp.ne.s32.totalorder %s223, %s225
      %p232 = scmp.eq.s32.totalorder %s26, 1
      %p233 = por %p231, %p232
      %p234 = scmp.ne.s32.totalorder %s225, %s226
      %p235 = scmp.eq.s32.totalorder %s26, 0
      %p236 = por %p234, %p235
      %p237 = scmp.ne.s32.totalorder %s225, %s226
      %p238 = scmp.eq.s32.totalorder %s27, 1
      %p239 = por %p237, %p238
      %p241 = scmp.ne.s32.totalorder %s226, %s240
      %p242 = scmp.eq.s32.totalorder %s27, 0
      %p243 = por %p241, %p242
      %s245 = sadd.s32 %s244, 1
      %p248 = scmp.eq.s32.totalorder %s21, 1
      %p249 = scmp.ne.s32.totalorder %s244, %s246
      %p250 = scmp.eq.s32.totalorder %s21, 0
      %p251 = por %p249, %p250
      %p252 = scmp.ne.s32.totalorder %s244, %s246
      %p253 = scmp.eq.s32.totalorder %s26, 1
      %p254 = por %p252, %p253
      %p255 = scmp.ne.s32.totalorder %s246, %s247
      %p256 = scmp.eq.s32.totalorder %s26, 0
      %p257 = por %p255, %p256
      %p258 = scmp.ne.s32.totalorder %s246, %s247
      %p259 = scmp.eq.s32.totalorder %s27, 1
      %p260 = por %p258, %p259
      %p262 = scmp.ne.s32.totalorder %s247, %s261
      %p263 = scmp.eq.s32.totalorder %s27, 0
      %p264 = por %p262, %p263
      %s265 = ssub.s32 %s21, %s28
      %p266 = scmp.eq.s32.totalorder %s265, 0
      %s268 = sadd.s32 %s267, 1
      %s269 = scalar_select %p266, %s267, %s268
      %p272 = pneg %p266
      %p273 = scmp.eq.s32.totalorder %s21, 1
      %p274 = por %p272, %p273
      %p275 = scmp.ne.s32.totalorder %s267, %s270
      %p276 = scmp.eq.s32.totalorder %s21, 0
      %p277 = por %p275, %p276
      %p278 = scmp.ne.s32.totalorder %s267, %s270
      %p279 = scmp.eq.s32.totalorder %s26, 1
      %p280 = por %p278, %p279
      %p281 = scmp.ne.s32.totalorder %s270, %s271
      %p282 = scmp.eq.s32.totalorder %s26, 0
      %p283 = por %p281, %p282
      %p284 = scmp.ne.s32.totalorder %s270, %s271
      %p285 = scmp.eq.s32.totalorder %s27, 1
      %p286 = por %p284, %p285
      %p288 = scmp.ne.s32.totalorder %s271, %s287
      %p289 = scmp.eq.s32.totalorder %s27, 0
      %p290 = por %p288, %p289
      %p291 = scmp.le.s32.totalorder 1, %s21
      %p292 = scmp.lt.s32.totalorder %s21, 3
      %p293 = pnand %p291, %p292
      %p294 = pneg %p293
      // Predicated region
      $region9: #{cnn4_forward.1} parent=5 // pred_check
        _
      $region10: #{cnn4_forward.1} parent=5 // pred_check_branch
        %296 = sbr.rel (%p293) target = $region12
      $region11: #{cnn4_forward.1} parent=5 // pred_region
        %s297 = ssub.s32 %s21, 1
        // Predicated region
        $region13: #{cnn4_forward.1} parent=11 // pred_check
          %p298 = pneg %p68
        $region14: #{cnn4_forward.1} parent=11 // pred_check_branch
          %300 = sbr.rel (%p298) target = $region16
        $region15: #{cnn4_forward.1} parent=11 // pred_region
          _
        $region16: #{cnn4_forward.1} parent=11 // pred_fallthru
          _
        // Predicated region
        $region17: #{cnn4_forward.1} parent=11 // pred_check
          %p301 = pneg %p89
        $region18: #{cnn4_forward.1} parent=11 // pred_check_branch
          %303 = sbr.rel (%p301) target = $region20
        $region19: #{cnn4_forward.1} parent=11 // pred_region
          _
        $region20: #{cnn4_forward.1} parent=11 // pred_fallthru
          _
        // Predicated region
        $region21: #{cnn4_forward.1} parent=11 // pred_check
          %p304 = pneg %p110
        $region22: #{cnn4_forward.1} parent=11 // pred_check_branch
          %306 = sbr.rel (%p304) target = $region24
        $region23: #{cnn4_forward.1} parent=11 // pred_region
          _
        $region24: #{cnn4_forward.1} parent=11 // pred_fallthru
          _
        // Predicated region
        $region25: #{cnn4_forward.1} parent=11 // pred_check
          %p307 = pneg %p131
        $region26: #{cnn4_forward.1} parent=11 // pred_check_branch
          %309 = sbr.rel (%p307) target = $region28
        $region27: #{cnn4_forward.1} parent=11 // pred_region
          _
        $region28: #{cnn4_forward.1} parent=11 // pred_fallthru
          _
        // Predicated region
        $region29: #{cnn4_forward.1} parent=11 // pred_check
          %p310 = pneg %p152
        $region30: #{cnn4_forward.1} parent=11 // pred_check_branch
          %312 = sbr.rel (%p310) target = $region32
        $region31: #{cnn4_forward.1} parent=11 // pred_region
          %s314 = ssub.s32 20480, 20480
          %315 = vsyncadd [#allocation6], %s314
          %s316 = sshll.u32 [#allocation5], 4
          %s317 = int_to_ptr.vmem [resolvable:$true] %s316
          %322 = dma.hbm_to_vmem [thread:$0]  %s5, 20480, %s317, [#allocation6], 128, 128, 8
        $region32: #{cnn4_forward.1} parent=11 // pred_fallthru
          _
        // Predicated region
        $region33: #{cnn4_forward.1} parent=11 // pred_check
          %p323 = pneg %p173
        $region34: #{cnn4_forward.1} parent=11 // pred_check_branch
          %325 = sbr.rel (%p323) target = $region36
        $region35: #{cnn4_forward.1} parent=11 // pred_region
          _
        $region36: #{cnn4_forward.1} parent=11 // pred_fallthru
          _
        // Predicated region
        $region37: #{cnn4_forward.1} parent=11 // pred_check
          %p326 = pneg %p194
        $region38: #{cnn4_forward.1} parent=11 // pred_check_branch
          %328 = sbr.rel (%p326) target = $region40
        $region39: #{cnn4_forward.1} parent=11 // pred_region
          _
        $region40: #{cnn4_forward.1} parent=11 // pred_fallthru
          _
        // Predicated region
        $region41: #{cnn4_forward.1} parent=11 // pred_check
          %p329 = pneg %p215
        $region42: #{cnn4_forward.1} parent=11 // pred_check_branch
          %331 = sbr.rel (%p329) target = $region44
        $region43: #{cnn4_forward.1} parent=11 // pred_region
          _
        $region44: #{cnn4_forward.1} parent=11 // pred_fallthru
          _
        // Predicated region
        $region45: #{cnn4_forward.1} parent=11 // pred_check
          %p332 = pneg %p236
        $region46: #{cnn4_forward.1} parent=11 // pred_check_branch
          %334 = sbr.rel (%p332) target = $region48
        $region47: #{cnn4_forward.1} parent=11 // pred_region
          _
        $region48: #{cnn4_forward.1} parent=11 // pred_fallthru
          _
        // Predicated region
        $region49: #{cnn4_forward.1} parent=11 // pred_check
          %p335 = pneg %p257
        $region50: #{cnn4_forward.1} parent=11 // pred_check_branch
          %337 = sbr.rel (%p335) target = $region52
        $region51: #{cnn4_forward.1} parent=11 // pred_region
          _
        $region52: #{cnn4_forward.1} parent=11 // pred_fallthru
          _
      $region12: #{cnn4_forward.1} parent=5 // pred_fallthru
        _
      %p338 = scmp.lt.s32.totalorder %s21, 2
      // Predicated region
      $region53: #{cnn4_forward.1} parent=5 // pred_check
        %p339 = pneg %p338
      $region54: #{cnn4_forward.1} parent=5 // pred_check_branch
        %341 = sbr.rel (%p339) target = $region56
      $region55: #{cnn4_forward.1} parent=5 // pred_region
        // Predicated region
        $region57: #{cnn4_forward.1} parent=55 // pred_check
          %p342 = pneg %p41
        $region58: #{cnn4_forward.1} parent=55 // pred_check_branch
          %344 = sbr.rel (%p342) target = $region60
        $region59: #{cnn4_forward.1} parent=55 // pred_region
          %p345 = scmp.lt.s32.totalorder %s21, 1
          %s346 = scalar_select %p345, %s21, 1
          %s347 = smul.addr %s346, 16
          %s348 = smul.addr %s347, 8
          %s349 = scalar_lea.vmem %s0, %s348
        $region60: #{cnn4_forward.1} parent=55 // pred_fallthru
          _
      $region56: #{cnn4_forward.1} parent=5 // pred_fallthru
        _
      %p350 = scmp.le.s32.totalorder 1, %s21
      %p351 = scmp.lt.s32.totalorder %s21, 3
      %p352 = pnand %p350, %p351
      %p353 = pneg %p352
      // Predicated region
      $region61: #{cnn4_forward.1} parent=5 // pred_check
        _
      $region62: #{cnn4_forward.1} parent=5 // pred_check_branch
        %355 = sbr.rel (%p352) target = $region64
      $region63: #{cnn4_forward.1} parent=5 // pred_region
        %s356 = ssub.s32 %s21, 1
        // Predicated region
        $region65: #{cnn4_forward.1} parent=63 // pred_check
          %p357 = pneg %p152
        $region66: #{cnn4_forward.1} parent=63 // pred_check_branch
          %359 = sbr.rel (%p357) target = $region68
        $region67: #{cnn4_forward.1} parent=63 // pred_region
          %360 = dma.done [#allocation6], 20480
        $region68: #{cnn4_forward.1} parent=63 // pred_fallthru
          _
        %p361 = scmp.lt.s32.totalorder %s26, 1
        %s362 = scalar_select %p361, %s26, 1
        %s363 = smul.addr %s362, 16
        %s364 = smul.addr %s363, 8
        %s365 = scalar_lea.vmem %s0, %s364
        %p366 = pneg %p47
        %p367 = pneg %p44
        %p368 = pneg %p68
        %p369 = pneg %p65
        %p370 = pneg %p89
        %p371 = pneg %p86
        %p372 = pneg %p110
        %p373 = pneg %p107
        %p374 = pneg %p131
        %p375 = pneg %p128
        %p376 = pneg %p152
        %p377 = pneg %p149
        %p378 = pneg %p173
        %p379 = pneg %p170
        %p380 = pneg %p194
        %p381 = pneg %p191
        %p382 = pneg %p215
        %p383 = pneg %p212
        %p384 = pneg %p236
        %p385 = pneg %p233
        %p386 = pneg %p257
        %p387 = pneg %p254
        %p388 = pneg %p283
        %p389 = pneg %p280
        %s390 = sand.u32 %s270, 1
        %s391 = scalar_lea.sflag [#allocation7], %s390
        %s392 = sand.u32 %s270, 1
        %s393 = scalar_lea.vmem [#allocation8], %s392
        %p394 = scmp.lt.s32.totalorder %s26, 1
        %s395 = scalar_select %p394, %s26, 1
        %s396 = smul.addr %s395, 16
        %s397 = smul.addr %s396, 8
        %s398 = scalar_lea.vmem %s0, %s397
        %vm399 = vcmask 1024
        %400 = vst.msk [vmem:[#allocation2] sm:$0x3] %vm399, 0.0
        %v401 = vld [vmem:[%s398] sm:$0xff]
        %v402 = vld [vmem:[%s398 + $0x8] sm:$0xff]
        %v403 = vld [vmem:[%s398 + $0x10] sm:$0xff]
        %v404 = vld [vmem:[%s398 + $0x18] sm:$0xff]
        %v405 = vld [vmem:[%s398 + $0x20] sm:$0xff]
        %v406 = vld [vmem:[%s398 + $0x28] sm:$0xff]
        %v407 = vld [vmem:[%s398 + $0x30] sm:$0xff]
        %v408 = vld [vmem:[%s398 + $0x38] sm:$0xff]
        %v409 = vld [vmem:[%s398 + $0x40] sm:$0xff]
        %v410 = vld [vmem:[%s398 + $0x48] sm:$0xff]
        %v411 = vld [vmem:[%s398 + $0x50] sm:$0xff]
        %v412 = vld [vmem:[%s398 + $0x58] sm:$0xff]
        %v413 = vld [vmem:[%s398 + $0x60] sm:$0xff]
        %v414 = vld [vmem:[%s398 + $0x68] sm:$0xff]
        %v415 = vld [vmem:[%s398 + $0x70] sm:$0xff]
        %v416 = vld [vmem:[%s398 + $0x78] sm:$0xff]
        %vm417 = vcmask 7168
        %418 = vst.msk [vmem:[#allocation2 + $0x2] sm:$0xff] %vm417, %v401
        %419 = vst.msk [vmem:[#allocation2 + $0xa] sm:$0xff] %vm417, %v402
        %420 = vst.msk [vmem:[#allocation2 + $0x12] sm:$0xff] %vm417, %v403
        %421 = vst.msk [vmem:[#allocation2 + $0x1a] sm:$0xff] %vm417, %v404
        %422 = vst.msk [vmem:[#allocation2 + $0x22] sm:$0xff] %vm417, %v405
        %423 = vst.msk [vmem:[#allocation2 + $0x2a] sm:$0xff] %vm417, %v406
        %424 = vst.msk [vmem:[#allocation2 + $0x32] sm:$0xff] %vm417, %v407
        %425 = vst.msk [vmem:[#allocation2 + $0x3a] sm:$0xff] %vm417, %v408
        %426 = vst.msk [vmem:[#allocation2 + $0x42] sm:$0xff] %vm417, %v409
        %427 = vst.msk [vmem:[#allocation2 + $0x4a] sm:$0xff] %vm417, %v410
        %428 = vst.msk [vmem:[#allocation2 + $0x52] sm:$0xff] %vm417, %v411
        %429 = vst.msk [vmem:[#allocation2 + $0x5a] sm:$0xff] %vm417, %v412
        %430 = vst.msk [vmem:[#allocation2 + $0x62] sm:$0xff] %vm417, %v413
        %431 = vst.msk [vmem:[#allocation2 + $0x6a] sm:$0xff] %vm417, %v414
        %432 = vst.msk [vmem:[#allocation2 + $0x72] sm:$0xff] %vm417, %v415
        %433 = vst.msk [vmem:[#allocation2 + $0x7a] sm:$0xff] %vm417, %v416
        %434 = vst.msk [vmem:[#allocation2 + $0x82] sm:$0x3] %vm399, 0.0
        %v435 = vld [vmem:[#allocation2] sm:$0xff]
        %v436 = vld [vmem:[#allocation2 + $0x8] sm:$0xff]
        %v437 = vld [vmem:[#allocation2 + $0x10] sm:$0xff]
        %v438 = vld [vmem:[#allocation2 + $0x18] sm:$0xff]
        %v439 = vld [vmem:[#allocation2 + $0x20] sm:$0xff]
        %v440 = vld [vmem:[#allocation2 + $0x28] sm:$0xff]
        %v441 = vld [vmem:[#allocation2 + $0x30] sm:$0xff]
        %v442 = vld [vmem:[#allocation2 + $0x38] sm:$0xff]
        %v443 = vld [vmem:[#allocation2 + $0x40] sm:$0xff]
        %v444 = vld [vmem:[#allocation2 + $0x48] sm:$0xff]
        %v445 = vld [vmem:[#allocation2 + $0x50] sm:$0xff]
        %v446 = vld [vmem:[#allocation2 + $0x58] sm:$0xff]
        %v447 = vld [vmem:[#allocation2 + $0x60] sm:$0xff]
        %v448 = vld [vmem:[#allocation2 + $0x68] sm:$0xff]
        %v449 = vld [vmem:[#allocation2 + $0x70] sm:$0xff]
        %v450 = vld [vmem:[#allocation2 + $0x78] sm:$0xff]
        %v451 = vld [vmem:[%s1] sm:$0x1]
        %453 = vset.pattern.permute.xlu0 0
        %454 = vperm.xlu0 %453, %v435
        %v455 = vpop.permute.xlu0 %454
        %458 = vset.pattern.permute.xlu0 0
        %459 = vperm.xlu0 %458, %v436
        %v460 = vpop.permute.xlu0 %459
        %463 = vset.pattern.permute.xlu0 0
        %464 = vperm.xlu0 %463, %v437
        %v465 = vpop.permute.xlu0 %464
        %468 = vset.pattern.permute.xlu0 0
        %469 = vperm.xlu0 %468, %v438
        %v470 = vpop.permute.xlu0 %469
        %473 = vset.pattern.permute.xlu0 0
        %474 = vperm.xlu0 %473, %v439
        %v475 = vpop.permute.xlu0 %474
        %478 = vset.pattern.permute.xlu0 0
        %479 = vperm.xlu0 %478, %v440
        %v480 = vpop.permute.xlu0 %479
        %483 = vset.pattern.permute.xlu0 0
        %484 = vperm.xlu0 %483, %v441
        %v485 = vpop.permute.xlu0 %484
        %488 = vset.pattern.permute.xlu0 0
        %489 = vperm.xlu0 %488, %v442
        %v490 = vpop.permute.xlu0 %489
        %493 = vset.pattern.permute.xlu0 0
        %494 = vperm.xlu0 %493, %v443
        %v495 = vpop.permute.xlu0 %494
        %498 = vset.pattern.permute.xlu0 0
        %499 = vperm.xlu0 %498, %v444
        %v500 = vpop.permute.xlu0 %499
        %503 = vset.pattern.permute.xlu0 0
        %504 = vperm.xlu0 %503, %v445
        %v505 = vpop.permute.xlu0 %504
        %508 = vset.pattern.permute.xlu0 0
        %509 = vperm.xlu0 %508, %v446
        %v510 = vpop.permute.xlu0 %509
        %513 = vset.pattern.permute.xlu0 0
        %514 = vperm.xlu0 %513, %v447
        %v515 = vpop.permute.xlu0 %514
        %518 = vset.pattern.permute.xlu0 0
        %519 = vperm.xlu0 %518, %v448
        %v520 = vpop.permute.xlu0 %519
        %523 = vset.pattern.permute.xlu0 0
        %524 = vperm.xlu0 %523, %v449
        %v525 = vpop.permute.xlu0 %524
        %528 = vset.pattern.permute.xlu0 0
        %529 = vperm.xlu0 %528, %v450
        %v530 = vpop.permute.xlu0 %529
        %v532 = vlaneseq
        %v533 = vshrl.u32 %v532, 7
        %v534 = vsub.s32 0, %v533
        %v535 = vrot.slane %v451, %v534
        %v536 = vmul.f32 %v455, %v535
        %v537 = vmul.f32 %v460, %v535
        %v538 = vmul.f32 %v465, %v535
        %v539 = vmul.f32 %v470, %v535
        %v540 = vmul.f32 %v475, %v535
        %v541 = vmul.f32 %v480, %v535
        %v542 = vmul.f32 %v485, %v535
        %v543 = vmul.f32 %v490, %v535
        %v544 = vmul.f32 %v495, %v535
        %v545 = vmul.f32 %v500, %v535
        %v546 = vmul.f32 %v505, %v535
        %v547 = vmul.f32 %v510, %v535
        %v548 = vmul.f32 %v515, %v535
        %v549 = vmul.f32 %v520, %v535
        %v550 = vmul.f32 %v525, %v535
        %v551 = vmul.f32 %v530, %v535
        %v552 = vadd.f32 %v536, 0.0
        %v553 = vadd.f32 %v537, 0.0
        %v554 = vadd.f32 %v538, 0.0
        %v555 = vadd.f32 %v539, 0.0
        %v556 = vadd.f32 %v540, 0.0
        %v557 = vadd.f32 %v541, 0.0
        %v558 = vadd.f32 %v542, 0.0
        %v559 = vadd.f32 %v543, 0.0
        %v560 = vadd.f32 %v544, 0.0
        %v561 = vadd.f32 %v545, 0.0
        %v562 = vadd.f32 %v546, 0.0
        %v563 = vadd.f32 %v547, 0.0
        %v564 = vadd.f32 %v548, 0.0
        %v565 = vadd.f32 %v549, 0.0
        %v566 = vadd.f32 %v550, 0.0
        %v567 = vadd.f32 %v551, 0.0
        %v568 = vld [vmem:[#allocation2 + $0x1] sm:$0xff]
        %v569 = vld [vmem:[#allocation2 + $0x9] sm:$0xff]
        %v570 = vld [vmem:[#allocation2 + $0x11] sm:$0xff]
        %v571 = vld [vmem:[#allocation2 + $0x19] sm:$0xff]
        %v572 = vld [vmem:[#allocation2 + $0x21] sm:$0xff]
        %v573 = vld [vmem:[#allocation2 + $0x29] sm:$0xff]
        %v574 = vld [vmem:[#allocation2 + $0x31] sm:$0xff]
        %v575 = vld [vmem:[#allocation2 + $0x39] sm:$0xff]
        %v576 = vld [vmem:[#allocation2 + $0x41] sm:$0xff]
        %v577 = vld [vmem:[#allocation2 + $0x49] sm:$0xff]
        %v578 = vld [vmem:[#allocation2 + $0x51] sm:$0xff]
        %v579 = vld [vmem:[#allocation2 + $0x59] sm:$0xff]
        %v580 = vld [vmem:[#allocation2 + $0x61] sm:$0xff]
        %v581 = vld [vmem:[#allocation2 + $0x69] sm:$0xff]
        %v582 = vld [vmem:[#allocation2 + $0x71] sm:$0xff]
        %v583 = vld [vmem:[#allocation2 + $0x79] sm:$0xff]
        %v584 = vld [vmem:[%s1 + $0x1] sm:$0x1]
        %586 = vset.pattern.permute.xlu0 0
        %587 = vperm.xlu0 %586, %v568
        %v588 = vpop.permute.xlu0 %587
        %591 = vset.pattern.permute.xlu0 0
        %592 = vperm.xlu0 %591, %v569
        %v593 = vpop.permute.xlu0 %592
        %596 = vset.pattern.permute.xlu0 0
        %597 = vperm.xlu0 %596, %v570
        %v598 = vpop.permute.xlu0 %597
        %601 = vset.pattern.permute.xlu0 0
        %602 = vperm.xlu0 %601, %v571
        %v603 = vpop.permute.xlu0 %602
        %606 = vset.pattern.permute.xlu0 0
        %607 = vperm.xlu0 %606, %v572
        %v608 = vpop.permute.xlu0 %607
        %611 = vset.pattern.permute.xlu0 0
        %612 = vperm.xlu0 %611, %v573
        %v613 = vpop.permute.xlu0 %612
        %616 = vset.pattern.permute.xlu0 0
        %617 = vperm.xlu0 %616, %v574
        %v618 = vpop.permute.xlu0 %617
        %621 = vset.pattern.permute.xlu0 0
        %622 = vperm.xlu0 %621, %v575
        %v623 = vpop.permute.xlu0 %622
        %626 = vset.pattern.permute.xlu0 0
        %627 = vperm.xlu0 %626, %v576
        %v628 = vpop.permute.xlu0 %627
        %631 = vset.pattern.permute.xlu0 0
        %632 = vperm.xlu0 %631, %v577
        %v633 = vpop.permute.xlu0 %632
        %636 = vset.pattern.permute.xlu0 0
        %637 = vperm.xlu0 %636, %v578
        %v638 = vpop.permute.xlu0 %637
        %641 = vset.pattern.permute.xlu0 0
        %642 = vperm.xlu0 %641, %v579
        %v643 = vpop.permute.xlu0 %642
        %646 = vset.pattern.permute.xlu0 0
        %647 = vperm.xlu0 %646, %v580
        %v648 = vpop.permute.xlu0 %647
        %651 = vset.pattern.permute.xlu0 0
        %652 = vperm.xlu0 %651, %v581
        %v653 = vpop.permute.xlu0 %652
        %656 = vset.pattern.permute.xlu0 0
        %657 = vperm.xlu0 %656, %v582
        %v658 = vpop.permute.xlu0 %657
        %661 = vset.pattern.permute.xlu0 0
        %662 = vperm.xlu0 %661, %v583
        %v663 = vpop.permute.xlu0 %662
        %v665 = vlaneseq
        %v666 = vshrl.u32 %v665, 7
        %v667 = vsub.s32 0, %v666
        %v668 = vrot.slane %v584, %v667
        %v669 = vmul.f32 %v588, %v668
        %v670 = vmul.f32 %v593, %v668
        %v671 = vmul.f32 %v598, %v668
        %v672 = vmul.f32 %v603, %v668
        %v673 = vmul.f32 %v608, %v668
        %v674 = vmul.f32 %v613, %v668
        %v675 = vmul.f32 %v618, %v668
        %v676 = vmul.f32 %v623, %v668
        %v677 = vmul.f32 %v628, %v668
        %v678 = vmul.f32 %v633, %v668
        %v679 = vmul.f32 %v638, %v668
        %v680 = vmul.f32 %v643, %v668
        %v681 = vmul.f32 %v648, %v668
        %v682 = vmul.f32 %v653, %v668
        %v683 = vmul.f32 %v658, %v668
        %v684 = vmul.f32 %v663, %v668
        %v685 = vadd.f32 %v552, %v669
        %v686 = vadd.f32 %v553, %v670
        %v687 = vadd.f32 %v554, %v671
        %v688 = vadd.f32 %v555, %v672
        %v689 = vadd.f32 %v556, %v673
        %v690 = vadd.f32 %v557, %v674
        %v691 = vadd.f32 %v558, %v675
        %v692 = vadd.f32 %v559, %v676
        %v693 = vadd.f32 %v560, %v677
        %v694 = vadd.f32 %v561, %v678
        %v695 = vadd.f32 %v562, %v679
        %v696 = vadd.f32 %v563, %v680
        %v697 = vadd.f32 %v564, %v681
        %v698 = vadd.f32 %v565, %v682
        %v699 = vadd.f32 %v566, %v683
        %v700 = vadd.f32 %v567, %v684
        %v701 = vld [vmem:[#allocation2 + $0x2] sm:$0xff]
        %v702 = vld [vmem:[#allocation2 + $0xa] sm:$0xff]
        %v703 = vld [vmem:[#allocation2 + $0x12] sm:$0xff]
        %v704 = vld [vmem:[#allocation2 + $0x1a] sm:$0xff]
        %v705 = vld [vmem:[#allocation2 + $0x22] sm:$0xff]
        %v706 = vld [vmem:[#allocation2 + $0x2a] sm:$0xff]
        %v707 = vld [vmem:[#allocation2 + $0x32] sm:$0xff]
        %v708 = vld [vmem:[#allocation2 + $0x3a] sm:$0xff]
        %v709 = vld [vmem:[#allocation2 + $0x42] sm:$0xff]
        %v710 = vld [vmem:[#allocation2 + $0x4a] sm:$0xff]
        %v711 = vld [vmem:[#allocation2 + $0x52] sm:$0xff]
        %v712 = vld [vmem:[#allocation2 + $0x5a] sm:$0xff]
        %v713 = vld [vmem:[#allocation2 + $0x62] sm:$0xff]
        %v714 = vld [vmem:[#allocation2 + $0x6a] sm:$0xff]
        %v715 = vld [vmem:[#allocation2 + $0x72] sm:$0xff]
        %v716 = vld [vmem:[#allocation2 + $0x7a] sm:$0xff]
        %v717 = vld [vmem:[%s1 + $0x2] sm:$0x1]
        %719 = vset.pattern.permute.xlu0 0
        %720 = vperm.xlu0 %719, %v701
        %v721 = vpop.permute.xlu0 %720
        %724 = vset.pattern.permute.xlu0 0
        %725 = vperm.xlu0 %724, %v702
        %v726 = vpop.permute.xlu0 %725
        %729 = vset.pattern.permute.xlu0 0
        %730 = vperm.xlu0 %729, %v703
        %v731 = vpop.permute.xlu0 %730
        %734 = vset.pattern.permute.xlu0 0
        %735 = vperm.xlu0 %734, %v704
        %v736 = vpop.permute.xlu0 %735
        %739 = vset.pattern.permute.xlu0 0
        %740 = vperm.xlu0 %739, %v705
        %v741 = vpop.permute.xlu0 %740
        %744 = vset.pattern.permute.xlu0 0
        %745 = vperm.xlu0 %744, %v706
        %v746 = vpop.permute.xlu0 %745
        %749 = vset.pattern.permute.xlu0 0
        %750 = vperm.xlu0 %749, %v707
        %v751 = vpop.permute.xlu0 %750
        %754 = vset.pattern.permute.xlu0 0
        %755 = vperm.xlu0 %754, %v708
        %v756 = vpop.permute.xlu0 %755
        %759 = vset.pattern.permute.xlu0 0
        %760 = vperm.xlu0 %759, %v709
        %v761 = vpop.permute.xlu0 %760
        %764 = vset.pattern.permute.xlu0 0
        %765 = vperm.xlu0 %764, %v710
        %v766 = vpop.permute.xlu0 %765
        %769 = vset.pattern.permute.xlu0 0
        %770 = vperm.xlu0 %769, %v711
        %v771 = vpop.permute.xlu0 %770
        %774 = vset.pattern.permute.xlu0 0
        %775 = vperm.xlu0 %774, %v712
        %v776 = vpop.permute.xlu0 %775
        %779 = vset.pattern.permute.xlu0 0
        %780 = vperm.xlu0 %779, %v713
        %v781 = vpop.permute.xlu0 %780
        %784 = vset.pattern.permute.xlu0 0
        %785 = vperm.xlu0 %784, %v714
        %v786 = vpop.permute.xlu0 %785
        %789 = vset.pattern.permute.xlu0 0
        %790 = vperm.xlu0 %789, %v715
        %v791 = vpop.permute.xlu0 %790
        %794 = vset.pattern.permute.xlu0 0
        %795 = vperm.xlu0 %794, %v716
        %v796 = vpop.permute.xlu0 %795
        %v798 = vlaneseq
        %v799 = vshrl.u32 %v798, 7
        %v800 = vsub.s32 0, %v799
        %v801 = vrot.slane %v717, %v800
        %v802 = vmul.f32 %v721, %v801
        %v803 = vmul.f32 %v726, %v801
        %v804 = vmul.f32 %v731, %v801
        %v805 = vmul.f32 %v736, %v801
        %v806 = vmul.f32 %v741, %v801
        %v807 = vmul.f32 %v746, %v801
        %v808 = vmul.f32 %v751, %v801
        %v809 = vmul.f32 %v756, %v801
        %v810 = vmul.f32 %v761, %v801
        %v811 = vmul.f32 %v766, %v801
        %v812 = vmul.f32 %v771, %v801
        %v813 = vmul.f32 %v776, %v801
        %v814 = vmul.f32 %v781, %v801
        %v815 = vmul.f32 %v786, %v801
        %v816 = vmul.f32 %v791, %v801
        %v817 = vmul.f32 %v796, %v801
        %v818 = vadd.f32 %v685, %v802
        %v819 = vadd.f32 %v686, %v803
        %v820 = vadd.f32 %v687, %v804
        %v821 = vadd.f32 %v688, %v805
        %v822 = vadd.f32 %v689, %v806
        %v823 = vadd.f32 %v690, %v807
        %v824 = vadd.f32 %v691, %v808
        %v825 = vadd.f32 %v692, %v809
        %v826 = vadd.f32 %v693, %v810
        %v827 = vadd.f32 %v694, %v811
        %v828 = vadd.f32 %v695, %v812
        %v829 = vadd.f32 %v696, %v813
        %v830 = vadd.f32 %v697, %v814
        %v831 = vadd.f32 %v698, %v815
        %v832 = vadd.f32 %v699, %v816
        %v833 = vadd.f32 %v700, %v817
        %v834 = vld [vmem:[#allocation2 + $0x3] sm:$0xff]
        %v835 = vld [vmem:[#allocation2 + $0xb] sm:$0xff]
        %v836 = vld [vmem:[#allocation2 + $0x13] sm:$0xff]
        %v837 = vld [vmem:[#allocation2 + $0x1b] sm:$0xff]
        %v838 = vld [vmem:[#allocation2 + $0x23] sm:$0xff]
        %v839 = vld [vmem:[#allocation2 + $0x2b] sm:$0xff]
        %v840 = vld [vmem:[#allocation2 + $0x33] sm:$0xff]
        %v841 = vld [vmem:[#allocation2 + $0x3b] sm:$0xff]
        %v842 = vld [vmem:[#allocation2 + $0x43] sm:$0xff]
        %v843 = vld [vmem:[#allocation2 + $0x4b] sm:$0xff]
        %v844 = vld [vmem:[#allocation2 + $0x53] sm:$0xff]
        %v845 = vld [vmem:[#allocation2 + $0x5b] sm:$0xff]
        %v846 = vld [vmem:[#allocation2 + $0x63] sm:$0xff]
        %v847 = vld [vmem:[#allocation2 + $0x6b] sm:$0xff]
        %v848 = vld [vmem:[#allocation2 + $0x73] sm:$0xff]
        %v849 = vld [vmem:[#allocation2 + $0x7b] sm:$0xff]
        %v850 = vld [vmem:[%s1 + $0x3] sm:$0x1]
        %852 = vset.pattern.permute.xlu0 0
        %853 = vperm.xlu0 %852, %v834
        %v854 = vpop.permute.xlu0 %853
        %857 = vset.pattern.permute.xlu0 0
        %858 = vperm.xlu0 %857, %v835
        %v859 = vpop.permute.xlu0 %858
        %862 = vset.pattern.permute.xlu0 0
        %863 = vperm.xlu0 %862, %v836
        %v864 = vpop.permute.xlu0 %863
        %867 = vset.pattern.permute.xlu0 0
        %868 = vperm.xlu0 %867, %v837
        %v869 = vpop.permute.xlu0 %868
        %872 = vset.pattern.permute.xlu0 0
        %873 = vperm.xlu0 %872, %v838
        %v874 = vpop.permute.xlu0 %873
        %877 = vset.pattern.permute.xlu0 0
        %878 = vperm.xlu0 %877, %v839
        %v879 = vpop.permute.xlu0 %878
        %882 = vset.pattern.permute.xlu0 0
        %883 = vperm.xlu0 %882, %v840
        %v884 = vpop.permute.xlu0 %883
        %887 = vset.pattern.permute.xlu0 0
        %888 = vperm.xlu0 %887, %v841
        %v889 = vpop.permute.xlu0 %888
        %892 = vset.pattern.permute.xlu0 0
        %893 = vperm.xlu0 %892, %v842
        %v894 = vpop.permute.xlu0 %893
        %897 = vset.pattern.permute.xlu0 0
        %898 = vperm.xlu0 %897, %v843
        %v899 = vpop.permute.xlu0 %898
        %902 = vset.pattern.permute.xlu0 0
        %903 = vperm.xlu0 %902, %v844
        %v904 = vpop.permute.xlu0 %903
        %907 = vset.pattern.permute.xlu0 0
        %908 = vperm.xlu0 %907, %v845
        %v909 = vpop.permute.xlu0 %908
        %912 = vset.pattern.permute.xlu0 0
        %913 = vperm.xlu0 %912, %v846
        %v914 = vpop.permute.xlu0 %913
        %917 = vset.pattern.permute.xlu0 0
        %918 = vperm.xlu0 %917, %v847
        %v919 = vpop.permute.xlu0 %918
        %922 = vset.pattern.permute.xlu0 0
        %923 = vperm.xlu0 %922, %v848
        %v924 = vpop.permute.xlu0 %923
        %927 = vset.pattern.permute.xlu0 0
        %928 = vperm.xlu0 %927, %v849
        %v929 = vpop.permute.xlu0 %928
        %v931 = vlaneseq
        %v932 = vshrl.u32 %v931, 7
        %v933 = vsub.s32 0, %v932
        %v934 = vrot.slane %v850, %v933
        %v935 = vmul.f32 %v854, %v934
        %v936 = vmul.f32 %v859, %v934
        %v937 = vmul.f32 %v864, %v934
        %v938 = vmul.f32 %v869, %v934
        %v939 = vmul.f32 %v874, %v934
        %v940 = vmul.f32 %v879, %v934
        %v941 = vmul.f32 %v884, %v934
        %v942 = vmul.f32 %v889, %v934
        %v943 = vmul.f32 %v894, %v934
        %v944 = vmul.f32 %v899, %v934
        %v945 = vmul.f32 %v904, %v934
        %v946 = vmul.f32 %v909, %v934
        %v947 = vmul.f32 %v914, %v934
        %v948 = vmul.f32 %v919, %v934
        %v949 = vmul.f32 %v924, %v934
        %v950 = vmul.f32 %v929, %v934
        %v951 = vadd.f32 %v818, %v935
        %v952 = vadd.f32 %v819, %v936
        %v953 = vadd.f32 %v820, %v937
        %v954 = vadd.f32 %v821, %v938
        %v955 = vadd.f32 %v822, %v939
        %v956 = vadd.f32 %v823, %v940
        %v957 = vadd.f32 %v824, %v941
        %v958 = vadd.f32 %v825, %v942
        %v959 = vadd.f32 %v826, %v943
        %v960 = vadd.f32 %v827, %v944
        %v961 = vadd.f32 %v828, %v945
        %v962 = vadd.f32 %v829, %v946
        %v963 = vadd.f32 %v830, %v947
        %v964 = vadd.f32 %v831, %v948
        %v965 = vadd.f32 %v832, %v949
        %v966 = vadd.f32 %v833, %v950
        %v967 = vld [vmem:[#allocation2 + $0x4] sm:$0xff]
        %v968 = vld [vmem:[#allocation2 + $0xc] sm:$0xff]
        %v969 = vld [vmem:[#allocation2 + $0x14] sm:$0xff]
        %v970 = vld [vmem:[#allocation2 + $0x1c] sm:$0xff]
        %v971 = vld [vmem:[#allocation2 + $0x24] sm:$0xff]
        %v972 = vld [vmem:[#allocation2 + $0x2c] sm:$0xff]
        %v973 = vld [vmem:[#allocation2 + $0x34] sm:$0xff]
        %v974 = vld [vmem:[#allocation2 + $0x3c] sm:$0xff]
        %v975 = vld [vmem:[#allocation2 + $0x44] sm:$0xff]
        %v976 = vld [vmem:[#allocation2 + $0x4c] sm:$0xff]
        %v977 = vld [vmem:[#allocation2 + $0x54] sm:$0xff]
        %v978 = vld [vmem:[#allocation2 + $0x5c] sm:$0xff]
        %v979 = vld [vmem:[#allocation2 + $0x64] sm:$0xff]
        %v980 = vld [vmem:[#allocation2 + $0x6c] sm:$0xff]
        %v981 = vld [vmem:[#allocation2 + $0x74] sm:$0xff]
        %v982 = vld [vmem:[#allocation2 + $0x7c] sm:$0xff]
        %v983 = vld [vmem:[%s1 + $0x4] sm:$0x1]
        %985 = vset.pattern.permute.xlu0 0
        %986 = vperm.xlu0 %985, %v967
        %v987 = vpop.permute.xlu0 %986
        %990 = vset.pattern.permute.xlu0 0
        %991 = vperm.xlu0 %990, %v968
        %v992 = vpop.permute.xlu0 %991
        %995 = vset.pattern.permute.xlu0 0
        %996 = vperm.xlu0 %995, %v969
        %v997 = vpop.permute.xlu0 %996
        %1000 = vset.pattern.permute.xlu0 0
        %1001 = vperm.xlu0 %1000, %v970
        %v1002 = vpop.permute.xlu0 %1001
        %1005 = vset.pattern.permute.xlu0 0
        %1006 = vperm.xlu0 %1005, %v971
        %v1007 = vpop.permute.xlu0 %1006
        %1010 = vset.pattern.permute.xlu0 0
        %1011 = vperm.xlu0 %1010, %v972
        %v1012 = vpop.permute.xlu0 %1011
        %1015 = vset.pattern.permute.xlu0 0
        %1016 = vperm.xlu0 %1015, %v973
        %v1017 = vpop.permute.xlu0 %1016
        %1020 = vset.pattern.permute.xlu0 0
        %1021 = vperm.xlu0 %1020, %v974
        %v1022 = vpop.permute.xlu0 %1021
        %1025 = vset.pattern.permute.xlu0 0
        %1026 = vperm.xlu0 %1025, %v975
        %v1027 = vpop.permute.xlu0 %1026
        %1030 = vset.pattern.permute.xlu0 0
        %1031 = vperm.xlu0 %1030, %v976
        %v1032 = vpop.permute.xlu0 %1031
        %1035 = vset.pattern.permute.xlu0 0
        %1036 = vperm.xlu0 %1035, %v977
        %v1037 = vpop.permute.xlu0 %1036
        %1040 = vset.pattern.permute.xlu0 0
        %1041 = vperm.xlu0 %1040, %v978
        %v1042 = vpop.permute.xlu0 %1041
        %1045 = vset.pattern.permute.xlu0 0
        %1046 = vperm.xlu0 %1045, %v979
        %v1047 = vpop.permute.xlu0 %1046
        %1050 = vset.pattern.permute.xlu0 0
        %1051 = vperm.xlu0 %1050, %v980
        %v1052 = vpop.permute.xlu0 %1051
        %1055 = vset.pattern.permute.xlu0 0
        %1056 = vperm.xlu0 %1055, %v981
        %v1057 = vpop.permute.xlu0 %1056
        %1060 = vset.pattern.permute.xlu0 0
        %1061 = vperm.xlu0 %1060, %v982
        %v1062 = vpop.permute.xlu0 %1061
        %v1064 = vlaneseq
        %v1065 = vshrl.u32 %v1064, 7
        %v1066 = vsub.s32 0, %v1065
        %v1067 = vrot.slane %v983, %v1066
        %v1068 = vmul.f32 %v987, %v1067
        %v1069 = vmul.f32 %v992, %v1067
        %v1070 = vmul.f32 %v997, %v1067
        %v1071 = vmul.f32 %v1002, %v1067
        %v1072 = vmul.f32 %v1007, %v1067
        %v1073 = vmul.f32 %v1012, %v1067
        %v1074 = vmul.f32 %v1017, %v1067
        %v1075 = vmul.f32 %v1022, %v1067
        %v1076 = vmul.f32 %v1027, %v1067
        %v1077 = vmul.f32 %v1032, %v1067
        %v1078 = vmul.f32 %v1037, %v1067
        %v1079 = vmul.f32 %v1042, %v1067
        %v1080 = vmul.f32 %v1047, %v1067
        %v1081 = vmul.f32 %v1052, %v1067
        %v1082 = vmul.f32 %v1057, %v1067
        %v1083 = vmul.f32 %v1062, %v1067
        %v1084 = vadd.f32 %v951, %v1068
        %v1085 = vadd.f32 %v952, %v1069
        %v1086 = vadd.f32 %v953, %v1070
        %v1087 = vadd.f32 %v954, %v1071
        %v1088 = vadd.f32 %v955, %v1072
        %v1089 = vadd.f32 %v956, %v1073
        %v1090 = vadd.f32 %v957, %v1074
        %v1091 = vadd.f32 %v958, %v1075
        %v1092 = vadd.f32 %v959, %v1076
        %v1093 = vadd.f32 %v960, %v1077
        %v1094 = vadd.f32 %v961, %v1078
        %v1095 = vadd.f32 %v962, %v1079
        %v1096 = vadd.f32 %v963, %v1080
        %v1097 = vadd.f32 %v964, %v1081
        %v1098 = vadd.f32 %v965, %v1082
        %v1099 = vadd.f32 %v966, %v1083
        %v1100 = vld [vmem:[%s2] sm:$0x1]
        %v1102 = vlaneseq
        %v1103 = vshrl.u32 %v1102, 7
        %v1104 = vsub.s32 0, %v1103
        %v1105 = vrot.slane %v1100, %v1104
        %v1107 = vadd.f32 %v1084, %v1105
        %v1108 = vadd.f32 %v1085, %v1105
        %v1109 = vadd.f32 %v1086, %v1105
        %v1110 = vadd.f32 %v1087, %v1105
        %v1111 = vadd.f32 %v1088, %v1105
        %v1112 = vadd.f32 %v1089, %v1105
        %v1113 = vadd.f32 %v1090, %v1105
        %v1114 = vadd.f32 %v1091, %v1105
        %v1115 = vadd.f32 %v1092, %v1105
        %v1116 = vadd.f32 %v1093, %v1105
        %v1117 = vadd.f32 %v1094, %v1105
        %v1118 = vadd.f32 %v1095, %v1105
        %v1119 = vadd.f32 %v1096, %v1105
        %v1120 = vadd.f32 %v1097, %v1105
        %v1121 = vadd.f32 %v1098, %v1105
        %v1122 = vadd.f32 %v1099, %v1105
        %v1123 = vmax.f32 %v1107, 0.0
        %v1124 = vmax.f32 %v1108, 0.0
        %v1125 = vmax.f32 %v1109, 0.0
        %v1126 = vmax.f32 %v1110, 0.0
        %v1127 = vmax.f32 %v1111, 0.0
        %v1128 = vmax.f32 %v1112, 0.0
        %v1129 = vmax.f32 %v1113, 0.0
        %v1130 = vmax.f32 %v1114, 0.0
        %v1131 = vmax.f32 %v1115, 0.0
        %v1132 = vmax.f32 %v1116, 0.0
        %v1133 = vmax.f32 %v1117, 0.0
        %v1134 = vmax.f32 %v1118, 0.0
        %v1135 = vmax.f32 %v1119, 0.0
        %v1136 = vmax.f32 %v1120, 0.0
        %v1137 = vmax.f32 %v1121, 0.0
        %v1138 = vmax.f32 %v1122, 0.0
        %v1139 = vld [vmem:[%s3] sm:$0x1]
        %v1141 = vlaneseq
        %v1142 = vshrl.u32 %v1141, 7
        %v1143 = vsub.s32 0, %v1142
        %v1144 = vrot.slane %v1139, %v1143
        %v1146 = vmul.f32 %v1123, %v1144
        %v1147 = vmul.f32 %v1124, %v1144
        %v1148 = vmul.f32 %v1125, %v1144
        %v1149 = vmul.f32 %v1126, %v1144
        %v1150 = vmul.f32 %v1127, %v1144
        %v1151 = vmul.f32 %v1128, %v1144
        %v1152 = vmul.f32 %v1129, %v1144
        %v1153 = vmul.f32 %v1130, %v1144
        %v1154 = vmul.f32 %v1131, %v1144
        %v1155 = vmul.f32 %v1132, %v1144
        %v1156 = vmul.f32 %v1133, %v1144
        %v1157 = vmul.f32 %v1134, %v1144
        %v1158 = vmul.f32 %v1135, %v1144
        %v1159 = vmul.f32 %v1136, %v1144
        %v1160 = vmul.f32 %v1137, %v1144
        %v1161 = vmul.f32 %v1138, %v1144
        %v1162 = vld [vmem:[%s4] sm:$0x1]
        %v1164 = vlaneseq
        %v1165 = vshrl.u32 %v1164, 7
        %v1166 = vsub.s32 0, %v1165
        %v1167 = vrot.slane %v1162, %v1166
        %v1169 = vadd.f32 %v1146, %v1167
        %v1170 = vadd.f32 %v1147, %v1167
        %v1171 = vadd.f32 %v1148, %v1167
        %v1172 = vadd.f32 %v1149, %v1167
        %v1173 = vadd.f32 %v1150, %v1167
        %v1174 = vadd.f32 %v1151, %v1167
        %v1175 = vadd.f32 %v1152, %v1167
        %v1176 = vadd.f32 %v1153, %v1167
        %v1177 = vadd.f32 %v1154, %v1167
        %v1178 = vadd.f32 %v1155, %v1167
        %v1179 = vadd.f32 %v1156, %v1167
        %v1180 = vadd.f32 %v1157, %v1167
        %v1181 = vadd.f32 %v1158, %v1167
        %v1182 = vadd.f32 %v1159, %v1167
        %v1183 = vadd.f32 %v1160, %v1167
        %v1184 = vadd.f32 %v1161, %v1167
        %vm1185 = vcmask 523264
        %1186 = vst.msk [vmem:[#allocation4] sm:$0xff] %vm1185, %v1169
        %1187 = vst.msk [vmem:[#allocation4 + $0x8] sm:$0xff] %vm1185, %v1170
        %1188 = vst.msk [vmem:[#allocation4 + $0x10] sm:$0xff] %vm1185, %v1171
        %1189 = vst.msk [vmem:[#allocation4 + $0x18] sm:$0xff] %vm1185, %v1172
        %1190 = vst.msk [vmem:[#allocation4 + $0x20] sm:$0xff] %vm1185, %v1173
        %1191 = vst.msk [vmem:[#allocation4 + $0x28] sm:$0xff] %vm1185, %v1174
        %1192 = vst.msk [vmem:[#allocation4 + $0x30] sm:$0xff] %vm1185, %v1175
        %1193 = vst.msk [vmem:[#allocation4 + $0x38] sm:$0xff] %vm1185, %v1176
        %1194 = vst.msk [vmem:[#allocation4 + $0x40] sm:$0xff] %vm1185, %v1177
        %1195 = vst.msk [vmem:[#allocation4 + $0x48] sm:$0xff] %vm1185, %v1178
        %1196 = vst.msk [vmem:[#allocation4 + $0x50] sm:$0xff] %vm1185, %v1179
        %1197 = vst.msk [vmem:[#allocation4 + $0x58] sm:$0xff] %vm1185, %v1180
        %1198 = vst.msk [vmem:[#allocation4 + $0x60] sm:$0xff] %vm1185, %v1181
        %1199 = vst.msk [vmem:[#allocation4 + $0x68] sm:$0xff] %vm1185, %v1182
        %1200 = vst.msk [vmem:[#allocation4 + $0x70] sm:$0xff] %vm1185, %v1183
        %1201 = vst.msk [vmem:[#allocation4 + $0x78] sm:$0xff] %vm1185, %v1184
        %v1202 = vld [vmem:[#allocation4] ss:$2 sm:$0xff]
        %s1203 = scalar_lea.vmem [#allocation4], 16
        %v1204 = vld [vmem:[%s1203] ss:$2 sm:$0xff]
        %s1205 = scalar_lea.vmem [#allocation4], 32
        %v1206 = vld [vmem:[%s1205] ss:$2 sm:$0xff]
        %s1207 = scalar_lea.vmem [#allocation4], 48
        %v1208 = vld [vmem:[%s1207] ss:$2 sm:$0xff]
        %s1209 = scalar_lea.vmem [#allocation4], 64
        %v1210 = vld [vmem:[%s1209] ss:$2 sm:$0xff]
        %s1211 = scalar_lea.vmem [#allocation4], 80
        %v1212 = vld [vmem:[%s1211] ss:$2 sm:$0xff]
        %s1213 = scalar_lea.vmem [#allocation4], 96
        %v1214 = vld [vmem:[%s1213] ss:$2 sm:$0xff]
        %s1215 = scalar_lea.vmem [#allocation4], 112
        %v1216 = vld [vmem:[%s1215] ss:$2 sm:$0xff]
        %s1217 = scalar_lea.vmem [#allocation4], 1
        %v1218 = vld [vmem:[%s1217] ss:$2 sm:$0xff]
        %s1219 = scalar_lea.vmem [#allocation4], 17
        %v1220 = vld [vmem:[%s1219] ss:$2 sm:$0xff]
        %s1221 = scalar_lea.vmem [#allocation4], 33
        %v1222 = vld [vmem:[%s1221] ss:$2 sm:$0xff]
        %s1223 = scalar_lea.vmem [#allocation4], 49
        %v1224 = vld [vmem:[%s1223] ss:$2 sm:$0xff]
        %s1225 = scalar_lea.vmem [#allocation4], 65
        %v1226 = vld [vmem:[%s1225] ss:$2 sm:$0xff]
        %s1227 = scalar_lea.vmem [#allocation4], 81
        %v1228 = vld [vmem:[%s1227] ss:$2 sm:$0xff]
        %s1229 = scalar_lea.vmem [#allocation4], 97
        %v1230 = vld [vmem:[%s1229] ss:$2 sm:$0xff]
        %s1231 = scalar_lea.vmem [#allocation4], 113
        %v1232 = vld [vmem:[%s1231] ss:$2 sm:$0xff]
        %v1233 = vmax.f32 %v1202, %v1218
        %v1234 = vmax.f32 %v1204, %v1220
        %v1235 = vmax.f32 %v1206, %v1222
        %v1236 = vmax.f32 %v1208, %v1224
        %v1237 = vmax.f32 %v1210, %v1226
        %v1238 = vmax.f32 %v1212, %v1228
        %v1239 = vmax.f32 %v1214, %v1230
        %v1240 = vmax.f32 %v1216, %v1232
        %vm1241 = vcmask 517120
        %1242 = vst.msk [vmem:[#allocation3] sm:$0x3] %vm1241, 0.0
        %1243 = vst.msk [vmem:[#allocation3 + $0x2] sm:$0xff] %vm1185, %v1233
        %1244 = vst.msk [vmem:[#allocation3 + $0xa] sm:$0xff] %vm1185, %v1234
        %1245 = vst.msk [vmem:[#allocation3 + $0x12] sm:$0xff] %vm1185, %v1235
        %1246 = vst.msk [vmem:[#allocation3 + $0x1a] sm:$0xff] %vm1185, %v1236
        %1247 = vst.msk [vmem:[#allocation3 + $0x22] sm:$0xff] %vm1185, %v1237
        %1248 = vst.msk [vmem:[#allocation3 + $0x2a] sm:$0xff] %vm1185, %v1238
        %1249 = vst.msk [vmem:[#allocation3 + $0x32] sm:$0xff] %vm1185, %v1239
        %1250 = vst.msk [vmem:[#allocation3 + $0x3a] sm:$0xff] %vm1185, %v1240
        %1251 = vst.msk [vmem:[#allocation3 + $0x42] sm:$0x3] %vm1241, 0.0
        %v1252 = vld [vmem:[#allocation3] sm:$0xff]
        %v1253 = vld [vmem:[#allocation3 + $0x8] sm:$0xff]
        %v1254 = vld [vmem:[#allocation3 + $0x10] sm:$0xff]
        %v1255 = vld [vmem:[#allocation3 + $0x18] sm:$0xff]
        %v1256 = vld [vmem:[#allocation3 + $0x20] sm:$0xff]
        %v1257 = vld [vmem:[#allocation3 + $0x28] sm:$0xff]
        %v1258 = vld [vmem:[#allocation3 + $0x30] sm:$0xff]
        %v1259 = vld [vmem:[#allocation3 + $0x38] sm:$0xff]
        %v1260 = vld [vmem:[#allocation5] sm:$0xff]
        %v1261 = vld [vmem:[#allocation5 + $0x8] sm:$0xff]
        %v1262 = vld [vmem:[#allocation5 + $0x10] sm:$0xff]
        %v1263 = vld [vmem:[#allocation5 + $0x18] sm:$0xff]
        %v1264 = vld [vmem:[#allocation5 + $0x20] sm:$0xff]
        %v1265 = vld [vmem:[#allocation5 + $0x28] sm:$0xff]
        %v1266 = vld [vmem:[#allocation5 + $0x30] sm:$0xff]
        %v1267 = vld [vmem:[#allocation5 + $0x38] sm:$0xff]
        %v1268 = vld [vmem:[#allocation3 + $0x1] sm:$0xff]
        %v1269 = vld [vmem:[#allocation3 + $0x9] sm:$0xff]
        %v1270 = vld [vmem:[#allocation3 + $0x11] sm:$0xff]
        %v1271 = vld [vmem:[#allocation3 + $0x19] sm:$0xff]
        %v1272 = vld [vmem:[#allocation3 + $0x21] sm:$0xff]
        %v1273 = vld [vmem:[#allocation3 + $0x29] sm:$0xff]
        %v1274 = vld [vmem:[#allocation3 + $0x31] sm:$0xff]
        %v1275 = vld [vmem:[#allocation3 + $0x39] sm:$0xff]
        %s1276 = scalar_lea.vmem [#allocation5], 64
        %v1277 = vld [vmem:[%s1276] sm:$0xff]
        %v1278 = vld [vmem:[%s1276 + $0x8] sm:$0xff]
        %v1279 = vld [vmem:[%s1276 + $0x10] sm:$0xff]
        %v1280 = vld [vmem:[%s1276 + $0x18] sm:$0xff]
        %v1281 = vld [vmem:[%s1276 + $0x20] sm:$0xff]
        %v1282 = vld [vmem:[%s1276 + $0x28] sm:$0xff]
        %v1283 = vld [vmem:[%s1276 + $0x30] sm:$0xff]
        %v1284 = vld [vmem:[%s1276 + $0x38] sm:$0xff]
        %v1286 = vsel %vm1185, %v1268, 0
        %v1289 = vsel %vm1185, %v1269, 0
        %v1292 = vsel %vm1185, %v1270, 0
        %v1295 = vsel %vm1185, %v1271, 0
        %v1298 = vsel %vm1185, %v1272, 0
        %v1301 = vsel %vm1185, %v1273, 0
        %v1304 = vsel %vm1185, %v1274, 0
        %v1307 = vsel %vm1185, %v1275, 0
        %1309 = vmatprep.subr.mxu0 0.0
        %1310 = vmatpush1.msra.mxu0 %v1277
        %1311 = vmatprep.subr.mxu0 0.0
        %1312 = vmatpush1.msra.mxu0 %v1278
        %1313 = vmatprep.subr.mxu0 0.0
        %1314 = vmatpush1.msra.mxu0 %v1279
        %1315 = vmatprep.subr.mxu0 0.0
        %1316 = vmatpush1.msra.mxu0 %v1280
        %1317 = vmatprep.subr.mxu0 0.0
        %1318 = vmatpush1.msra.mxu0 %v1281
        %1319 = vmatprep.subr.mxu0 0.0
        %1320 = vmatpush1.msra.mxu0 %v1282
        %1321 = vmatprep.subr.mxu0 0.0
        %1322 = vmatpush1.msra.mxu0 %v1283
        %1323 = vmatprep.subr.mxu0 0.0
        %1324 = vmatpush1.msra.mxu0 %v1284
        %1325 = vmatprep.subr.mxu0 0.0
        %1326 = vmatpush1.msra.mxu0 0.0
        %1327 = vmatprep.subr.mxu0 0.0
        %1328 = vmatpush1.msra.mxu0 0.0
        %1329 = vmatprep.subr.mxu0 0.0
        %1330 = vmatpush1.msra.mxu0 0.0
        %1331 = vmatprep.subr.mxu0 0.0
        %1332 = vmatpush1.msra.mxu0 0.0
        %1333 = vmatprep.subr.mxu0 0.0
        %1334 = vmatpush1.msra.mxu0 0.0
        %1335 = vmatprep.subr.mxu0 0.0
        %1336 = vmatpush1.msra.mxu0 0.0
        %1337 = vmatprep.subr.mxu0 0.0
        %1338 = vmatpush1.msra.mxu0 0.0
        %1339 = vmatprep.subr.mxu0 0.0
        %1340 = vmatpush1.msra.mxu0 0.0
        %1341 = vmatprep.subr.mxu0 0.0
        %1342 = vmatpush1.msra.mxu0 0.0
        %1343 = vmatprep.subr.mxu0 0.0
        %1344 = vmatpush1.msra.mxu0 0.0
        %1345 = vmatprep.subr.mxu0 0.0
        %1346 = vmatpush1.msra.mxu0 0.0
        %1347 = vmatprep.subr.mxu0 0.0
        %1348 = vmatpush1.msra.mxu0 0.0
        %1349 = vmatprep.subr.mxu0 0.0
        %1350 = vmatpush1.msra.mxu0 0.0
        %1351 = vmatprep.subr.mxu0 0.0
        %1352 = vmatpush1.msra.mxu0 0.0
        %1353 = vmatprep.subr.mxu0 0.0
        %1354 = vmatpush1.msra.mxu0 0.0
        %1355 = vmatprep.subr.mxu0 0.0
        %1356 = vmatpush1.msra.mxu0 0.0
        %1357 = vmatprep.subr.mxu0 0.0
        %1358 = vmatpush1.msra.mxu0 0.0
        %1359 = vmatprep.subr.mxu0 0.0
        %1360 = vmatpush1.msra.mxu0 0.0
        %1361 = vmatprep.subr.mxu0 0.0
        %1362 = vmatpush1.msra.mxu0 0.0
        %1363 = vmatprep.subr.mxu0 0.0
        %1364 = vmatpush1.msra.mxu0 0.0
        %1365 = vmatprep.subr.mxu0 0.0
        %1366 = vmatpush1.msra.mxu0 0.0
        %1367 = vmatprep.subr.mxu0 0.0
        %1368 = vmatpush1.msra.mxu0 0.0
        %1369 = vmatprep.subr.mxu0 0.0
        %1370 = vmatpush1.msra.mxu0 0.0
        %1371 = vmatprep.subr.mxu0 0.0
        %1372 = vmatpush1.msra.mxu0 0.0
        %1373 = vmatprep.mubr.f32.mxu0 0.0
        %1374 = vmatmul.mubr.f32.gmra.mrb[0].mxu0 %v1286
        %v1375 = vpop.f32.mrb[0].mxu0
        %v1376 = vadd.f32 0.0, %v1375
        %v1377 = vpop.f32.mrb[0].mxu0
        %1378 = vmatprep.mubr.f32.mxu0 0.0
        %1379 = vmatmul.mubr.f32.gmra.mrb[0].mxu0 %v1289
        %v1380 = vpop.f32.mrb[0].mxu0
        %v1381 = vadd.f32 0.0, %v1380
        %v1382 = vpop.f32.mrb[0].mxu0
        %1383 = vmatprep.mubr.f32.mxu0 0.0
        %1384 = vmatmul.mubr.f32.gmra.mrb[0].mxu0 %v1292
        %v1385 = vpop.f32.mrb[0].mxu0
        %v1386 = vadd.f32 0.0, %v1385
        %v1387 = vpop.f32.mrb[0].mxu0
        %1388 = vmatprep.mubr.f32.mxu0 0.0
        %1389 = vmatmul.mubr.f32.gmra.mrb[0].mxu0 %v1295
        %v1390 = vpop.f32.mrb[0].mxu0
        %v1391 = vadd.f32 0.0, %v1390
        %v1392 = vpop.f32.mrb[0].mxu0
        %1393 = vmatprep.mubr.f32.mxu0 0.0
        %1394 = vmatmul.mubr.f32.gmra.mrb[0].mxu0 %v1298
        %v1395 = vpop.f32.mrb[0].mxu0
        %v1396 = vadd.f32 0.0, %v1395
        %v1397 = vpop.f32.mrb[0].mxu0
        %1398 = vmatprep.mubr.f32.mxu0 0.0
        %1399 = vmatmul.mubr.f32.gmra.mrb[0].mxu0 %v1301
        %v1400 = vpop.f32.mrb[0].mxu0
        %v1401 = vadd.f32 0.0, %v1400
        %v1402 = vpop.f32.mrb[0].mxu0
        %1403 = vmatprep.mubr.f32.mxu0 0.0
        %1404 = vmatmul.mubr.f32.gmra.mrb[0].mxu0 %v1304
        %v1405 = vpop.f32.mrb[0].mxu0
        %v1406 = vadd.f32 0.0, %v1405
        %v1407 = vpop.f32.mrb[0].mxu0
        %1408 = vmatprep.mubr.f32.mxu0 0.0
        %1409 = vmatmul.mubr.f32.gmra.mrb[0].mxu0 %v1307
        %v1410 = vpop.f32.mrb[0].mxu0
        %v1411 = vadd.f32 0.0, %v1410
        %v1412 = vpop.f32.mrb[0].mxu0
        %1413 = vdwg.mxu0
        %v1415 = vsel %vm1185, %v1252, 0
        %v1418 = vsel %vm1185, %v1253, 0
        %v1421 = vsel %vm1185, %v1254, 0
        %v1424 = vsel %vm1185, %v1255, 0
        %v1427 = vsel %vm1185, %v1256, 0
        %v1430 = vsel %vm1185, %v1257, 0
        %v1433 = vsel %vm1185, %v1258, 0
        %v1436 = vsel %vm1185, %v1259, 0
        %1438 = vmatprep.subr.mxu0 0.0
        %1439 = vmatpush1.msra.mxu0 %v1260
        %1440 = vmatprep.subr.mxu0 0.0
        %1441 = vmatpush1.msra.mxu0 %v1261
        %1442 = vmatprep.subr.mxu0 0.0
        %1443 = vmatpush1.msra.mxu0 %v1262
        %1444 = vmatprep.subr.mxu0 0.0
        %1445 = vmatpush1.msra.mxu0 %v1263
        %1446 = vmatprep.subr.mxu0 0.0
        %1447 = vmatpush1.msra.mxu0 %v1264
        %1448 = vmatprep.subr.mxu0 0.0
        %1449 = vmatpush1.msra.mxu0 %v1265
        %1450 = vmatprep.subr.mxu0 0.0
        %1451 = vmatpush1.msra.mxu0 %v1266
        %1452 = vmatprep.subr.mxu0 0.0
        %1453 = vmatpush1.msra.mxu0 %v1267
        %1454 = vmatprep.subr.mxu0 0.0
        %1455 = vmatpush1.msra.mxu0 0.0
        %1456 = vmatprep.subr.mxu0 0.0
        %1457 = vmatpush1.msra.mxu0 0.0
        %1458 = vmatprep.subr.mxu0 0.0
        %1459 = vmatpush1.msra.mxu0 0.0
        %1460 = vmatprep.subr.mxu0 0.0
        %1461 = vmatpush1.msra.mxu0 0.0
        %1462 = vmatprep.subr.mxu0 0.0
        %1463 = vmatpush1.msra.mxu0 0.0
        %1464 = vmatprep.subr.mxu0 0.0
        %1465 = vmatpush1.msra.mxu0 0.0
        %1466 = vmatprep.subr.mxu0 0.0
        %1467 = vmatpush1.msra.mxu0 0.0
        %1468 = vmatprep.subr.mxu0 0.0
        %1469 = vmatpush1.msra.mxu0 0.0
        %1470 = vmatprep.subr.mxu0 0.0
        %1471 = vmatpush1.msra.mxu0 0.0
        %1472 = vmatprep.subr.mxu0 0.0
        %1473 = vmatpush1.msra.mxu0 0.0
        %1474 = vmatprep.subr.mxu0 0.0
        %1475 = vmatpush1.msra.mxu0 0.0
        %1476 = vmatprep.subr.mxu0 0.0
        %1477 = vmatpush1.msra.mxu0 0.0
        %1478 = vmatprep.subr.mxu0 0.0
        %1479 = vmatpush1.msra.mxu0 0.0
        %1480 = vmatprep.subr.mxu0 0.0
        %1481 = vmatpush1.msra.mxu0 0.0
        %1482 = vmatprep.subr.mxu0 0.0
        %1483 = vmatpush1.msra.mxu0 0.0
        %1484 = vmatprep.subr.mxu0 0.0
        %1485 = vmatpush1.msra.mxu0 0.0
        %1486 = vmatprep.subr.mxu0 0.0
        %1487 = vmatpush1.msra.mxu0 0.0
        %1488 = vmatprep.subr.mxu0 0.0
        %1489 = vmatpush1.msra.mxu0 0.0
        %1490 = vmatprep.subr.mxu0 0.0
        %1491 = vmatpush1.msra.mxu0 0.0
        %1492 = vmatprep.subr.mxu0 0.0
        %1493 = vmatpush1.msra.mxu0 0.0
        %1494 = vmatprep.subr.mxu0 0.0
        %1495 = vmatpush1.msra.mxu0 0.0
        %1496 = vmatprep.subr.mxu0 0.0
        %1497 = vmatpush1.msra.mxu0 0.0
        %1498 = vmatprep.subr.mxu0 0.0
        %1499 = vmatpush1.msra.mxu0 0.0
        %1500 = vmatprep.subr.mxu0 0.0
        %1501 = vmatpush1.msra.mxu0 0.0
        %1502 = vmatprep.mubr.f32.mxu0 0.0
        %1503 = vmatmul.mubr.f32.gmra.mrb[0].mxu0 %v1415
        %v1504 = vpop.f32.mrb[0].mxu0
        %v1505 = vadd.f32 %v1376, %v1504
        %v1506 = vpop.f32.mrb[0].mxu0
        %1507 = vmatprep.mubr.f32.mxu0 0.0
        %1508 = vmatmul.mubr.f32.gmra.mrb[0].mxu0 %v1418
        %v1509 = vpop.f32.mrb[0].mxu0
        %v1510 = vadd.f32 %v1381, %v1509
        %v1511 = vpop.f32.mrb[0].mxu0
        %1512 = vmatprep.mubr.f32.mxu0 0.0
        %1513 = vmatmul.mubr.f32.gmra.mrb[0].mxu0 %v1421
        %v1514 = vpop.f32.mrb[0].mxu0
        %v1515 = vadd.f32 %v1386, %v1514
        %v1516 = vpop.f32.mrb[0].mxu0
        %1517 = vmatprep.mubr.f32.mxu0 0.0
        %1518 = vmatmul.mubr.f32.gmra.mrb[0].mxu0 %v1424
        %v1519 = vpop.f32.mrb[0].mxu0
        %v1520 = vadd.f32 %v1391, %v1519
        %v1521 = vpop.f32.mrb[0].mxu0
        %1522 = vmatprep.mubr.f32.mxu0 0.0
        %1523 = vmatmul.mubr.f32.gmra.mrb[0].mxu0 %v1427
        %v1524 = vpop.f32.mrb[0].mxu0
        %v1525 = vadd.f32 %v1396, %v1524
        %v1526 = vpop.f32.mrb[0].mxu0
        %1527 = vmatprep.mubr.f32.mxu0 0.0
        %1528 = vmatmul.mubr.f32.gmra.mrb[0].mxu0 %v1430
        %v1529 = vpop.f32.mrb[0].mxu0
        %v1530 = vadd.f32 %v1401, %v1529
        %v1531 = vpop.f32.mrb[0].mxu0
        %1532 = vmatprep.mubr.f32.mxu0 0.0
        %1533 = vmatmul.mubr.f32.gmra.mrb[0].mxu0 %v1433
        %v1534 = vpop.f32.mrb[0].mxu0
        %v1535 = vadd.f32 %v1406, %v1534
        %v1536 = vpop.f32.mrb[0].mxu0
        %1537 = vmatprep.mubr.f32.mxu0 0.0
        %1538 = vmatmul.mubr.f32.gmra.mrb[0].mxu0 %v1436
        %v1539 = vpop.f32.mrb[0].mxu0
        %v1540 = vadd.f32 %v1411, %v1539
        %v1541 = vpop.f32.mrb[0].mxu0
        %1542 = vdwg.mxu0
        %v1543 = vld [vmem:[#allocation3 + $0x2] sm:$0xff]
        %v1544 = vld [vmem:[#allocation3 + $0xa] sm:$0xff]
        %v1545 = vld [vmem:[#allocation3 + $0x12] sm:$0xff]
        %v1546 = vld [vmem:[#allocation3 + $0x1a] sm:$0xff]
        %v1547 = vld [vmem:[#allocation3 + $0x22] sm:$0xff]
        %v1548 = vld [vmem:[#allocation3 + $0x2a] sm:$0xff]
        %v1549 = vld [vmem:[#allocation3 + $0x32] sm:$0xff]
        %v1550 = vld [vmem:[#allocation3 + $0x3a] sm:$0xff]
        %s1551 = scalar_lea.vmem [#allocation5], 128
        %v1552 = vld [vmem:[%s1551] sm:$0xff]
        %v1553 = vld [vmem:[%s1551 + $0x8] sm:$0xff]
        %v1554 = vld [vmem:[%s1551 + $0x10] sm:$0xff]
        %v1555 = vld [vmem:[%s1551 + $0x18] sm:$0xff]
        %v1556 = vld [vmem:[%s1551 + $0x20] sm:$0xff]
        %v1557 = vld [vmem:[%s1551 + $0x28] sm:$0xff]
        %v1558 = vld [vmem:[%s1551 + $0x30] sm:$0xff]
        %v1559 = vld [vmem:[%s1551 + $0x38] sm:$0xff]
        %v1561 = vsel %vm1185, %v1543, 0
        %v1564 = vsel %vm1185, %v1544, 0
        %v1567 = vsel %vm1185, %v1545, 0
        %v1570 = vsel %vm1185, %v1546, 0
        %v1573 = vsel %vm1185, %v1547, 0
        %v1576 = vsel %vm1185, %v1548, 0
        %v1579 = vsel %vm1185, %v1549, 0
        %v1582 = vsel %vm1185, %v1550, 0
        %1584 = vmatprep.subr.mxu0 0.0
        %1585 = vmatpush1.msra.mxu0 %v1552
        %1586 = vmatprep.subr.mxu0 0.0
        %1587 = vmatpush1.msra.mxu0 %v1553
        %1588 = vmatprep.subr.mxu0 0.0
        %1589 = vmatpush1.msra.mxu0 %v1554
        %1590 = vmatprep.subr.mxu0 0.0
        %1591 = vmatpush1.msra.mxu0 %v1555
        %1592 = vmatprep.subr.mxu0 0.0
        %1593 = vmatpush1.msra.mxu0 %v1556
        %1594 = vmatprep.subr.mxu0 0.0
        %1595 = vmatpush1.msra.mxu0 %v1557
        %1596 = vmatprep.subr.mxu0 0.0
        %1597 = vmatpush1.msra.mxu0 %v1558
        %1598 = vmatprep.subr.mxu0 0.0
        %1599 = vmatpush1.msra.mxu0 %v1559
        %1600 = vmatprep.subr.mxu0 0.0
        %1601 = vmatpush1.msra.mxu0 0.0
        %1602 = vmatprep.subr.mxu0 0.0
        %1603 = vmatpush1.msra.mxu0 0.0
        %1604 = vmatprep.subr.mxu0 0.0
        %1605 = vmatpush1.msra.mxu0 0.0
        %1606 = vmatprep.subr.mxu0 0.0
        %1607 = vmatpush1.msra.mxu0 0.0
        %1608 = vmatprep.subr.mxu0 0.0
        %1609 = vmatpush1.msra.mxu0 0.0
        %1610 = vmatprep.subr.mxu0 0.0
        %1611 = vmatpush1.msra.mxu0 0.0
        %1612 = vmatprep.subr.mxu0 0.0
        %1613 = vmatpush1.msra.mxu0 0.0
        %1614 = vmatprep.subr.mxu0 0.0
        %1615 = vmatpush1.msra.mxu0 0.0
        %1616 = vmatprep.subr.mxu0 0.0
        %1617 = vmatpush1.msra.mxu0 0.0
        %1618 = vmatprep.subr.mxu0 0.0
        %1619 = vmatpush1.msra.mxu0 0.0
        %1620 = vmatprep.subr.mxu0 0.0
        %1621 = vmatpush1.msra.mxu0 0.0
        %1622 = vmatprep.subr.mxu0 0.0
        %1623 = vmatpush1.msra.mxu0 0.0
        %1624 = vmatprep.subr.mxu0 0.0
        %1625 = vmatpush1.msra.mxu0 0.0
        %1626 = vmatprep.subr.mxu0 0.0
        %1627 = vmatpush1.msra.mxu0 0.0
        %1628 = vmatprep.subr.mxu0 0.0
        %1629 = vmatpush1.msra.mxu0 0.0
        %1630 = vmatprep.subr.mxu0 0.0
        %1631 = vmatpush1.msra.mxu0 0.0
        %1632 = vmatprep.subr.mxu0 0.0
        %1633 = vmatpush1.msra.mxu0 0.0
        %1634 = vmatprep.subr.mxu0 0.0
        %1635 = vmatpush1.msra.mxu0 0.0
        %1636 = vmatprep.subr.mxu0 0.0
        %1637 = vmatpush1.msra.mxu0 0.0
        %1638 = vmatprep.subr.mxu0 0.0
        %1639 = vmatpush1.msra.mxu0 0.0
        %1640 = vmatprep.subr.mxu0 0.0
        %1641 = vmatpush1.msra.mxu0 0.0
        %1642 = vmatprep.subr.mxu0 0.0
        %1643 = vmatpush1.msra.mxu0 0.0
        %1644 = vmatprep.subr.mxu0 0.0
        %1645 = vmatpush1.msra.mxu0 0.0
        %1646 = vmatprep.subr.mxu0 0.0
        %1647 = vmatpush1.msra.mxu0 0.0
        %1648 = vmatprep.mubr.f32.mxu0 0.0
        %1649 = vmatmul.mubr.f32.gmra.mrb[0].mxu0 %v1561
        %v1650 = vpop.f32.mrb[0].mxu0
        %v1651 = vadd.f32 0.0, %v1650
        %v1652 = vpop.f32.mrb[0].mxu0
        %1653 = vmatprep.mubr.f32.mxu0 0.0
        %1654 = vmatmul.mubr.f32.gmra.mrb[0].mxu0 %v1564
        %v1655 = vpop.f32.mrb[0].mxu0
        %v1656 = vadd.f32 0.0, %v1655
        %v1657 = vpop.f32.mrb[0].mxu0
        %1658 = vmatprep.mubr.f32.mxu0 0.0
        %1659 = vmatmul.mubr.f32.gmra.mrb[0].mxu0 %v1567
        %v1660 = vpop.f32.mrb[0].mxu0
        %v1661 = vadd.f32 0.0, %v1660
        %v1662 = vpop.f32.mrb[0].mxu0
        %1663 = vmatprep.mubr.f32.mxu0 0.0
        %1664 = vmatmul.mubr.f32.gmra.mrb[0].mxu0 %v1570
        %v1665 = vpop.f32.mrb[0].mxu0
        %v1666 = vadd.f32 0.0, %v1665
        %v1667 = vpop.f32.mrb[0].mxu0
        %1668 = vmatprep.mubr.f32.mxu0 0.0
        %1669 = vmatmul.mubr.f32.gmra.mrb[0].mxu0 %v1573
        %v1670 = vpop.f32.mrb[0].mxu0
        %v1671 = vadd.f32 0.0, %v1670
        %v1672 = vpop.f32.mrb[0].mxu0
        %1673 = vmatprep.mubr.f32.mxu0 0.0
        %1674 = vmatmul.mubr.f32.gmra.mrb[0].mxu0 %v1576
        %v1675 = vpop.f32.mrb[0].mxu0
        %v1676 = vadd.f32 0.0, %v1675
        %v1677 = vpop.f32.mrb[0].mxu0
        %1678 = vmatprep.mubr.f32.mxu0 0.0
        %1679 = vmatmul.mubr.f32.gmra.mrb[0].mxu0 %v1579
        %v1680 = vpop.f32.mrb[0].mxu0
        %v1681 = vadd.f32 0.0, %v1680
        %v1682 = vpop.f32.mrb[0].mxu0
        %1683 = vmatprep.mubr.f32.mxu0 0.0
        %1684 = vmatmul.mubr.f32.gmra.mrb[0].mxu0 %v1582
        %v1685 = vpop.f32.mrb[0].mxu0
        %v1686 = vadd.f32 0.0, %v1685
        %v1687 = vpop.f32.mrb[0].mxu0
        %1688 = vdwg.mxu0
        %v1689 = vadd.f32 %v1505, %v1651
        %v1690 = vadd.f32 %v1510, %v1656
        %v1691 = vadd.f32 %v1515, %v1661
        %v1692 = vadd.f32 %v1520, %v1666
        %v1693 = vadd.f32 %v1525, %v1671
        %v1694 = vadd.f32 %v1530, %v1676
        %v1695 = vadd.f32 %v1535, %v1681
        %v1696 = vadd.f32 %v1540, %v1686
        %v1697 = vld [vmem:[#allocation3 + $0x3] sm:$0xff]
        %v1698 = vld [vmem:[#allocation3 + $0xb] sm:$0xff]
        %v1699 = vld [vmem:[#allocation3 + $0x13] sm:$0xff]
        %v1700 = vld [vmem:[#allocation3 + $0x1b] sm:$0xff]
        %v1701 = vld [vmem:[#allocation3 + $0x23] sm:$0xff]
        %v1702 = vld [vmem:[#allocation3 + $0x2b] sm:$0xff]
        %v1703 = vld [vmem:[#allocation3 + $0x33] sm:$0xff]
        %v1704 = vld [vmem:[#allocation3 + $0x3b] sm:$0xff]
        %s1705 = scalar_lea.vmem [#allocation5], 192
        %v1706 = vld [vmem:[%s1705] sm:$0xff]
        %v1707 = vld [vmem:[%s1705 + $0x8] sm:$0xff]
        %v1708 = vld [vmem:[%s1705 + $0x10] sm:$0xff]
        %v1709 = vld [vmem:[%s1705 + $0x18] sm:$0xff]
        %v1710 = vld [vmem:[%s1705 + $0x20] sm:$0xff]
        %v1711 = vld [vmem:[%s1705 + $0x28] sm:$0xff]
        %v1712 = vld [vmem:[%s1705 + $0x30] sm:$0xff]
        %v1713 = vld [vmem:[%s1705 + $0x38] sm:$0xff]
        %v1715 = vsel %vm1185, %v1697, 0
        %v1718 = vsel %vm1185, %v1698, 0
        %v1721 = vsel %vm1185, %v1699, 0
        %v1724 = vsel %vm1185, %v1700, 0
        %v1727 = vsel %vm1185, %v1701, 0
        %v1730 = vsel %vm1185, %v1702, 0
        %v1733 = vsel %vm1185, %v1703, 0
        %v1736 = vsel %vm1185, %v1704, 0
        %1738 = vmatprep.subr.mxu0 0.0
        %1739 = vmatpush1.msra.mxu0 %v1706
        %1740 = vmatprep.subr.mxu0 0.0
        %1741 = vmatpush1.msra.mxu0 %v1707
        %1742 = vmatprep.subr.mxu0 0.0
        %1743 = vmatpush1.msra.mxu0 %v1708
        %1744 = vmatprep.subr.mxu0 0.0
        %1745 = vmatpush1.msra.mxu0 %v1709
        %1746 = vmatprep.subr.mxu0 0.0
        %1747 = vmatpush1.msra.mxu0 %v1710
        %1748 = vmatprep.subr.mxu0 0.0
        %1749 = vmatpush1.msra.mxu0 %v1711
        %1750 = vmatprep.subr.mxu0 0.0
        %1751 = vmatpush1.msra.mxu0 %v1712
        %1752 = vmatprep.subr.mxu0 0.0
        %1753 = vmatpush1.msra.mxu0 %v1713
        %1754 = vmatprep.subr.mxu0 0.0
        %1755 = vmatpush1.msra.mxu0 0.0
        %1756 = vmatprep.subr.mxu0 0.0
        %1757 = vmatpush1.msra.mxu0 0.0
        %1758 = vmatprep.subr.mxu0 0.0
        %1759 = vmatpush1.msra.mxu0 0.0
        %1760 = vmatprep.subr.mxu0 0.0
        %1761 = vmatpush1.msra.mxu0 0.0
        %1762 = vmatprep.subr.mxu0 0.0
        %1763 = vmatpush1.msra.mxu0 0.0
        %1764 = vmatprep.subr.mxu0 0.0
        %1765 = vmatpush1.msra.mxu0 0.0
        %1766 = vmatprep.subr.mxu0 0.0
        %1767 = vmatpush1.msra.mxu0 0.0
        %1768 = vmatprep.subr.mxu0 0.0
        %1769 = vmatpush1.msra.mxu0 0.0
        %1770 = vmatprep.subr.mxu0 0.0
        %1771 = vmatpush1.msra.mxu0 0.0
        %1772 = vmatprep.subr.mxu0 0.0
        %1773 = vmatpush1.msra.mxu0 0.0
        %1774 = vmatprep.subr.mxu0 0.0
        %1775 = vmatpush1.msra.mxu0 0.0
        %1776 = vmatprep.subr.mxu0 0.0
        %1777 = vmatpush1.msra.mxu0 0.0
        %1778 = vmatprep.subr.mxu0 0.0
        %1779 = vmatpush1.msra.mxu0 0.0
        %1780 = vmatprep.subr.mxu0 0.0
        %1781 = vmatpush1.msra.mxu0 0.0
        %1782 = vmatprep.subr.mxu0 0.0
        %1783 = vmatpush1.msra.mxu0 0.0
        %1784 = vmatprep.subr.mxu0 0.0
        %1785 = vmatpush1.msra.mxu0 0.0
        %1786 = vmatprep.subr.mxu0 0.0
        %1787 = vmatpush1.msra.mxu0 0.0
        %1788 = vmatprep.subr.mxu0 0.0
        %1789 = vmatpush1.msra.mxu0 0.0
        %1790 = vmatprep.subr.mxu0 0.0
        %1791 = vmatpush1.msra.mxu0 0.0
        %1792 = vmatprep.subr.mxu0 0.0
        %1793 = vmatpush1.msra.mxu0 0.0
        %1794 = vmatprep.subr.mxu0 0.0
        %1795 = vmatpush1.msra.mxu0 0.0
        %1796 = vmatprep.subr.mxu0 0.0
        %1797 = vmatpush1.msra.mxu0 0.0
        %1798 = vmatprep.subr.mxu0 0.0
        %1799 = vmatpush1.msra.mxu0 0.0
        %1800 = vmatprep.subr.mxu0 0.0
        %1801 = vmatpush1.msra.mxu0 0.0
        %1802 = vmatprep.mubr.f32.mxu0 0.0
        %1803 = vmatmul.mubr.f32.gmra.mrb[0].mxu0 %v1715
        %v1804 = vpop.f32.mrb[0].mxu0
        %v1805 = vadd.f32 0.0, %v1804
        %v1806 = vpop.f32.mrb[0].mxu0
        %1807 = vmatprep.mubr.f32.mxu0 0.0
        %1808 = vmatmul.mubr.f32.gmra.mrb[0].mxu0 %v1718
        %v1809 = vpop.f32.mrb[0].mxu0
        %v1810 = vadd.f32 0.0, %v1809
        %v1811 = vpop.f32.mrb[0].mxu0
        %1812 = vmatprep.mubr.f32.mxu0 0.0
        %1813 = vmatmul.mubr.f32.gmra.mrb[0].mxu0 %v1721
        %v1814 = vpop.f32.mrb[0].mxu0
        %v1815 = vadd.f32 0.0, %v1814
        %v1816 = vpop.f32.mrb[0].mxu0
        %1817 = vmatprep.mubr.f32.mxu0 0.0
        %1818 = vmatmul.mubr.f32.gmra.mrb[0].mxu0 %v1724
        %v1819 = vpop.f32.mrb[0].mxu0
        %v1820 = vadd.f32 0.0, %v1819
        %v1821 = vpop.f32.mrb[0].mxu0
        %1822 = vmatprep.mubr.f32.mxu0 0.0
        %1823 = vmatmul.mubr.f32.gmra.mrb[0].mxu0 %v1727
        %v1824 = vpop.f32.mrb[0].mxu0
        %v1825 = vadd.f32 0.0, %v1824
        %v1826 = vpop.f32.mrb[0].mxu0
        %1827 = vmatprep.mubr.f32.mxu0 0.0
        %1828 = vmatmul.mubr.f32.gmra.mrb[0].mxu0 %v1730
        %v1829 = vpop.f32.mrb[0].mxu0
        %v1830 = vadd.f32 0.0, %v1829
        %v1831 = vpop.f32.mrb[0].mxu0
        %1832 = vmatprep.mubr.f32.mxu0 0.0
        %1833 = vmatmul.mubr.f32.gmra.mrb[0].mxu0 %v1733
        %v1834 = vpop.f32.mrb[0].mxu0
        %v1835 = vadd.f32 0.0, %v1834
        %v1836 = vpop.f32.mrb[0].mxu0
        %1837 = vmatprep.mubr.f32.mxu0 0.0
        %1838 = vmatmul.mubr.f32.gmra.mrb[0].mxu0 %v1736
        %v1839 = vpop.f32.mrb[0].mxu0
        %v1840 = vadd.f32 0.0, %v1839
        %v1841 = vpop.f32.mrb[0].mxu0
        %1842 = vdwg.mxu0
        %v1843 = vadd.f32 %v1689, %v1805
        %v1844 = vadd.f32 %v1690, %v1810
        %v1845 = vadd.f32 %v1691, %v1815
        %v1846 = vadd.f32 %v1692, %v1820
        %v1847 = vadd.f32 %v1693, %v1825
        %v1848 = vadd.f32 %v1694, %v1830
        %v1849 = vadd.f32 %v1695, %v1835
        %v1850 = vadd.f32 %v1696, %v1840
        %v1851 = vld [vmem:[#allocation3 + $0x4] sm:$0xff]
        %v1852 = vld [vmem:[#allocation3 + $0xc] sm:$0xff]
        %v1853 = vld [vmem:[#allocation3 + $0x14] sm:$0xff]
        %v1854 = vld [vmem:[#allocation3 + $0x1c] sm:$0xff]
        %v1855 = vld [vmem:[#allocation3 + $0x24] sm:$0xff]
        %v1856 = vld [vmem:[#allocation3 + $0x2c] sm:$0xff]
        %v1857 = vld [vmem:[#allocation3 + $0x34] sm:$0xff]
        %v1858 = vld [vmem:[#allocation3 + $0x3c] sm:$0xff]
        %s1859 = scalar_lea.vmem [#allocation5], 256
        %v1860 = vld [vmem:[%s1859] sm:$0xff]
        %v1861 = vld [vmem:[%s1859 + $0x8] sm:$0xff]
        %v1862 = vld [vmem:[%s1859 + $0x10] sm:$0xff]
        %v1863 = vld [vmem:[%s1859 + $0x18] sm:$0xff]
        %v1864 = vld [vmem:[%s1859 + $0x20] sm:$0xff]
        %v1865 = vld [vmem:[%s1859 + $0x28] sm:$0xff]
        %v1866 = vld [vmem:[%s1859 + $0x30] sm:$0xff]
        %v1867 = vld [vmem:[%s1859 + $0x38] sm:$0xff]
        %v1869 = vsel %vm1185, %v1851, 0
        %v1872 = vsel %vm1185, %v1852, 0
        %v1875 = vsel %vm1185, %v1853, 0
        %v1878 = vsel %vm1185, %v1854, 0
        %v1881 = vsel %vm1185, %v1855, 0
        %v1884 = vsel %vm1185, %v1856, 0
        %v1887 = vsel %vm1185, %v1857, 0
        %v1890 = vsel %vm1185, %v1858, 0
        %1892 = vmatprep.subr.mxu0 0.0
        %1893 = vmatpush1.msra.mxu0 %v1860
        %1894 = vmatprep.subr.mxu0 0.0
        %1895 = vmatpush1.msra.mxu0 %v1861
        %1896 = vmatprep.subr.mxu0 0.0
        %1897 = vmatpush1.msra.mxu0 %v1862
        %1898 = vmatprep.subr.mxu0 0.0
        %1899 = vmatpush1.msra.mxu0 %v1863
        %1900 = vmatprep.subr.mxu0 0.0
        %1901 = vmatpush1.msra.mxu0 %v1864
        %1902 = vmatprep.subr.mxu0 0.0
        %1903 = vmatpush1.msra.mxu0 %v1865
        %1904 = vmatprep.subr.mxu0 0.0
        %1905 = vmatpush1.msra.mxu0 %v1866
        %1906 = vmatprep.subr.mxu0 0.0
        %1907 = vmatpush1.msra.mxu0 %v1867
        %1908 = vmatprep.subr.mxu0 0.0
        %1909 = vmatpush1.msra.mxu0 0.0
        %1910 = vmatprep.subr.mxu0 0.0
        %1911 = vmatpush1.msra.mxu0 0.0
        %1912 = vmatprep.subr.mxu0 0.0
        %1913 = vmatpush1.msra.mxu0 0.0
        %1914 = vmatprep.subr.mxu0 0.0
        %1915 = vmatpush1.msra.mxu0 0.0
        %1916 = vmatprep.subr.mxu0 0.0
        %1917 = vmatpush1.msra.mxu0 0.0
        %1918 = vmatprep.subr.mxu0 0.0
        %1919 = vmatpush1.msra.mxu0 0.0
        %1920 = vmatprep.subr.mxu0 0.0
        %1921 = vmatpush1.msra.mxu0 0.0
        %1922 = vmatprep.subr.mxu0 0.0
        %1923 = vmatpush1.msra.mxu0 0.0
        %1924 = vmatprep.subr.mxu0 0.0
        %1925 = vmatpush1.msra.mxu0 0.0
        %1926 = vmatprep.subr.mxu0 0.0
        %1927 = vmatpush1.msra.mxu0 0.0
        %1928 = vmatprep.subr.mxu0 0.0
        %1929 = vmatpush1.msra.mxu0 0.0
        %1930 = vmatprep.subr.mxu0 0.0
        %1931 = vmatpush1.msra.mxu0 0.0
        %1932 = vmatprep.subr.mxu0 0.0
        %1933 = vmatpush1.msra.mxu0 0.0
        %1934 = vmatprep.subr.mxu0 0.0
        %1935 = vmatpush1.msra.mxu0 0.0
        %1936 = vmatprep.subr.mxu0 0.0
        %1937 = vmatpush1.msra.mxu0 0.0
        %1938 = vmatprep.subr.mxu0 0.0
        %1939 = vmatpush1.msra.mxu0 0.0
        %1940 = vmatprep.subr.mxu0 0.0
        %1941 = vmatpush1.msra.mxu0 0.0
        %1942 = vmatprep.subr.mxu0 0.0
        %1943 = vmatpush1.msra.mxu0 0.0
        %1944 = vmatprep.subr.mxu0 0.0
        %1945 = vmatpush1.msra.mxu0 0.0
        %1946 = vmatprep.subr.mxu0 0.0
        %1947 = vmatpush1.msra.mxu0 0.0
        %1948 = vmatprep.subr.mxu0 0.0
        %1949 = vmatpush1.msra.mxu0 0.0
        %1950 = vmatprep.subr.mxu0 0.0
        %1951 = vmatpush1.msra.mxu0 0.0
        %1952 = vmatprep.subr.mxu0 0.0
        %1953 = vmatpush1.msra.mxu0 0.0
        %1954 = vmatprep.subr.mxu0 0.0
        %1955 = vmatpush1.msra.mxu0 0.0
        %1956 = vmatprep.mubr.f32.mxu0 0.0
        %1957 = vmatmul.mubr.f32.gmra.mrb[0].mxu0 %v1869
        %v1958 = vpop.f32.mrb[0].mxu0
        %v1959 = vadd.f32 0.0, %v1958
        %v1960 = vpop.f32.mrb[0].mxu0
        %1961 = vmatprep.mubr.f32.mxu0 0.0
        %1962 = vmatmul.mubr.f32.gmra.mrb[0].mxu0 %v1872
        %v1963 = vpop.f32.mrb[0].mxu0
        %v1964 = vadd.f32 0.0, %v1963
        %v1965 = vpop.f32.mrb[0].mxu0
        %1966 = vmatprep.mubr.f32.mxu0 0.0
        %1967 = vmatmul.mubr.f32.gmra.mrb[0].mxu0 %v1875
        %v1968 = vpop.f32.mrb[0].mxu0
        %v1969 = vadd.f32 0.0, %v1968
        %v1970 = vpop.f32.mrb[0].mxu0
        %1971 = vmatprep.mubr.f32.mxu0 0.0
        %1972 = vmatmul.mubr.f32.gmra.mrb[0].mxu0 %v1878
        %v1973 = vpop.f32.mrb[0].mxu0
        %v1974 = vadd.f32 0.0, %v1973
        %v1975 = vpop.f32.mrb[0].mxu0
        %1976 = vmatprep.mubr.f32.mxu0 0.0
        %1977 = vmatmul.mubr.f32.gmra.mrb[0].mxu0 %v1881
        %v1978 = vpop.f32.mrb[0].mxu0
        %v1979 = vadd.f32 0.0, %v1978
        %v1980 = vpop.f32.mrb[0].mxu0
        %1981 = vmatprep.mubr.f32.mxu0 0.0
        %1982 = vmatmul.mubr.f32.gmra.mrb[0].mxu0 %v1884
        %v1983 = vpop.f32.mrb[0].mxu0
        %v1984 = vadd.f32 0.0, %v1983
        %v1985 = vpop.f32.mrb[0].mxu0
        %1986 = vmatprep.mubr.f32.mxu0 0.0
        %1987 = vmatmul.mubr.f32.gmra.mrb[0].mxu0 %v1887
        %v1988 = vpop.f32.mrb[0].mxu0
        %v1989 = vadd.f32 0.0, %v1988
        %v1990 = vpop.f32.mrb[0].mxu0
        %1991 = vmatprep.mubr.f32.mxu0 0.0
        %1992 = vmatmul.mubr.f32.gmra.mrb[0].mxu0 %v1890
        %v1993 = vpop.f32.mrb[0].mxu0
        %v1994 = vadd.f32 0.0, %v1993
        %v1995 = vpop.f32.mrb[0].mxu0
        %1996 = vdwg.mxu0
        %v1997 = vadd.f32 %v1843, %v1959
        %v1998 = vadd.f32 %v1844, %v1964
        %v1999 = vadd.f32 %v1845, %v1969
        %v2000 = vadd.f32 %v1846, %v1974
        %v2001 = vadd.f32 %v1847, %v1979
        %v2002 = vadd.f32 %v1848, %v1984
        %v2003 = vadd.f32 %v1849, %v1989
        %v2004 = vadd.f32 %v1850, %v1994
        %v2005 = vld [vmem:[%s6] sm:$0x1]
        %v2007 = vlaneseq
        %v2008 = vshrl.u32 %v2007, 7
        %v2009 = vsub.s32 0, %v2008
        %v2010 = vrot.slane %v2005, %v2009
        %v2012 = vadd.f32 %v1997, %v2010
        %v2013 = vadd.f32 %v1998, %v2010
        %v2014 = vadd.f32 %v1999, %v2010
        %v2015 = vadd.f32 %v2000, %v2010
        %v2016 = vadd.f32 %v2001, %v2010
        %v2017 = vadd.f32 %v2002, %v2010
        %v2018 = vadd.f32 %v2003, %v2010
        %v2019 = vadd.f32 %v2004, %v2010
        %v2020 = vmax.f32 %v2012, 0.0
        %v2021 = vmax.f32 %v2013, 0.0
        %v2022 = vmax.f32 %v2014, 0.0
        %v2023 = vmax.f32 %v2015, 0.0
        %v2024 = vmax.f32 %v2016, 0.0
        %v2025 = vmax.f32 %v2017, 0.0
        %v2026 = vmax.f32 %v2018, 0.0
        %v2027 = vmax.f32 %v2019, 0.0
        %v2028 = vld [vmem:[%s7] sm:$0x1]
        %v2030 = vlaneseq
        %v2031 = vshrl.u32 %v2030, 7
        %v2032 = vsub.s32 0, %v2031
        %v2033 = vrot.slane %v2028, %v2032
        %v2035 = vmul.f32 %v2020, %v2033
        %v2036 = vmul.f32 %v2021, %v2033
        %v2037 = vmul.f32 %v2022, %v2033
        %v2038 = vmul.f32 %v2023, %v2033
        %v2039 = vmul.f32 %v2024, %v2033
        %v2040 = vmul.f32 %v2025, %v2033
        %v2041 = vmul.f32 %v2026, %v2033
        %v2042 = vmul.f32 %v2027, %v2033
        %v2043 = vld [vmem:[%s8] sm:$0x1]
        %v2045 = vlaneseq
        %v2046 = vshrl.u32 %v2045, 7
        %v2047 = vsub.s32 0, %v2046
        %v2048 = vrot.slane %v2043, %v2047
        %v2050 = vadd.f32 %v2035, %v2048
        %v2051 = vadd.f32 %v2036, %v2048
        %v2052 = vadd.f32 %v2037, %v2048
        %v2053 = vadd.f32 %v2038, %v2048
        %v2054 = vadd.f32 %v2039, %v2048
        %v2055 = vadd.f32 %v2040, %v2048
        %v2056 = vadd.f32 %v2041, %v2048
        %v2057 = vadd.f32 %v2042, %v2048
        %2058 = vst.msk [vmem:[#allocation4] sm:$0xff] %vm1185, %v2050
        %2059 = vst.msk [vmem:[#allocation4 + $0x8] sm:$0xff] %vm1185, %v2051
        %2060 = vst.msk [vmem:[#allocation4 + $0x10] sm:$0xff] %vm1185, %v2052
        %2061 = vst.msk [vmem:[#allocation4 + $0x18] sm:$0xff] %vm1185, %v2053
        %2062 = vst.msk [vmem:[#allocation4 + $0x20] sm:$0xff] %vm1185, %v2054
        %2063 = vst.msk [vmem:[#allocation4 + $0x28] sm:$0xff] %vm1185, %v2055
        %2064 = vst.msk [vmem:[#allocation4 + $0x30] sm:$0xff] %vm1185, %v2056
        %2065 = vst.msk [vmem:[#allocation4 + $0x38] sm:$0xff] %vm1185, %v2057
        %v2066 = vld [vmem:[#allocation4] ss:$2 sm:$0xff]
        %v2067 = vld [vmem:[%s1203] ss:$2 sm:$0xff]
        %v2068 = vld [vmem:[%s1205] ss:$2 sm:$0xff]
        %v2069 = vld [vmem:[%s1207] ss:$2 sm:$0xff]
        %v2070 = vld [vmem:[%s1217] ss:$2 sm:$0xff]
        %v2071 = vld [vmem:[%s1219] ss:$2 sm:$0xff]
        %v2072 = vld [vmem:[%s1221] ss:$2 sm:$0xff]
        %v2073 = vld [vmem:[%s1223] ss:$2 sm:$0xff]
        %v2074 = vmax.f32 %v2066, %v2070
        %v2075 = vmax.f32 %v2067, %v2071
        %v2076 = vmax.f32 %v2068, %v2072
        %v2077 = vmax.f32 %v2069, %v2073
        %2078 = vst.msk [vmem:[#allocation3 + $0x2] sm:$0xff] %vm1185, %v2074
        %2079 = vst.msk [vmem:[#allocation3 + $0xa] sm:$0xff] %vm1185, %v2075
        %2080 = vst.msk [vmem:[#allocation3 + $0x12] sm:$0xff] %vm1185, %v2076
        %2081 = vst.msk [vmem:[#allocation3 + $0x1a] sm:$0xff] %vm1185, %v2077
        %2082 = vst.msk [vmem:[#allocation3 + $0x22] sm:$0x3] %vm1241, 0.0
        %v2083 = vld [vmem:[#allocation3] sm:$0xff]
        %v2084 = vld [vmem:[#allocation3 + $0x8] sm:$0xff]
        %v2085 = vld [vmem:[#allocation3 + $0x10] sm:$0xff]
        %v2086 = vld [vmem:[#allocation3 + $0x18] sm:$0xff]
        %s2087 = scalar_lea.vmem [#allocation5], 320
        %v2088 = vld [vmem:[%s2087] sm:$0xff]
        %v2089 = vld [vmem:[%s2087 + $0x8] sm:$0xff]
        %v2090 = vld [vmem:[%s2087 + $0x10] sm:$0xff]
        %v2091 = vld [vmem:[%s2087 + $0x18] sm:$0xff]
        %v2092 = vld [vmem:[%s2087 + $0x20] sm:$0xff]
        %v2093 = vld [vmem:[%s2087 + $0x28] sm:$0xff]
        %v2094 = vld [vmem:[%s2087 + $0x30] sm:$0xff]
        %v2095 = vld [vmem:[%s2087 + $0x38] sm:$0xff]
        %v2096 = vld [vmem:[#allocation3 + $0x1] sm:$0xff]
        %v2097 = vld [vmem:[#allocation3 + $0x9] sm:$0xff]
        %v2098 = vld [vmem:[#allocation3 + $0x11] sm:$0xff]
        %v2099 = vld [vmem:[#allocation3 + $0x19] sm:$0xff]
        %s2100 = scalar_lea.vmem [#allocation5], 384
        %v2101 = vld [vmem:[%s2100] sm:$0xff]
        %v2102 = vld [vmem:[%s2100 + $0x8] sm:$0xff]
        %v2103 = vld [vmem:[%s2100 + $0x10] sm:$0xff]
        %v2104 = vld [vmem:[%s2100 + $0x18] sm:$0xff]
        %v2105 = vld [vmem:[%s2100 + $0x20] sm:$0xff]
        %v2106 = vld [vmem:[%s2100 + $0x28] sm:$0xff]
        %v2107 = vld [vmem:[%s2100 + $0x30] sm:$0xff]
        %v2108 = vld [vmem:[%s2100 + $0x38] sm:$0xff]
        %v2110 = vsel %vm1185, %v2096, 0
        %v2113 = vsel %vm1185, %v2097, 0
        %v2116 = vsel %vm1185, %v2098, 0
        %v2119 = vsel %vm1185, %v2099, 0
        %2121 = vmatprep.subr.mxu0 0.0
        %2122 = vmatpush1.msra.mxu0 %v2101
        %2123 = vmatprep.subr.mxu0 0.0
        %2124 = vmatpush1.msra.mxu0 %v2102
        %2125 = vmatprep.subr.mxu0 0.0
        %2126 = vmatpush1.msra.mxu0 %v2103
        %2127 = vmatprep.subr.mxu0 0.0
        %2128 = vmatpush1.msra.mxu0 %v2104
        %2129 = vmatprep.subr.mxu0 0.0
        %2130 = vmatpush1.msra.mxu0 %v2105
        %2131 = vmatprep.subr.mxu0 0.0
        %2132 = vmatpush1.msra.mxu0 %v2106
        %2133 = vmatprep.subr.mxu0 0.0
        %2134 = vmatpush1.msra.mxu0 %v2107
        %2135 = vmatprep.subr.mxu0 0.0
        %2136 = vmatpush1.msra.mxu0 %v2108
        %2137 = vmatprep.subr.mxu0 0.0
        %2138 = vmatpush1.msra.mxu0 0.0
        %2139 = vmatprep.subr.mxu0 0.0
        %2140 = vmatpush1.msra.mxu0 0.0
        %2141 = vmatprep.subr.mxu0 0.0
        %2142 = vmatpush1.msra.mxu0 0.0
        %2143 = vmatprep.subr.mxu0 0.0
        %2144 = vmatpush1.msra.mxu0 0.0
        %2145 = vmatprep.subr.mxu0 0.0
        %2146 = vmatpush1.msra.mxu0 0.0
        %2147 = vmatprep.subr.mxu0 0.0
        %2148 = vmatpush1.msra.mxu0 0.0
        %2149 = vmatprep.subr.mxu0 0.0
        %2150 = vmatpush1.msra.mxu0 0.0
        %2151 = vmatprep.subr.mxu0 0.0
        %2152 = vmatpush1.msra.mxu0 0.0
        %2153 = vmatprep.subr.mxu0 0.0
        %2154 = vmatpush1.msra.mxu0 0.0
        %2155 = vmatprep.subr.mxu0 0.0
        %2156 = vmatpush1.msra.mxu0 0.0
        %2157 = vmatprep.subr.mxu0 0.0
        %2158 = vmatpush1.msra.mxu0 0.0
        %2159 = vmatprep.subr.mxu0 0.0
        %2160 = vmatpush1.msra.mxu0 0.0
        %2161 = vmatprep.subr.mxu0 0.0
        %2162 = vmatpush1.msra.mxu0 0.0
        %2163 = vmatprep.subr.mxu0 0.0
        %2164 = vmatpush1.msra.mxu0 0.0
        %2165 = vmatprep.subr.mxu0 0.0
        %2166 = vmatpush1.msra.mxu0 0.0
        %2167 = vmatprep.subr.mxu0 0.0
        %2168 = vmatpush1.msra.mxu0 0.0
        %2169 = vmatprep.subr.mxu0 0.0
        %2170 = vmatpush1.msra.mxu0 0.0
        %2171 = vmatprep.subr.mxu0 0.0
        %2172 = vmatpush1.msra.mxu0 0.0
        %2173 = vmatprep.subr.mxu0 0.0
        %2174 = vmatpush1.msra.mxu0 0.0
        %2175 = vmatprep.subr.mxu0 0.0
        %2176 = vmatpush1.msra.mxu0 0.0
        %2177 = vmatprep.subr.mxu0 0.0
        %2178 = vmatpush1.msra.mxu0 0.0
        %2179 = vmatprep.subr.mxu0 0.0
        %2180 = vmatpush1.msra.mxu0 0.0
        %2181 = vmatprep.subr.mxu0 0.0
        %2182 = vmatpush1.msra.mxu0 0.0
        %2183 = vmatprep.subr.mxu0 0.0
        %2184 = vmatpush1.msra.mxu0 0.0
        %2185 = vmatprep.mubr.f32.mxu0 0.0
        %2186 = vmatmul.mubr.f32.gmra.mrb[0].mxu0 %v2110
        %v2187 = vpop.f32.mrb[0].mxu0
        %v2188 = vadd.f32 0.0, %v2187
        %v2189 = vpop.f32.mrb[0].mxu0
        %2190 = vmatprep.mubr.f32.mxu0 0.0
        %2191 = vmatmul.mubr.f32.gmra.mrb[0].mxu0 %v2113
        %v2192 = vpop.f32.mrb[0].mxu0
        %v2193 = vadd.f32 0.0, %v2192
        %v2194 = vpop.f32.mrb[0].mxu0
        %2195 = vmatprep.mubr.f32.mxu0 0.0
        %2196 = vmatmul.mubr.f32.gmra.mrb[0].mxu0 %v2116
        %v2197 = vpop.f32.mrb[0].mxu0
        %v2198 = vadd.f32 0.0, %v2197
        %v2199 = vpop.f32.mrb[0].mxu0
        %2200 = vmatprep.mubr.f32.mxu0 0.0
        %2201 = vmatmul.mubr.f32.gmra.mrb[0].mxu0 %v2119
        %v2202 = vpop.f32.mrb[0].mxu0
        %v2203 = vadd.f32 0.0, %v2202
        %v2204 = vpop.f32.mrb[0].mxu0
        %2205 = vdwg.mxu0
        %v2207 = vsel %vm1185, %v2083, 0
        %v2210 = vsel %vm1185, %v2084, 0
        %v2213 = vsel %vm1185, %v2085, 0
        %v2216 = vsel %vm1185, %v2086, 0
        %2218 = vmatprep.subr.mxu0 0.0
        %2219 = vmatpush1.msra.mxu0 %v2088
        %2220 = vmatprep.subr.mxu0 0.0
        %2221 = vmatpush1.msra.mxu0 %v2089
        %2222 = vmatprep.subr.mxu0 0.0
        %2223 = vmatpush1.msra.mxu0 %v2090
        %2224 = vmatprep.subr.mxu0 0.0
        %2225 = vmatpush1.msra.mxu0 %v2091
        %2226 = vmatprep.subr.mxu0 0.0
        %2227 = vmatpush1.msra.mxu0 %v2092
        %2228 = vmatprep.subr.mxu0 0.0
        %2229 = vmatpush1.msra.mxu0 %v2093
        %2230 = vmatprep.subr.mxu0 0.0
        %2231 = vmatpush1.msra.mxu0 %v2094
        %2232 = vmatprep.subr.mxu0 0.0
        %2233 = vmatpush1.msra.mxu0 %v2095
        %2234 = vmatprep.subr.mxu0 0.0
        %2235 = vmatpush1.msra.mxu0 0.0
        %2236 = vmatprep.subr.mxu0 0.0
        %2237 = vmatpush1.msra.mxu0 0.0
        %2238 = vmatprep.subr.mxu0 0.0
        %2239 = vmatpush1.msra.mxu0 0.0
        %2240 = vmatprep.subr.mxu0 0.0
        %2241 = vmatpush1.msra.mxu0 0.0
        %2242 = vmatprep.subr.mxu0 0.0
        %2243 = vmatpush1.msra.mxu0 0.0
        %2244 = vmatprep.subr.mxu0 0.0
        %2245 = vmatpush1.msra.mxu0 0.0
        %2246 = vmatprep.subr.mxu0 0.0
        %2247 = vmatpush1.msra.mxu0 0.0
        %2248 = vmatprep.subr.mxu0 0.0
        %2249 = vmatpush1.msra.mxu0 0.0
        %2250 = vmatprep.subr.mxu0 0.0
        %2251 = vmatpush1.msra.mxu0 0.0
        %2252 = vmatprep.subr.mxu0 0.0
        %2253 = vmatpush1.msra.mxu0 0.0
        %2254 = vmatprep.subr.mxu0 0.0
        %2255 = vmatpush1.msra.mxu0 0.0
        %2256 = vmatprep.subr.mxu0 0.0
        %2257 = vmatpush1.msra.mxu0 0.0
        %2258 = vmatprep.subr.mxu0 0.0
        %2259 = vmatpush1.msra.mxu0 0.0
        %2260 = vmatprep.subr.mxu0 0.0
        %2261 = vmatpush1.msra.mxu0 0.0
        %2262 = vmatprep.subr.mxu0 0.0
        %2263 = vmatpush1.msra.mxu0 0.0
        %2264 = vmatprep.subr.mxu0 0.0
        %2265 = vmatpush1.msra.mxu0 0.0
        %2266 = vmatprep.subr.mxu0 0.0
        %2267 = vmatpush1.msra.mxu0 0.0
        %2268 = vmatprep.subr.mxu0 0.0
        %2269 = vmatpush1.msra.mxu0 0.0
        %2270 = vmatprep.subr.mxu0 0.0
        %2271 = vmatpush1.msra.mxu0 0.0
        %2272 = vmatprep.subr.mxu0 0.0
        %2273 = vmatpush1.msra.mxu0 0.0
        %2274 = vmatprep.subr.mxu0 0.0
        %2275 = vmatpush1.msra.mxu0 0.0
        %2276 = vmatprep.subr.mxu0 0.0
        %2277 = vmatpush1.msra.mxu0 0.0
        %2278 = vmatprep.subr.mxu0 0.0
        %2279 = vmatpush1.msra.mxu0 0.0
        %2280 = vmatprep.subr.mxu0 0.0
        %2281 = vmatpush1.msra.mxu0 0.0
        %2282 = vmatprep.mubr.f32.mxu0 0.0
        %2283 = vmatmul.mubr.f32.gmra.mrb[0].mxu0 %v2207
        %v2284 = vpop.f32.mrb[0].mxu0
        %v2285 = vadd.f32 %v2188, %v2284
        %v2286 = vpop.f32.mrb[0].mxu0
        %2287 = vmatprep.mubr.f32.mxu0 0.0
        %2288 = vmatmul.mubr.f32.gmra.mrb[0].mxu0 %v2210
        %v2289 = vpop.f32.mrb[0].mxu0
        %v2290 = vadd.f32 %v2193, %v2289
        %v2291 = vpop.f32.mrb[0].mxu0
        %2292 = vmatprep.mubr.f32.mxu0 0.0
        %2293 = vmatmul.mubr.f32.gmra.mrb[0].mxu0 %v2213
        %v2294 = vpop.f32.mrb[0].mxu0
        %v2295 = vadd.f32 %v2198, %v2294
        %v2296 = vpop.f32.mrb[0].mxu0
        %2297 = vmatprep.mubr.f32.mxu0 0.0
        %2298 = vmatmul.mubr.f32.gmra.mrb[0].mxu0 %v2216
        %v2299 = vpop.f32.mrb[0].mxu0
        %v2300 = vadd.f32 %v2203, %v2299
        %v2301 = vpop.f32.mrb[0].mxu0
        %2302 = vdwg.mxu0
        %v2303 = vld [vmem:[#allocation3 + $0x2] sm:$0xff]
        %v2304 = vld [vmem:[#allocation3 + $0xa] sm:$0xff]
        %v2305 = vld [vmem:[#allocation3 + $0x12] sm:$0xff]
        %v2306 = vld [vmem:[#allocation3 + $0x1a] sm:$0xff]
        %s2307 = scalar_lea.vmem [#allocation5], 448
        %v2308 = vld [vmem:[%s2307] sm:$0xff]
        %v2309 = vld [vmem:[%s2307 + $0x8] sm:$0xff]
        %v2310 = vld [vmem:[%s2307 + $0x10] sm:$0xff]
        %v2311 = vld [vmem:[%s2307 + $0x18] sm:$0xff]
        %v2312 = vld [vmem:[%s2307 + $0x20] sm:$0xff]
        %v2313 = vld [vmem:[%s2307 + $0x28] sm:$0xff]
        %v2314 = vld [vmem:[%s2307 + $0x30] sm:$0xff]
        %v2315 = vld [vmem:[%s2307 + $0x38] sm:$0xff]
        %v2317 = vsel %vm1185, %v2303, 0
        %v2320 = vsel %vm1185, %v2304, 0
        %v2323 = vsel %vm1185, %v2305, 0
        %v2326 = vsel %vm1185, %v2306, 0
        %2328 = vmatprep.subr.mxu0 0.0
        %2329 = vmatpush1.msra.mxu0 %v2308
        %2330 = vmatprep.subr.mxu0 0.0
        %2331 = vmatpush1.msra.mxu0 %v2309
        %2332 = vmatprep.subr.mxu0 0.0
        %2333 = vmatpush1.msra.mxu0 %v2310
        %2334 = vmatprep.subr.mxu0 0.0
        %2335 = vmatpush1.msra.mxu0 %v2311
        %2336 = vmatprep.subr.mxu0 0.0
        %2337 = vmatpush1.msra.mxu0 %v2312
        %2338 = vmatprep.subr.mxu0 0.0
        %2339 = vmatpush1.msra.mxu0 %v2313
        %2340 = vmatprep.subr.mxu0 0.0
        %2341 = vmatpush1.msra.mxu0 %v2314
        %2342 = vmatprep.subr.mxu0 0.0
        %2343 = vmatpush1.msra.mxu0 %v2315
        %2344 = vmatprep.subr.mxu0 0.0
        %2345 = vmatpush1.msra.mxu0 0.0
        %2346 = vmatprep.subr.mxu0 0.0
        %2347 = vmatpush1.msra.mxu0 0.0
        %2348 = vmatprep.subr.mxu0 0.0
        %2349 = vmatpush1.msra.mxu0 0.0
        %2350 = vmatprep.subr.mxu0 0.0
        %2351 = vmatpush1.msra.mxu0 0.0
        %2352 = vmatprep.subr.mxu0 0.0
        %2353 = vmatpush1.msra.mxu0 0.0
        %2354 = vmatprep.subr.mxu0 0.0
        %2355 = vmatpush1.msra.mxu0 0.0
        %2356 = vmatprep.subr.mxu0 0.0
        %2357 = vmatpush1.msra.mxu0 0.0
        %2358 = vmatprep.subr.mxu0 0.0
        %2359 = vmatpush1.msra.mxu0 0.0
        %2360 = vmatprep.subr.mxu0 0.0
        %2361 = vmatpush1.msra.mxu0 0.0
        %2362 = vmatprep.subr.mxu0 0.0
        %2363 = vmatpush1.msra.mxu0 0.0
        %2364 = vmatprep.subr.mxu0 0.0
        %2365 = vmatpush1.msra.mxu0 0.0
        %2366 = vmatprep.subr.mxu0 0.0
        %2367 = vmatpush1.msra.mxu0 0.0
        %2368 = vmatprep.subr.mxu0 0.0
        %2369 = vmatpush1.msra.mxu0 0.0
        %2370 = vmatprep.subr.mxu0 0.0
        %2371 = vmatpush1.msra.mxu0 0.0
        %2372 = vmatprep.subr.mxu0 0.0
        %2373 = vmatpush1.msra.mxu0 0.0
        %2374 = vmatprep.subr.mxu0 0.0
        %2375 = vmatpush1.msra.mxu0 0.0
        %2376 = vmatprep.subr.mxu0 0.0
        %2377 = vmatpush1.msra.mxu0 0.0
        %2378 = vmatprep.subr.mxu0 0.0
        %2379 = vmatpush1.msra.mxu0 0.0
        %2380 = vmatprep.subr.mxu0 0.0
        %2381 = vmatpush1.msra.mxu0 0.0
        %2382 = vmatprep.subr.mxu0 0.0
        %2383 = vmatpush1.msra.mxu0 0.0
        %2384 = vmatprep.subr.mxu0 0.0
        %2385 = vmatpush1.msra.mxu0 0.0
        %2386 = vmatprep.subr.mxu0 0.0
        %2387 = vmatpush1.msra.mxu0 0.0
        %2388 = vmatprep.subr.mxu0 0.0
        %2389 = vmatpush1.msra.mxu0 0.0
        %2390 = vmatprep.subr.mxu0 0.0
        %2391 = vmatpush1.msra.mxu0 0.0
        %2392 = vmatprep.mubr.f32.mxu0 0.0
        %2393 = vmatmul.mubr.f32.gmra.mrb[0].mxu0 %v2317
        %v2394 = vpop.f32.mrb[0].mxu0
        %v2395 = vadd.f32 0.0, %v2394
        %v2396 = vpop.f32.mrb[0].mxu0
        %2397 = vmatprep.mubr.f32.mxu0 0.0
        %2398 = vmatmul.mubr.f32.gmra.mrb[0].mxu0 %v2320
        %v2399 = vpop.f32.mrb[0].mxu0
        %v2400 = vadd.f32 0.0, %v2399
        %v2401 = vpop.f32.mrb[0].mxu0
        %2402 = vmatprep.mubr.f32.mxu0 0.0
        %2403 = vmatmul.mubr.f32.gmra.mrb[0].mxu0 %v2323
        %v2404 = vpop.f32.mrb[0].mxu0
        %v2405 = vadd.f32 0.0, %v2404
        %v2406 = vpop.f32.mrb[0].mxu0
        %2407 = vmatprep.mubr.f32.mxu0 0.0
        %2408 = vmatmul.mubr.f32.gmra.mrb[0].mxu0 %v2326
        %v2409 = vpop.f32.mrb[0].mxu0
        %v2410 = vadd.f32 0.0, %v2409
        %v2411 = vpop.f32.mrb[0].mxu0
        %2412 = vdwg.mxu0
        %v2413 = vadd.f32 %v2285, %v2395
        %v2414 = vadd.f32 %v2290, %v2400
        %v2415 = vadd.f32 %v2295, %v2405
        %v2416 = vadd.f32 %v2300, %v2410
        %v2417 = vld [vmem:[#allocation3 + $0x3] sm:$0xff]
        %v2418 = vld [vmem:[#allocation3 + $0xb] sm:$0xff]
        %v2419 = vld [vmem:[#allocation3 + $0x13] sm:$0xff]
        %v2420 = vld [vmem:[#allocation3 + $0x1b] sm:$0xff]
        %s2421 = scalar_lea.vmem [#allocation5], 512
        %v2422 = vld [vmem:[%s2421] sm:$0xff]
        %v2423 = vld [vmem:[%s2421 + $0x8] sm:$0xff]
        %v2424 = vld [vmem:[%s2421 + $0x10] sm:$0xff]
        %v2425 = vld [vmem:[%s2421 + $0x18] sm:$0xff]
        %v2426 = vld [vmem:[%s2421 + $0x20] sm:$0xff]
        %v2427 = vld [vmem:[%s2421 + $0x28] sm:$0xff]
        %v2428 = vld [vmem:[%s2421 + $0x30] sm:$0xff]
        %v2429 = vld [vmem:[%s2421 + $0x38] sm:$0xff]
        %v2431 = vsel %vm1185, %v2417, 0
        %v2434 = vsel %vm1185, %v2418, 0
        %v2437 = vsel %vm1185, %v2419, 0
        %v2440 = vsel %vm1185, %v2420, 0
        %2442 = vmatprep.subr.mxu0 0.0
        %2443 = vmatpush1.msra.mxu0 %v2422
        %2444 = vmatprep.subr.mxu0 0.0
        %2445 = vmatpush1.msra.mxu0 %v2423
        %2446 = vmatprep.subr.mxu0 0.0
        %2447 = vmatpush1.msra.mxu0 %v2424
        %2448 = vmatprep.subr.mxu0 0.0
        %2449 = vmatpush1.msra.mxu0 %v2425
        %2450 = vmatprep.subr.mxu0 0.0
        %2451 = vmatpush1.msra.mxu0 %v2426
        %2452 = vmatprep.subr.mxu0 0.0
        %2453 = vmatpush1.msra.mxu0 %v2427
        %2454 = vmatprep.subr.mxu0 0.0
        %2455 = vmatpush1.msra.mxu0 %v2428
        %2456 = vmatprep.subr.mxu0 0.0
        %2457 = vmatpush1.msra.mxu0 %v2429
        %2458 = vmatprep.subr.mxu0 0.0
        %2459 = vmatpush1.msra.mxu0 0.0
        %2460 = vmatprep.subr.mxu0 0.0
        %2461 = vmatpush1.msra.mxu0 0.0
        %2462 = vmatprep.subr.mxu0 0.0
        %2463 = vmatpush1.msra.mxu0 0.0
        %2464 = vmatprep.subr.mxu0 0.0
        %2465 = vmatpush1.msra.mxu0 0.0
        %2466 = vmatprep.subr.mxu0 0.0
        %2467 = vmatpush1.msra.mxu0 0.0
        %2468 = vmatprep.subr.mxu0 0.0
        %2469 = vmatpush1.msra.mxu0 0.0
        %2470 = vmatprep.subr.mxu0 0.0
        %2471 = vmatpush1.msra.mxu0 0.0
        %2472 = vmatprep.subr.mxu0 0.0
        %2473 = vmatpush1.msra.mxu0 0.0
        %2474 = vmatprep.subr.mxu0 0.0
        %2475 = vmatpush1.msra.mxu0 0.0
        %2476 = vmatprep.subr.mxu0 0.0
        %2477 = vmatpush1.msra.mxu0 0.0
        %2478 = vmatprep.subr.mxu0 0.0
        %2479 = vmatpush1.msra.mxu0 0.0
        %2480 = vmatprep.subr.mxu0 0.0
        %2481 = vmatpush1.msra.mxu0 0.0
        %2482 = vmatprep.subr.mxu0 0.0
        %2483 = vmatpush1.msra.mxu0 0.0
        %2484 = vmatprep.subr.mxu0 0.0
        %2485 = vmatpush1.msra.mxu0 0.0
        %2486 = vmatprep.subr.mxu0 0.0
        %2487 = vmatpush1.msra.mxu0 0.0
        %2488 = vmatprep.subr.mxu0 0.0
        %2489 = vmatpush1.msra.mxu0 0.0
        %2490 = vmatprep.subr.mxu0 0.0
        %2491 = vmatpush1.msra.mxu0 0.0
        %2492 = vmatprep.subr.mxu0 0.0
        %2493 = vmatpush1.msra.mxu0 0.0
        %2494 = vmatprep.subr.mxu0 0.0
        %2495 = vmatpush1.msra.mxu0 0.0
        %2496 = vmatprep.subr.mxu0 0.0
        %2497 = vmatpush1.msra.mxu0 0.0
        %2498 = vmatprep.subr.mxu0 0.0
        %2499 = vmatpush1.msra.mxu0 0.0
        %2500 = vmatprep.subr.mxu0 0.0
        %2501 = vmatpush1.msra.mxu0 0.0
        %2502 = vmatprep.subr.mxu0 0.0
        %2503 = vmatpush1.msra.mxu0 0.0
        %2504 = vmatprep.subr.mxu0 0.0
        %2505 = vmatpush1.msra.mxu0 0.0
        %2506 = vmatprep.mubr.f32.mxu0 0.0
        %2507 = vmatmul.mubr.f32.gmra.mrb[0].mxu0 %v2431
        %v2508 = vpop.f32.mrb[0].mxu0
        %v2509 = vadd.f32 0.0, %v2508
        %v2510 = vpop.f32.mrb[0].mxu0
        %2511 = vmatprep.mubr.f32.mxu0 0.0
        %2512 = vmatmul.mubr.f32.gmra.mrb[0].mxu0 %v2434
        %v2513 = vpop.f32.mrb[0].mxu0
        %v2514 = vadd.f32 0.0, %v2513
        %v2515 = vpop.f32.mrb[0].mxu0
        %2516 = vmatprep.mubr.f32.mxu0 0.0
        %2517 = vmatmul.mubr.f32.gmra.mrb[0].mxu0 %v2437
        %v2518 = vpop.f32.mrb[0].mxu0
        %v2519 = vadd.f32 0.0, %v2518
        %v2520 = vpop.f32.mrb[0].mxu0
        %2521 = vmatprep.mubr.f32.mxu0 0.0
        %2522 = vmatmul.mubr.f32.gmra.mrb[0].mxu0 %v2440
        %v2523 = vpop.f32.mrb[0].mxu0
        %v2524 = vadd.f32 0.0, %v2523
        %v2525 = vpop.f32.mrb[0].mxu0
        %2526 = vdwg.mxu0
        %v2527 = vadd.f32 %v2413, %v2509
        %v2528 = vadd.f32 %v2414, %v2514
        %v2529 = vadd.f32 %v2415, %v2519
        %v2530 = vadd.f32 %v2416, %v2524
        %v2531 = vld [vmem:[#allocation3 + $0x4] sm:$0xff]
        %v2532 = vld [vmem:[#allocation3 + $0xc] sm:$0xff]
        %v2533 = vld [vmem:[#allocation3 + $0x14] sm:$0xff]
        %v2534 = vld [vmem:[#allocation3 + $0x1c] sm:$0xff]
        %s2535 = scalar_lea.vmem [#allocation5], 576
        %v2536 = vld [vmem:[%s2535] sm:$0xff]
        %v2537 = vld [vmem:[%s2535 + $0x8] sm:$0xff]
        %v2538 = vld [vmem:[%s2535 + $0x10] sm:$0xff]
        %v2539 = vld [vmem:[%s2535 + $0x18] sm:$0xff]
        %v2540 = vld [vmem:[%s2535 + $0x20] sm:$0xff]
        %v2541 = vld [vmem:[%s2535 + $0x28] sm:$0xff]
        %v2542 = vld [vmem:[%s2535 + $0x30] sm:$0xff]
        %v2543 = vld [vmem:[%s2535 + $0x38] sm:$0xff]
        %v2545 = vsel %vm1185, %v2531, 0
        %v2548 = vsel %vm1185, %v2532, 0
        %v2551 = vsel %vm1185, %v2533, 0
        %v2554 = vsel %vm1185, %v2534, 0
        %2556 = vmatprep.subr.mxu0 0.0
        %2557 = vmatpush1.msra.mxu0 %v2536
        %2558 = vmatprep.subr.mxu0 0.0
        %2559 = vmatpush1.msra.mxu0 %v2537
        %2560 = vmatprep.subr.mxu0 0.0
        %2561 = vmatpush1.msra.mxu0 %v2538
        %2562 = vmatprep.subr.mxu0 0.0
        %2563 = vmatpush1.msra.mxu0 %v2539
        %2564 = vmatprep.subr.mxu0 0.0
        %2565 = vmatpush1.msra.mxu0 %v2540
        %2566 = vmatprep.subr.mxu0 0.0
        %2567 = vmatpush1.msra.mxu0 %v2541
        %2568 = vmatprep.subr.mxu0 0.0
        %2569 = vmatpush1.msra.mxu0 %v2542
        %2570 = vmatprep.subr.mxu0 0.0
        %2571 = vmatpush1.msra.mxu0 %v2543
        %2572 = vmatprep.subr.mxu0 0.0
        %2573 = vmatpush1.msra.mxu0 0.0
        %2574 = vmatprep.subr.mxu0 0.0
        %2575 = vmatpush1.msra.mxu0 0.0
        %2576 = vmatprep.subr.mxu0 0.0
        %2577 = vmatpush1.msra.mxu0 0.0
        %2578 = vmatprep.subr.mxu0 0.0
        %2579 = vmatpush1.msra.mxu0 0.0
        %2580 = vmatprep.subr.mxu0 0.0
        %2581 = vmatpush1.msra.mxu0 0.0
        %2582 = vmatprep.subr.mxu0 0.0
        %2583 = vmatpush1.msra.mxu0 0.0
        %2584 = vmatprep.subr.mxu0 0.0
        %2585 = vmatpush1.msra.mxu0 0.0
        %2586 = vmatprep.subr.mxu0 0.0
        %2587 = vmatpush1.msra.mxu0 0.0
        %2588 = vmatprep.subr.mxu0 0.0
        %2589 = vmatpush1.msra.mxu0 0.0
        %2590 = vmatprep.subr.mxu0 0.0
        %2591 = vmatpush1.msra.mxu0 0.0
        %2592 = vmatprep.subr.mxu0 0.0
        %2593 = vmatpush1.msra.mxu0 0.0
        %2594 = vmatprep.subr.mxu0 0.0
        %2595 = vmatpush1.msra.mxu0 0.0
        %2596 = vmatprep.subr.mxu0 0.0
        %2597 = vmatpush1.msra.mxu0 0.0
        %2598 = vmatprep.subr.mxu0 0.0
        %2599 = vmatpush1.msra.mxu0 0.0
        %2600 = vmatprep.subr.mxu0 0.0
        %2601 = vmatpush1.msra.mxu0 0.0
        %2602 = vmatprep.subr.mxu0 0.0
        %2603 = vmatpush1.msra.mxu0 0.0
        %2604 = vmatprep.subr.mxu0 0.0
        %2605 = vmatpush1.msra.mxu0 0.0
        %2606 = vmatprep.subr.mxu0 0.0
        %2607 = vmatpush1.msra.mxu0 0.0
        %2608 = vmatprep.subr.mxu0 0.0
        %2609 = vmatpush1.msra.mxu0 0.0
        %2610 = vmatprep.subr.mxu0 0.0
        %2611 = vmatpush1.msra.mxu0 0.0
        %2612 = vmatprep.subr.mxu0 0.0
        %2613 = vmatpush1.msra.mxu0 0.0
        %2614 = vmatprep.subr.mxu0 0.0
        %2615 = vmatpush1.msra.mxu0 0.0
        %2616 = vmatprep.subr.mxu0 0.0
        %2617 = vmatpush1.msra.mxu0 0.0
        %2618 = vmatprep.subr.mxu0 0.0
        %2619 = vmatpush1.msra.mxu0 0.0
        %2620 = vmatprep.mubr.f32.mxu0 0.0
        %2621 = vmatmul.mubr.f32.gmra.mrb[0].mxu0 %v2545
        %v2622 = vpop.f32.mrb[0].mxu0
        %v2623 = vadd.f32 0.0, %v2622
        %v2624 = vpop.f32.mrb[0].mxu0
        %2625 = vmatprep.mubr.f32.mxu0 0.0
        %2626 = vmatmul.mubr.f32.gmra.mrb[0].mxu0 %v2548
        %v2627 = vpop.f32.mrb[0].mxu0
        %v2628 = vadd.f32 0.0, %v2627
        %v2629 = vpop.f32.mrb[0].mxu0
        %2630 = vmatprep.mubr.f32.mxu0 0.0
        %2631 = vmatmul.mubr.f32.gmra.mrb[0].mxu0 %v2551
        %v2632 = vpop.f32.mrb[0].mxu0
        %v2633 = vadd.f32 0.0, %v2632
        %v2634 = vpop.f32.mrb[0].mxu0
        %2635 = vmatprep.mubr.f32.mxu0 0.0
        %2636 = vmatmul.mubr.f32.gmra.mrb[0].mxu0 %v2554
        %v2637 = vpop.f32.mrb[0].mxu0
        %v2638 = vadd.f32 0.0, %v2637
        %v2639 = vpop.f32.mrb[0].mxu0
        %2640 = vdwg.mxu0
        %v2641 = vadd.f32 %v2527, %v2623
        %v2642 = vadd.f32 %v2528, %v2628
        %v2643 = vadd.f32 %v2529, %v2633
        %v2644 = vadd.f32 %v2530, %v2638
        %s2645 = scalar_lea.vmem %s6, 1
        %v2646 = vld [vmem:[%s2645] sm:$0x1]
        %v2648 = vlaneseq
        %v2649 = vshrl.u32 %v2648, 7
        %v2650 = vsub.s32 0, %v2649
        %v2651 = vrot.slane %v2646, %v2650
        %v2653 = vadd.f32 %v2641, %v2651
        %v2654 = vadd.f32 %v2642, %v2651
        %v2655 = vadd.f32 %v2643, %v2651
        %v2656 = vadd.f32 %v2644, %v2651
        %v2657 = vmax.f32 %v2653, 0.0
        %v2658 = vmax.f32 %v2654, 0.0
        %v2659 = vmax.f32 %v2655, 0.0
        %v2660 = vmax.f32 %v2656, 0.0
        %s2661 = scalar_lea.vmem %s7, 1
        %v2662 = vld [vmem:[%s2661] sm:$0x1]
        %v2664 = vlaneseq
        %v2665 = vshrl.u32 %v2664, 7
        %v2666 = vsub.s32 0, %v2665
        %v2667 = vrot.slane %v2662, %v2666
        %v2669 = vmul.f32 %v2657, %v2667
        %v2670 = vmul.f32 %v2658, %v2667
        %v2671 = vmul.f32 %v2659, %v2667
        %v2672 = vmul.f32 %v2660, %v2667
        %s2673 = scalar_lea.vmem %s8, 1
        %v2674 = vld [vmem:[%s2673] sm:$0x1]
        %v2676 = vlaneseq
        %v2677 = vshrl.u32 %v2676, 7
        %v2678 = vsub.s32 0, %v2677
        %v2679 = vrot.slane %v2674, %v2678
        %v2681 = vadd.f32 %v2669, %v2679
        %v2682 = vadd.f32 %v2670, %v2679
        %v2683 = vadd.f32 %v2671, %v2679
        %v2684 = vadd.f32 %v2672, %v2679
        %2685 = vst.msk [vmem:[#allocation4] sm:$0xff] %vm1185, %v2681
        %2686 = vst.msk [vmem:[#allocation4 + $0x8] sm:$0xff] %vm1185, %v2682
        %2687 = vst.msk [vmem:[#allocation4 + $0x10] sm:$0xff] %vm1185, %v2683
        %2688 = vst.msk [vmem:[#allocation4 + $0x18] sm:$0xff] %vm1185, %v2684
        %v2689 = vld [vmem:[#allocation4] ss:$2 sm:$0xff]
        %v2690 = vld [vmem:[%s1203] ss:$2 sm:$0xff]
        %v2691 = vld [vmem:[%s1217] ss:$2 sm:$0xff]
        %v2692 = vld [vmem:[%s1219] ss:$2 sm:$0xff]
        %v2693 = vmax.f32 %v2689, %v2691
        %v2694 = vmax.f32 %v2690, %v2692
        %2695 = vst.msk [vmem:[#allocation3 + $0x2] sm:$0xff] %vm1185, %v2693
        %2696 = vst.msk [vmem:[#allocation3 + $0xa] sm:$0xff] %vm1185, %v2694
        %2697 = vst.msk [vmem:[#allocation3 + $0x12] sm:$0x3] %vm1241, 0.0
        %v2698 = vld [vmem:[#allocation3] sm:$0xff]
        %v2699 = vld [vmem:[#allocation3 + $0x8] sm:$0xff]
        %s2700 = scalar_lea.vmem [#allocation5], 640
        %v2701 = vld [vmem:[%s2700] sm:$0xff]
        %v2702 = vld [vmem:[%s2700 + $0x8] sm:$0xff]
        %v2703 = vld [vmem:[%s2700 + $0x10] sm:$0xff]
        %v2704 = vld [vmem:[%s2700 + $0x18] sm:$0xff]
        %v2705 = vld [vmem:[%s2700 + $0x20] sm:$0xff]
        %v2706 = vld [vmem:[%s2700 + $0x28] sm:$0xff]
        %v2707 = vld [vmem:[%s2700 + $0x30] sm:$0xff]
        %v2708 = vld [vmem:[%s2700 + $0x38] sm:$0xff]
        %v2709 = vld [vmem:[#allocation3 + $0x1] sm:$0xff]
        %v2710 = vld [vmem:[#allocation3 + $0x9] sm:$0xff]
        %s2711 = scalar_lea.vmem [#allocation5], 704
        %v2712 = vld [vmem:[%s2711] sm:$0xff]
        %v2713 = vld [vmem:[%s2711 + $0x8] sm:$0xff]
        %v2714 = vld [vmem:[%s2711 + $0x10] sm:$0xff]
        %v2715 = vld [vmem:[%s2711 + $0x18] sm:$0xff]
        %v2716 = vld [vmem:[%s2711 + $0x20] sm:$0xff]
        %v2717 = vld [vmem:[%s2711 + $0x28] sm:$0xff]
        %v2718 = vld [vmem:[%s2711 + $0x30] sm:$0xff]
        %v2719 = vld [vmem:[%s2711 + $0x38] sm:$0xff]
        %v2721 = vsel %vm1185, %v2709, 0
        %v2724 = vsel %vm1185, %v2710, 0
        %2726 = vmatprep.subr.mxu0 0.0
        %2727 = vmatpush1.msra.mxu0 %v2712
        %2728 = vmatprep.subr.mxu0 0.0
        %2729 = vmatpush1.msra.mxu0 %v2713
        %2730 = vmatprep.subr.mxu0 0.0
        %2731 = vmatpush1.msra.mxu0 %v2714
        %2732 = vmatprep.subr.mxu0 0.0
        %2733 = vmatpush1.msra.mxu0 %v2715
        %2734 = vmatprep.subr.mxu0 0.0
        %2735 = vmatpush1.msra.mxu0 %v2716
        %2736 = vmatprep.subr.mxu0 0.0
        %2737 = vmatpush1.msra.mxu0 %v2717
        %2738 = vmatprep.subr.mxu0 0.0
        %2739 = vmatpush1.msra.mxu0 %v2718
        %2740 = vmatprep.subr.mxu0 0.0
        %2741 = vmatpush1.msra.mxu0 %v2719
        %2742 = vmatprep.subr.mxu0 0.0
        %2743 = vmatpush1.msra.mxu0 0.0
        %2744 = vmatprep.subr.mxu0 0.0
        %2745 = vmatpush1.msra.mxu0 0.0
        %2746 = vmatprep.subr.mxu0 0.0
        %2747 = vmatpush1.msra.mxu0 0.0
        %2748 = vmatprep.subr.mxu0 0.0
        %2749 = vmatpush1.msra.mxu0 0.0
        %2750 = vmatprep.subr.mxu0 0.0
        %2751 = vmatpush1.msra.mxu0 0.0
        %2752 = vmatprep.subr.mxu0 0.0
        %2753 = vmatpush1.msra.mxu0 0.0
        %2754 = vmatprep.subr.mxu0 0.0
        %2755 = vmatpush1.msra.mxu0 0.0
        %2756 = vmatprep.subr.mxu0 0.0
        %2757 = vmatpush1.msra.mxu0 0.0
        %2758 = vmatprep.subr.mxu0 0.0
        %2759 = vmatpush1.msra.mxu0 0.0
        %2760 = vmatprep.subr.mxu0 0.0
        %2761 = vmatpush1.msra.mxu0 0.0
        %2762 = vmatprep.subr.mxu0 0.0
        %2763 = vmatpush1.msra.mxu0 0.0
        %2764 = vmatprep.subr.mxu0 0.0
        %2765 = vmatpush1.msra.mxu0 0.0
        %2766 = vmatprep.subr.mxu0 0.0
        %2767 = vmatpush1.msra.mxu0 0.0
        %2768 = vmatprep.subr.mxu0 0.0
        %2769 = vmatpush1.msra.mxu0 0.0
        %2770 = vmatprep.subr.mxu0 0.0
        %2771 = vmatpush1.msra.mxu0 0.0
        %2772 = vmatprep.subr.mxu0 0.0
        %2773 = vmatpush1.msra.mxu0 0.0
        %2774 = vmatprep.subr.mxu0 0.0
        %2775 = vmatpush1.msra.mxu0 0.0
        %2776 = vmatprep.subr.mxu0 0.0
        %2777 = vmatpush1.msra.mxu0 0.0
        %2778 = vmatprep.subr.mxu0 0.0
        %2779 = vmatpush1.msra.mxu0 0.0
        %2780 = vmatprep.subr.mxu0 0.0
        %2781 = vmatpush1.msra.mxu0 0.0
        %2782 = vmatprep.subr.mxu0 0.0
        %2783 = vmatpush1.msra.mxu0 0.0
        %2784 = vmatprep.subr.mxu0 0.0
        %2785 = vmatpush1.msra.mxu0 0.0
        %2786 = vmatprep.subr.mxu0 0.0
        %2787 = vmatpush1.msra.mxu0 0.0
        %2788 = vmatprep.subr.mxu0 0.0
        %2789 = vmatpush1.msra.mxu0 0.0
        %2790 = vmatprep.mubr.f32.mxu0 0.0
        %2791 = vmatmul.mubr.f32.gmra.mrb[0].mxu0 %v2721
        %v2792 = vpop.f32.mrb[0].mxu0
        %v2793 = vadd.f32 0.0, %v2792
        %v2794 = vpop.f32.mrb[0].mxu0
        %2795 = vmatprep.mubr.f32.mxu0 0.0
        %2796 = vmatmul.mubr.f32.gmra.mrb[0].mxu0 %v2724
        %v2797 = vpop.f32.mrb[0].mxu0
        %v2798 = vadd.f32 0.0, %v2797
        %v2799 = vpop.f32.mrb[0].mxu0
        %2800 = vdwg.mxu0
        %v2802 = vsel %vm1185, %v2698, 0
        %v2805 = vsel %vm1185, %v2699, 0
        %2807 = vmatprep.subr.mxu0 0.0
        %2808 = vmatpush1.msra.mxu0 %v2701
        %2809 = vmatprep.subr.mxu0 0.0
        %2810 = vmatpush1.msra.mxu0 %v2702
        %2811 = vmatprep.subr.mxu0 0.0
        %2812 = vmatpush1.msra.mxu0 %v2703
        %2813 = vmatprep.subr.mxu0 0.0
        %2814 = vmatpush1.msra.mxu0 %v2704
        %2815 = vmatprep.subr.mxu0 0.0
        %2816 = vmatpush1.msra.mxu0 %v2705
        %2817 = vmatprep.subr.mxu0 0.0
        %2818 = vmatpush1.msra.mxu0 %v2706
        %2819 = vmatprep.subr.mxu0 0.0
        %2820 = vmatpush1.msra.mxu0 %v2707
        %2821 = vmatprep.subr.mxu0 0.0
        %2822 = vmatpush1.msra.mxu0 %v2708
        %2823 = vmatprep.subr.mxu0 0.0
        %2824 = vmatpush1.msra.mxu0 0.0
        %2825 = vmatprep.subr.mxu0 0.0
        %2826 = vmatpush1.msra.mxu0 0.0
        %2827 = vmatprep.subr.mxu0 0.0
        %2828 = vmatpush1.msra.mxu0 0.0
        %2829 = vmatprep.subr.mxu0 0.0
        %2830 = vmatpush1.msra.mxu0 0.0
        %2831 = vmatprep.subr.mxu0 0.0
        %2832 = vmatpush1.msra.mxu0 0.0
        %2833 = vmatprep.subr.mxu0 0.0
        %2834 = vmatpush1.msra.mxu0 0.0
        %2835 = vmatprep.subr.mxu0 0.0
        %2836 = vmatpush1.msra.mxu0 0.0
        %2837 = vmatprep.subr.mxu0 0.0
        %2838 = vmatpush1.msra.mxu0 0.0
        %2839 = vmatprep.subr.mxu0 0.0
        %2840 = vmatpush1.msra.mxu0 0.0
        %2841 = vmatprep.subr.mxu0 0.0
        %2842 = vmatpush1.msra.mxu0 0.0
        %2843 = vmatprep.subr.mxu0 0.0
        %2844 = vmatpush1.msra.mxu0 0.0
        %2845 = vmatprep.subr.mxu0 0.0
        %2846 = vmatpush1.msra.mxu0 0.0
        %2847 = vmatprep.subr.mxu0 0.0
        %2848 = vmatpush1.msra.mxu0 0.0
        %2849 = vmatprep.subr.mxu0 0.0
        %2850 = vmatpush1.msra.mxu0 0.0
        %2851 = vmatprep.subr.mxu0 0.0
        %2852 = vmatpush1.msra.mxu0 0.0
        %2853 = vmatprep.subr.mxu0 0.0
        %2854 = vmatpush1.msra.mxu0 0.0
        %2855 = vmatprep.subr.mxu0 0.0
        %2856 = vmatpush1.msra.mxu0 0.0
        %2857 = vmatprep.subr.mxu0 0.0
        %2858 = vmatpush1.msra.mxu0 0.0
        %2859 = vmatprep.subr.mxu0 0.0
        %2860 = vmatpush1.msra.mxu0 0.0
        %2861 = vmatprep.subr.mxu0 0.0
        %2862 = vmatpush1.msra.mxu0 0.0
        %2863 = vmatprep.subr.mxu0 0.0
        %2864 = vmatpush1.msra.mxu0 0.0
        %2865 = vmatprep.subr.mxu0 0.0
        %2866 = vmatpush1.msra.mxu0 0.0
        %2867 = vmatprep.subr.mxu0 0.0
        %2868 = vmatpush1.msra.mxu0 0.0
        %2869 = vmatprep.subr.mxu0 0.0
        %2870 = vmatpush1.msra.mxu0 0.0
        %2871 = vmatprep.mubr.f32.mxu0 0.0
        %2872 = vmatmul.mubr.f32.gmra.mrb[0].mxu0 %v2802
        %v2873 = vpop.f32.mrb[0].mxu0
        %v2874 = vadd.f32 %v2793, %v2873
        %v2875 = vpop.f32.mrb[0].mxu0
        %2876 = vmatprep.mubr.f32.mxu0 0.0
        %2877 = vmatmul.mubr.f32.gmra.mrb[0].mxu0 %v2805
        %v2878 = vpop.f32.mrb[0].mxu0
        %v2879 = vadd.f32 %v2798, %v2878
        %v2880 = vpop.f32.mrb[0].mxu0
        %2881 = vdwg.mxu0
        %v2882 = vld [vmem:[#allocation3 + $0x2] sm:$0xff]
        %v2883 = vld [vmem:[#allocation3 + $0xa] sm:$0xff]
        %s2884 = scalar_lea.vmem [#allocation5], 768
        %v2885 = vld [vmem:[%s2884] sm:$0xff]
        %v2886 = vld [vmem:[%s2884 + $0x8] sm:$0xff]
        %v2887 = vld [vmem:[%s2884 + $0x10] sm:$0xff]
        %v2888 = vld [vmem:[%s2884 + $0x18] sm:$0xff]
        %v2889 = vld [vmem:[%s2884 + $0x20] sm:$0xff]
        %v2890 = vld [vmem:[%s2884 + $0x28] sm:$0xff]
        %v2891 = vld [vmem:[%s2884 + $0x30] sm:$0xff]
        %v2892 = vld [vmem:[%s2884 + $0x38] sm:$0xff]
        %v2894 = vsel %vm1185, %v2882, 0
        %v2897 = vsel %vm1185, %v2883, 0
        %2899 = vmatprep.subr.mxu0 0.0
        %2900 = vmatpush1.msra.mxu0 %v2885
        %2901 = vmatprep.subr.mxu0 0.0
        %2902 = vmatpush1.msra.mxu0 %v2886
        %2903 = vmatprep.subr.mxu0 0.0
        %2904 = vmatpush1.msra.mxu0 %v2887
        %2905 = vmatprep.subr.mxu0 0.0
        %2906 = vmatpush1.msra.mxu0 %v2888
        %2907 = vmatprep.subr.mxu0 0.0
        %2908 = vmatpush1.msra.mxu0 %v2889
        %2909 = vmatprep.subr.mxu0 0.0
        %2910 = vmatpush1.msra.mxu0 %v2890
        %2911 = vmatprep.subr.mxu0 0.0
        %2912 = vmatpush1.msra.mxu0 %v2891
        %2913 = vmatprep.subr.mxu0 0.0
        %2914 = vmatpush1.msra.mxu0 %v2892
        %2915 = vmatprep.subr.mxu0 0.0
        %2916 = vmatpush1.msra.mxu0 0.0
        %2917 = vmatprep.subr.mxu0 0.0
        %2918 = vmatpush1.msra.mxu0 0.0
        %2919 = vmatprep.subr.mxu0 0.0
        %2920 = vmatpush1.msra.mxu0 0.0
        %2921 = vmatprep.subr.mxu0 0.0
        %2922 = vmatpush1.msra.mxu0 0.0
        %2923 = vmatprep.subr.mxu0 0.0
        %2924 = vmatpush1.msra.mxu0 0.0
        %2925 = vmatprep.subr.mxu0 0.0
        %2926 = vmatpush1.msra.mxu0 0.0
        %2927 = vmatprep.subr.mxu0 0.0
        %2928 = vmatpush1.msra.mxu0 0.0
        %2929 = vmatprep.subr.mxu0 0.0
        %2930 = vmatpush1.msra.mxu0 0.0
        %2931 = vmatprep.subr.mxu0 0.0
        %2932 = vmatpush1.msra.mxu0 0.0
        %2933 = vmatprep.subr.mxu0 0.0
        %2934 = vmatpush1.msra.mxu0 0.0
        %2935 = vmatprep.subr.mxu0 0.0
        %2936 = vmatpush1.msra.mxu0 0.0
        %2937 = vmatprep.subr.mxu0 0.0
        %2938 = vmatpush1.msra.mxu0 0.0
        %2939 = vmatprep.subr.mxu0 0.0
        %2940 = vmatpush1.msra.mxu0 0.0
        %2941 = vmatprep.subr.mxu0 0.0
        %2942 = vmatpush1.msra.mxu0 0.0
        %2943 = vmatprep.subr.mxu0 0.0
        %2944 = vmatpush1.msra.mxu0 0.0
        %2945 = vmatprep.subr.mxu0 0.0
        %2946 = vmatpush1.msra.mxu0 0.0
        %2947 = vmatprep.subr.mxu0 0.0
        %2948 = vmatpush1.msra.mxu0 0.0
        %2949 = vmatprep.subr.mxu0 0.0
        %2950 = vmatpush1.msra.mxu0 0.0
        %2951 = vmatprep.subr.mxu0 0.0
        %2952 = vmatpush1.msra.mxu0 0.0
        %2953 = vmatprep.subr.mxu0 0.0
        %2954 = vmatpush1.msra.mxu0 0.0
        %2955 = vmatprep.subr.mxu0 0.0
        %2956 = vmatpush1.msra.mxu0 0.0
        %2957 = vmatprep.subr.mxu0 0.0
        %2958 = vmatpush1.msra.mxu0 0.0
        %2959 = vmatprep.subr.mxu0 0.0
        %2960 = vmatpush1.msra.mxu0 0.0
        %2961 = vmatprep.subr.mxu0 0.0
        %2962 = vmatpush1.msra.mxu0 0.0
        %2963 = vmatprep.mubr.f32.mxu0 0.0
        %2964 = vmatmul.mubr.f32.gmra.mrb[0].mxu0 %v2894
        %v2965 = vpop.f32.mrb[0].mxu0
        %v2966 = vadd.f32 0.0, %v2965
        %v2967 = vpop.f32.mrb[0].mxu0
        %2968 = vmatprep.mubr.f32.mxu0 0.0
        %2969 = vmatmul.mubr.f32.gmra.mrb[0].mxu0 %v2897
        %v2970 = vpop.f32.mrb[0].mxu0
        %v2971 = vadd.f32 0.0, %v2970
        %v2972 = vpop.f32.mrb[0].mxu0
        %2973 = vdwg.mxu0
        %v2974 = vadd.f32 %v2874, %v2966
        %v2975 = vadd.f32 %v2879, %v2971
        %v2976 = vld [vmem:[#allocation3 + $0x3] sm:$0xff]
        %v2977 = vld [vmem:[#allocation3 + $0xb] sm:$0xff]
        %s2978 = scalar_lea.vmem [#allocation5], 832
        %v2979 = vld [vmem:[%s2978] sm:$0xff]
        %v2980 = vld [vmem:[%s2978 + $0x8] sm:$0xff]
        %v2981 = vld [vmem:[%s2978 + $0x10] sm:$0xff]
        %v2982 = vld [vmem:[%s2978 + $0x18] sm:$0xff]
        %v2983 = vld [vmem:[%s2978 + $0x20] sm:$0xff]
        %v2984 = vld [vmem:[%s2978 + $0x28] sm:$0xff]
        %v2985 = vld [vmem:[%s2978 + $0x30] sm:$0xff]
        %v2986 = vld [vmem:[%s2978 + $0x38] sm:$0xff]
        %v2988 = vsel %vm1185, %v2976, 0
        %v2991 = vsel %vm1185, %v2977, 0
        %2993 = vmatprep.subr.mxu0 0.0
        %2994 = vmatpush1.msra.mxu0 %v2979
        %2995 = vmatprep.subr.mxu0 0.0
        %2996 = vmatpush1.msra.mxu0 %v2980
        %2997 = vmatprep.subr.mxu0 0.0
        %2998 = vmatpush1.msra.mxu0 %v2981
        %2999 = vmatprep.subr.mxu0 0.0
        %3000 = vmatpush1.msra.mxu0 %v2982
        %3001 = vmatprep.subr.mxu0 0.0
        %3002 = vmatpush1.msra.mxu0 %v2983
        %3003 = vmatprep.subr.mxu0 0.0
        %3004 = vmatpush1.msra.mxu0 %v2984
        %3005 = vmatprep.subr.mxu0 0.0
        %3006 = vmatpush1.msra.mxu0 %v2985
        %3007 = vmatprep.subr.mxu0 0.0
        %3008 = vmatpush1.msra.mxu0 %v2986
        %3009 = vmatprep.subr.mxu0 0.0
        %3010 = vmatpush1.msra.mxu0 0.0
        %3011 = vmatprep.subr.mxu0 0.0
        %3012 = vmatpush1.msra.mxu0 0.0
        %3013 = vmatprep.subr.mxu0 0.0
        %3014 = vmatpush1.msra.mxu0 0.0
        %3015 = vmatprep.subr.mxu0 0.0
        %3016 = vmatpush1.msra.mxu0 0.0
        %3017 = vmatprep.subr.mxu0 0.0
        %3018 = vmatpush1.msra.mxu0 0.0
        %3019 = vmatprep.subr.mxu0 0.0
        %3020 = vmatpush1.msra.mxu0 0.0
        %3021 = vmatprep.subr.mxu0 0.0
        %3022 = vmatpush1.msra.mxu0 0.0
        %3023 = vmatprep.subr.mxu0 0.0
        %3024 = vmatpush1.msra.mxu0 0.0
        %3025 = vmatprep.subr.mxu0 0.0
        %3026 = vmatpush1.msra.mxu0 0.0
        %3027 = vmatprep.subr.mxu0 0.0
        %3028 = vmatpush1.msra.mxu0 0.0
        %3029 = vmatprep.subr.mxu0 0.0
        %3030 = vmatpush1.msra.mxu0 0.0
        %3031 = vmatprep.subr.mxu0 0.0
        %3032 = vmatpush1.msra.mxu0 0.0
        %3033 = vmatprep.subr.mxu0 0.0
        %3034 = vmatpush1.msra.mxu0 0.0
        %3035 = vmatprep.subr.mxu0 0.0
        %3036 = vmatpush1.msra.mxu0 0.0
        %3037 = vmatprep.subr.mxu0 0.0
        %3038 = vmatpush1.msra.mxu0 0.0
        %3039 = vmatprep.subr.mxu0 0.0
        %3040 = vmatpush1.msra.mxu0 0.0
        %3041 = vmatprep.subr.mxu0 0.0
        %3042 = vmatpush1.msra.mxu0 0.0
        %3043 = vmatprep.subr.mxu0 0.0
        %3044 = vmatpush1.msra.mxu0 0.0
        %3045 = vmatprep.subr.mxu0 0.0
        %3046 = vmatpush1.msra.mxu0 0.0
        %3047 = vmatprep.subr.mxu0 0.0
        %3048 = vmatpush1.msra.mxu0 0.0
        %3049 = vmatprep.subr.mxu0 0.0
        %3050 = vmatpush1.msra.mxu0 0.0
        %3051 = vmatprep.subr.mxu0 0.0
        %3052 = vmatpush1.msra.mxu0 0.0
        %3053 = vmatprep.subr.mxu0 0.0
        %3054 = vmatpush1.msra.mxu0 0.0
        %3055 = vmatprep.subr.mxu0 0.0
        %3056 = vmatpush1.msra.mxu0 0.0
        %3057 = vmatprep.mubr.f32.mxu0 0.0
        %3058 = vmatmul.mubr.f32.gmra.mrb[0].mxu0 %v2988
        %v3059 = vpop.f32.mrb[0].mxu0
        %v3060 = vadd.f32 0.0, %v3059
        %v3061 = vpop.f32.mrb[0].mxu0
        %3062 = vmatprep.mubr.f32.mxu0 0.0
        %3063 = vmatmul.mubr.f32.gmra.mrb[0].mxu0 %v2991
        %v3064 = vpop.f32.mrb[0].mxu0
        %v3065 = vadd.f32 0.0, %v3064
        %v3066 = vpop.f32.mrb[0].mxu0
        %3067 = vdwg.mxu0
        %v3068 = vadd.f32 %v2974, %v3060
        %v3069 = vadd.f32 %v2975, %v3065
        %v3070 = vld [vmem:[#allocation3 + $0x4] sm:$0xff]
        %v3071 = vld [vmem:[#allocation3 + $0xc] sm:$0xff]
        %s3072 = scalar_lea.vmem [#allocation5], 896
        %v3073 = vld [vmem:[%s3072] sm:$0xff]
        %v3074 = vld [vmem:[%s3072 + $0x8] sm:$0xff]
        %v3075 = vld [vmem:[%s3072 + $0x10] sm:$0xff]
        %v3076 = vld [vmem:[%s3072 + $0x18] sm:$0xff]
        %v3077 = vld [vmem:[%s3072 + $0x20] sm:$0xff]
        %v3078 = vld [vmem:[%s3072 + $0x28] sm:$0xff]
        %v3079 = vld [vmem:[%s3072 + $0x30] sm:$0xff]
        %v3080 = vld [vmem:[%s3072 + $0x38] sm:$0xff]
        %v3082 = vsel %vm1185, %v3070, 0
        %v3085 = vsel %vm1185, %v3071, 0
        %3087 = vmatprep.subr.mxu0 0.0
        %3088 = vmatpush1.msra.mxu0 %v3073
        %3089 = vmatprep.subr.mxu0 0.0
        %3090 = vmatpush1.msra.mxu0 %v3074
        %3091 = vmatprep.subr.mxu0 0.0
        %3092 = vmatpush1.msra.mxu0 %v3075
        %3093 = vmatprep.subr.mxu0 0.0
        %3094 = vmatpush1.msra.mxu0 %v3076
        %3095 = vmatprep.subr.mxu0 0.0
        %3096 = vmatpush1.msra.mxu0 %v3077
        %3097 = vmatprep.subr.mxu0 0.0
        %3098 = vmatpush1.msra.mxu0 %v3078
        %3099 = vmatprep.subr.mxu0 0.0
        %3100 = vmatpush1.msra.mxu0 %v3079
        %3101 = vmatprep.subr.mxu0 0.0
        %3102 = vmatpush1.msra.mxu0 %v3080
        %3103 = vmatprep.subr.mxu0 0.0
        %3104 = vmatpush1.msra.mxu0 0.0
        %3105 = vmatprep.subr.mxu0 0.0
        %3106 = vmatpush1.msra.mxu0 0.0
        %3107 = vmatprep.subr.mxu0 0.0
        %3108 = vmatpush1.msra.mxu0 0.0
        %3109 = vmatprep.subr.mxu0 0.0
        %3110 = vmatpush1.msra.mxu0 0.0
        %3111 = vmatprep.subr.mxu0 0.0
        %3112 = vmatpush1.msra.mxu0 0.0
        %3113 = vmatprep.subr.mxu0 0.0
        %3114 = vmatpush1.msra.mxu0 0.0
        %3115 = vmatprep.subr.mxu0 0.0
        %3116 = vmatpush1.msra.mxu0 0.0
        %3117 = vmatprep.subr.mxu0 0.0
        %3118 = vmatpush1.msra.mxu0 0.0
        %3119 = vmatprep.subr.mxu0 0.0
        %3120 = vmatpush1.msra.mxu0 0.0
        %3121 = vmatprep.subr.mxu0 0.0
        %3122 = vmatpush1.msra.mxu0 0.0
        %3123 = vmatprep.subr.mxu0 0.0
        %3124 = vmatpush1.msra.mxu0 0.0
        %3125 = vmatprep.subr.mxu0 0.0
        %3126 = vmatpush1.msra.mxu0 0.0
        %3127 = vmatprep.subr.mxu0 0.0
        %3128 = vmatpush1.msra.mxu0 0.0
        %3129 = vmatprep.subr.mxu0 0.0
        %3130 = vmatpush1.msra.mxu0 0.0
        %3131 = vmatprep.subr.mxu0 0.0
        %3132 = vmatpush1.msra.mxu0 0.0
        %3133 = vmatprep.subr.mxu0 0.0
        %3134 = vmatpush1.msra.mxu0 0.0
        %3135 = vmatprep.subr.mxu0 0.0
        %3136 = vmatpush1.msra.mxu0 0.0
        %3137 = vmatprep.subr.mxu0 0.0
        %3138 = vmatpush1.msra.mxu0 0.0
        %3139 = vmatprep.subr.mxu0 0.0
        %3140 = vmatpush1.msra.mxu0 0.0
        %3141 = vmatprep.subr.mxu0 0.0
        %3142 = vmatpush1.msra.mxu0 0.0
        %3143 = vmatprep.subr.mxu0 0.0
        %3144 = vmatpush1.msra.mxu0 0.0
        %3145 = vmatprep.subr.mxu0 0.0
        %3146 = vmatpush1.msra.mxu0 0.0
        %3147 = vmatprep.subr.mxu0 0.0
        %3148 = vmatpush1.msra.mxu0 0.0
        %3149 = vmatprep.subr.mxu0 0.0
        %3150 = vmatpush1.msra.mxu0 0.0
        %3151 = vmatprep.mubr.f32.mxu0 0.0
        %3152 = vmatmul.mubr.f32.gmra.mrb[0].mxu0 %v3082
        %v3153 = vpop.f32.mrb[0].mxu0
        %v3154 = vadd.f32 0.0, %v3153
        %v3155 = vpop.f32.mrb[0].mxu0
        %3156 = vmatprep.mubr.f32.mxu0 0.0
        %3157 = vmatmul.mubr.f32.gmra.mrb[0].mxu0 %v3085
        %v3158 = vpop.f32.mrb[0].mxu0
        %v3159 = vadd.f32 0.0, %v3158
        %v3160 = vpop.f32.mrb[0].mxu0
        %3161 = vdwg.mxu0
        %v3162 = vadd.f32 %v3068, %v3154
        %v3163 = vadd.f32 %v3069, %v3159
        %s3164 = scalar_lea.vmem %s6, 2
        %v3165 = vld [vmem:[%s3164] sm:$0x1]
        %v3167 = vlaneseq
        %v3168 = vshrl.u32 %v3167, 7
        %v3169 = vsub.s32 0, %v3168
        %v3170 = vrot.slane %v3165, %v3169
        %v3172 = vadd.f32 %v3162, %v3170
        %v3173 = vadd.f32 %v3163, %v3170
        %v3174 = vmax.f32 %v3172, 0.0
        %v3175 = vmax.f32 %v3173, 0.0
        %s3176 = scalar_lea.vmem %s7, 2
        %v3177 = vld [vmem:[%s3176] sm:$0x1]
        %v3179 = vlaneseq
        %v3180 = vshrl.u32 %v3179, 7
        %v3181 = vsub.s32 0, %v3180
        %v3182 = vrot.slane %v3177, %v3181
        %v3184 = vmul.f32 %v3174, %v3182
        %v3185 = vmul.f32 %v3175, %v3182
        %s3186 = scalar_lea.vmem %s8, 2
        %v3187 = vld [vmem:[%s3186] sm:$0x1]
        %v3189 = vlaneseq
        %v3190 = vshrl.u32 %v3189, 7
        %v3191 = vsub.s32 0, %v3190
        %v3192 = vrot.slane %v3187, %v3191
        %v3194 = vadd.f32 %v3184, %v3192
        %v3195 = vadd.f32 %v3185, %v3192
        %3196 = vst.msk [vmem:[#allocation4] sm:$0xff] %vm1185, %v3194
        %3197 = vst.msk [vmem:[#allocation4 + $0x8] sm:$0xff] %vm1185, %v3195
        %v3198 = vld [vmem:[#allocation4] ss:$2 sm:$0xff]
        %v3199 = vld [vmem:[%s1217] ss:$2 sm:$0xff]
        %v3200 = vmax.f32 %v3198, %v3199
        %3201 = vst.msk [vmem:[#allocation3 + $0x2] sm:$0xff] %vm1185, %v3200
        %3202 = vst.msk [vmem:[#allocation3 + $0xa] sm:$0x3] %vm1241, 0.0
        %v3203 = vld [vmem:[#allocation3] sm:$0xff]
        %s3204 = scalar_lea.vmem [#allocation5], 960
        %v3205 = vld [vmem:[%s3204] sm:$0xff]
        %v3206 = vld [vmem:[%s3204 + $0x8] sm:$0xff]
        %v3207 = vld [vmem:[%s3204 + $0x10] sm:$0xff]
        %v3208 = vld [vmem:[%s3204 + $0x18] sm:$0xff]
        %v3209 = vld [vmem:[%s3204 + $0x20] sm:$0xff]
        %v3210 = vld [vmem:[%s3204 + $0x28] sm:$0xff]
        %v3211 = vld [vmem:[%s3204 + $0x30] sm:$0xff]
        %v3212 = vld [vmem:[%s3204 + $0x38] sm:$0xff]
        %v3213 = vld [vmem:[#allocation3 + $0x1] sm:$0xff]
        %s3214 = scalar_lea.vmem [#allocation5], 1024
        %v3215 = vld [vmem:[%s3214] sm:$0xff]
        %v3216 = vld [vmem:[%s3214 + $0x8] sm:$0xff]
        %v3217 = vld [vmem:[%s3214 + $0x10] sm:$0xff]
        %v3218 = vld [vmem:[%s3214 + $0x18] sm:$0xff]
        %v3219 = vld [vmem:[%s3214 + $0x20] sm:$0xff]
        %v3220 = vld [vmem:[%s3214 + $0x28] sm:$0xff]
        %v3221 = vld [vmem:[%s3214 + $0x30] sm:$0xff]
        %v3222 = vld [vmem:[%s3214 + $0x38] sm:$0xff]
        %v3224 = vsel %vm1185, %v3213, 0
        %3226 = vmatprep.subr.mxu0 0.0
        %3227 = vmatpush1.msra.mxu0 %v3215
        %3228 = vmatprep.subr.mxu0 0.0
        %3229 = vmatpush1.msra.mxu0 %v3216
        %3230 = vmatprep.subr.mxu0 0.0
        %3231 = vmatpush1.msra.mxu0 %v3217
        %3232 = vmatprep.subr.mxu0 0.0
        %3233 = vmatpush1.msra.mxu0 %v3218
        %3234 = vmatprep.subr.mxu0 0.0
        %3235 = vmatpush1.msra.mxu0 %v3219
        %3236 = vmatprep.subr.mxu0 0.0
        %3237 = vmatpush1.msra.mxu0 %v3220
        %3238 = vmatprep.subr.mxu0 0.0
        %3239 = vmatpush1.msra.mxu0 %v3221
        %3240 = vmatprep.subr.mxu0 0.0
        %3241 = vmatpush1.msra.mxu0 %v3222
        %3242 = vmatprep.subr.mxu0 0.0
        %3243 = vmatpush1.msra.mxu0 0.0
        %3244 = vmatprep.subr.mxu0 0.0
        %3245 = vmatpush1.msra.mxu0 0.0
        %3246 = vmatprep.subr.mxu0 0.0
        %3247 = vmatpush1.msra.mxu0 0.0
        %3248 = vmatprep.subr.mxu0 0.0
        %3249 = vmatpush1.msra.mxu0 0.0
        %3250 = vmatprep.subr.mxu0 0.0
        %3251 = vmatpush1.msra.mxu0 0.0
        %3252 = vmatprep.subr.mxu0 0.0
        %3253 = vmatpush1.msra.mxu0 0.0
        %3254 = vmatprep.subr.mxu0 0.0
        %3255 = vmatpush1.msra.mxu0 0.0
        %3256 = vmatprep.subr.mxu0 0.0
        %3257 = vmatpush1.msra.mxu0 0.0
        %3258 = vmatprep.subr.mxu0 0.0
        %3259 = vmatpush1.msra.mxu0 0.0
        %3260 = vmatprep.subr.mxu0 0.0
        %3261 = vmatpush1.msra.mxu0 0.0
        %3262 = vmatprep.subr.mxu0 0.0
        %3263 = vmatpush1.msra.mxu0 0.0
        %3264 = vmatprep.subr.mxu0 0.0
        %3265 = vmatpush1.msra.mxu0 0.0
        %3266 = vmatprep.subr.mxu0 0.0
        %3267 = vmatpush1.msra.mxu0 0.0
        %3268 = vmatprep.subr.mxu0 0.0
        %3269 = vmatpush1.msra.mxu0 0.0
        %3270 = vmatprep.subr.mxu0 0.0
        %3271 = vmatpush1.msra.mxu0 0.0
        %3272 = vmatprep.subr.mxu0 0.0
        %3273 = vmatpush1.msra.mxu0 0.0
        %3274 = vmatprep.subr.mxu0 0.0
        %3275 = vmatpush1.msra.mxu0 0.0
        %3276 = vmatprep.subr.mxu0 0.0
        %3277 = vmatpush1.msra.mxu0 0.0
        %3278 = vmatprep.subr.mxu0 0.0
        %3279 = vmatpush1.msra.mxu0 0.0
        %3280 = vmatprep.subr.mxu0 0.0
        %3281 = vmatpush1.msra.mxu0 0.0
        %3282 = vmatprep.subr.mxu0 0.0
        %3283 = vmatpush1.msra.mxu0 0.0
        %3284 = vmatprep.subr.mxu0 0.0
        %3285 = vmatpush1.msra.mxu0 0.0
        %3286 = vmatprep.subr.mxu0 0.0
        %3287 = vmatpush1.msra.mxu0 0.0
        %3288 = vmatprep.subr.mxu0 0.0
        %3289 = vmatpush1.msra.mxu0 0.0
        %3290 = vmatprep.mubr.f32.mxu0 0.0
        %3291 = vmatmul.mubr.f32.gmra.mrb[0].mxu0 %v3224
        %v3292 = vpop.f32.mrb[0].mxu0
        %v3293 = vadd.f32 0.0, %v3292
        %v3294 = vpop.f32.mrb[0].mxu0
        %3295 = vdwg.mxu0
        %v3297 = vsel %vm1185, %v3203, 0
        %3299 = vmatprep.subr.mxu0 0.0
        %3300 = vmatpush1.msra.mxu0 %v3205
        %3301 = vmatprep.subr.mxu0 0.0
        %3302 = vmatpush1.msra.mxu0 %v3206
        %3303 = vmatprep.subr.mxu0 0.0
        %3304 = vmatpush1.msra.mxu0 %v3207
        %3305 = vmatprep.subr.mxu0 0.0
        %3306 = vmatpush1.msra.mxu0 %v3208
        %3307 = vmatprep.subr.mxu0 0.0
        %3308 = vmatpush1.msra.mxu0 %v3209
        %3309 = vmatprep.subr.mxu0 0.0
        %3310 = vmatpush1.msra.mxu0 %v3210
        %3311 = vmatprep.subr.mxu0 0.0
        %3312 = vmatpush1.msra.mxu0 %v3211
        %3313 = vmatprep.subr.mxu0 0.0
        %3314 = vmatpush1.msra.mxu0 %v3212
        %3315 = vmatprep.subr.mxu0 0.0
        %3316 = vmatpush1.msra.mxu0 0.0
        %3317 = vmatprep.subr.mxu0 0.0
        %3318 = vmatpush1.msra.mxu0 0.0
        %3319 = vmatprep.subr.mxu0 0.0
        %3320 = vmatpush1.msra.mxu0 0.0
        %3321 = vmatprep.subr.mxu0 0.0
        %3322 = vmatpush1.msra.mxu0 0.0
        %3323 = vmatprep.subr.mxu0 0.0
        %3324 = vmatpush1.msra.mxu0 0.0
        %3325 = vmatprep.subr.mxu0 0.0
        %3326 = vmatpush1.msra.mxu0 0.0
        %3327 = vmatprep.subr.mxu0 0.0
        %3328 = vmatpush1.msra.mxu0 0.0
        %3329 = vmatprep.subr.mxu0 0.0
        %3330 = vmatpush1.msra.mxu0 0.0
        %3331 = vmatprep.subr.mxu0 0.0
        %3332 = vmatpush1.msra.mxu0 0.0
        %3333 = vmatprep.subr.mxu0 0.0
        %3334 = vmatpush1.msra.mxu0 0.0
        %3335 = vmatprep.subr.mxu0 0.0
        %3336 = vmatpush1.msra.mxu0 0.0
        %3337 = vmatprep.subr.mxu0 0.0
        %3338 = vmatpush1.msra.mxu0 0.0
        %3339 = vmatprep.subr.mxu0 0.0
        %3340 = vmatpush1.msra.mxu0 0.0
        %3341 = vmatprep.subr.mxu0 0.0
        %3342 = vmatpush1.msra.mxu0 0.0
        %3343 = vmatprep.subr.mxu0 0.0
        %3344 = vmatpush1.msra.mxu0 0.0
        %3345 = vmatprep.subr.mxu0 0.0
        %3346 = vmatpush1.msra.mxu0 0.0
        %3347 = vmatprep.subr.mxu0 0.0
        %3348 = vmatpush1.msra.mxu0 0.0
        %3349 = vmatprep.subr.mxu0 0.0
        %3350 = vmatpush1.msra.mxu0 0.0
        %3351 = vmatprep.subr.mxu0 0.0
        %3352 = vmatpush1.msra.mxu0 0.0
        %3353 = vmatprep.subr.mxu0 0.0
        %3354 = vmatpush1.msra.mxu0 0.0
        %3355 = vmatprep.subr.mxu0 0.0
        %3356 = vmatpush1.msra.mxu0 0.0
        %3357 = vmatprep.subr.mxu0 0.0
        %3358 = vmatpush1.msra.mxu0 0.0
        %3359 = vmatprep.subr.mxu0 0.0
        %3360 = vmatpush1.msra.mxu0 0.0
        %3361 = vmatprep.subr.mxu0 0.0
        %3362 = vmatpush1.msra.mxu0 0.0
        %3363 = vmatprep.mubr.f32.mxu0 0.0
        %3364 = vmatmul.mubr.f32.gmra.mrb[0].mxu0 %v3297
        %v3365 = vpop.f32.mrb[0].mxu0
        %v3366 = vadd.f32 %v3293, %v3365
        %v3367 = vpop.f32.mrb[0].mxu0
        %3368 = vdwg.mxu0
        %v3369 = vld [vmem:[#allocation3 + $0x2] sm:$0xff]
        %s3370 = scalar_lea.vmem [#allocation5], 1088
        %v3371 = vld [vmem:[%s3370] sm:$0xff]
        %v3372 = vld [vmem:[%s3370 + $0x8] sm:$0xff]
        %v3373 = vld [vmem:[%s3370 + $0x10] sm:$0xff]
        %v3374 = vld [vmem:[%s3370 + $0x18] sm:$0xff]
        %v3375 = vld [vmem:[%s3370 + $0x20] sm:$0xff]
        %v3376 = vld [vmem:[%s3370 + $0x28] sm:$0xff]
        %v3377 = vld [vmem:[%s3370 + $0x30] sm:$0xff]
        %v3378 = vld [vmem:[%s3370 + $0x38] sm:$0xff]
        %v3380 = vsel %vm1185, %v3369, 0
        %3382 = vmatprep.subr.mxu0 0.0
        %3383 = vmatpush1.msra.mxu0 %v3371
        %3384 = vmatprep.subr.mxu0 0.0
        %3385 = vmatpush1.msra.mxu0 %v3372
        %3386 = vmatprep.subr.mxu0 0.0
        %3387 = vmatpush1.msra.mxu0 %v3373
        %3388 = vmatprep.subr.mxu0 0.0
        %3389 = vmatpush1.msra.mxu0 %v3374
        %3390 = vmatprep.subr.mxu0 0.0
        %3391 = vmatpush1.msra.mxu0 %v3375
        %3392 = vmatprep.subr.mxu0 0.0
        %3393 = vmatpush1.msra.mxu0 %v3376
        %3394 = vmatprep.subr.mxu0 0.0
        %3395 = vmatpush1.msra.mxu0 %v3377
        %3396 = vmatprep.subr.mxu0 0.0
        %3397 = vmatpush1.msra.mxu0 %v3378
        %3398 = vmatprep.subr.mxu0 0.0
        %3399 = vmatpush1.msra.mxu0 0.0
        %3400 = vmatprep.subr.mxu0 0.0
        %3401 = vmatpush1.msra.mxu0 0.0
        %3402 = vmatprep.subr.mxu0 0.0
        %3403 = vmatpush1.msra.mxu0 0.0
        %3404 = vmatprep.subr.mxu0 0.0
        %3405 = vmatpush1.msra.mxu0 0.0
        %3406 = vmatprep.subr.mxu0 0.0
        %3407 = vmatpush1.msra.mxu0 0.0
        %3408 = vmatprep.subr.mxu0 0.0
        %3409 = vmatpush1.msra.mxu0 0.0
        %3410 = vmatprep.subr.mxu0 0.0
        %3411 = vmatpush1.msra.mxu0 0.0
        %3412 = vmatprep.subr.mxu0 0.0
        %3413 = vmatpush1.msra.mxu0 0.0
        %3414 = vmatprep.subr.mxu0 0.0
        %3415 = vmatpush1.msra.mxu0 0.0
        %3416 = vmatprep.subr.mxu0 0.0
        %3417 = vmatpush1.msra.mxu0 0.0
        %3418 = vmatprep.subr.mxu0 0.0
        %3419 = vmatpush1.msra.mxu0 0.0
        %3420 = vmatprep.subr.mxu0 0.0
        %3421 = vmatpush1.msra.mxu0 0.0
        %3422 = vmatprep.subr.mxu0 0.0
        %3423 = vmatpush1.msra.mxu0 0.0
        %3424 = vmatprep.subr.mxu0 0.0
        %3425 = vmatpush1.msra.mxu0 0.0
        %3426 = vmatprep.subr.mxu0 0.0
        %3427 = vmatpush1.msra.mxu0 0.0
        %3428 = vmatprep.subr.mxu0 0.0
        %3429 = vmatpush1.msra.mxu0 0.0
        %3430 = vmatprep.subr.mxu0 0.0
        %3431 = vmatpush1.msra.mxu0 0.0
        %3432 = vmatprep.subr.mxu0 0.0
        %3433 = vmatpush1.msra.mxu0 0.0
        %3434 = vmatprep.subr.mxu0 0.0
        %3435 = vmatpush1.msra.mxu0 0.0
        %3436 = vmatprep.subr.mxu0 0.0
        %3437 = vmatpush1.msra.mxu0 0.0
        %3438 = vmatprep.subr.mxu0 0.0
        %3439 = vmatpush1.msra.mxu0 0.0
        %3440 = vmatprep.subr.mxu0 0.0
        %3441 = vmatpush1.msra.mxu0 0.0
        %3442 = vmatprep.subr.mxu0 0.0
        %3443 = vmatpush1.msra.mxu0 0.0
        %3444 = vmatprep.subr.mxu0 0.0
        %3445 = vmatpush1.msra.mxu0 0.0
        %3446 = vmatprep.mubr.f32.mxu0 0.0
        %3447 = vmatmul.mubr.f32.gmra.mrb[0].mxu0 %v3380
        %v3448 = vpop.f32.mrb[0].mxu0
        %v3449 = vadd.f32 0.0, %v3448
        %v3450 = vpop.f32.mrb[0].mxu0
        %3451 = vdwg.mxu0
        %v3452 = vadd.f32 %v3366, %v3449
        %v3453 = vld [vmem:[#allocation3 + $0x3] sm:$0xff]
        %s3454 = scalar_lea.vmem [#allocation5], 1152
        %v3455 = vld [vmem:[%s3454] sm:$0xff]
        %v3456 = vld [vmem:[%s3454 + $0x8] sm:$0xff]
        %v3457 = vld [vmem:[%s3454 + $0x10] sm:$0xff]
        %v3458 = vld [vmem:[%s3454 + $0x18] sm:$0xff]
        %v3459 = vld [vmem:[%s3454 + $0x20] sm:$0xff]
        %v3460 = vld [vmem:[%s3454 + $0x28] sm:$0xff]
        %v3461 = vld [vmem:[%s3454 + $0x30] sm:$0xff]
        %v3462 = vld [vmem:[%s3454 + $0x38] sm:$0xff]
        %v3464 = vsel %vm1185, %v3453, 0
        %3466 = vmatprep.subr.mxu0 0.0
        %3467 = vmatpush1.msra.mxu0 %v3455
        %3468 = vmatprep.subr.mxu0 0.0
        %3469 = vmatpush1.msra.mxu0 %v3456
        %3470 = vmatprep.subr.mxu0 0.0
        %3471 = vmatpush1.msra.mxu0 %v3457
        %3472 = vmatprep.subr.mxu0 0.0
        %3473 = vmatpush1.msra.mxu0 %v3458
        %3474 = vmatprep.subr.mxu0 0.0
        %3475 = vmatpush1.msra.mxu0 %v3459
        %3476 = vmatprep.subr.mxu0 0.0
        %3477 = vmatpush1.msra.mxu0 %v3460
        %3478 = vmatprep.subr.mxu0 0.0
        %3479 = vmatpush1.msra.mxu0 %v3461
        %3480 = vmatprep.subr.mxu0 0.0
        %3481 = vmatpush1.msra.mxu0 %v3462
        %3482 = vmatprep.subr.mxu0 0.0
        %3483 = vmatpush1.msra.mxu0 0.0
        %3484 = vmatprep.subr.mxu0 0.0
        %3485 = vmatpush1.msra.mxu0 0.0
        %3486 = vmatprep.subr.mxu0 0.0
        %3487 = vmatpush1.msra.mxu0 0.0
        %3488 = vmatprep.subr.mxu0 0.0
        %3489 = vmatpush1.msra.mxu0 0.0
        %3490 = vmatprep.subr.mxu0 0.0
        %3491 = vmatpush1.msra.mxu0 0.0
        %3492 = vmatprep.subr.mxu0 0.0
        %3493 = vmatpush1.msra.mxu0 0.0
        %3494 = vmatprep.subr.mxu0 0.0
        %3495 = vmatpush1.msra.mxu0 0.0
        %3496 = vmatprep.subr.mxu0 0.0
        %3497 = vmatpush1.msra.mxu0 0.0
        %3498 = vmatprep.subr.mxu0 0.0
        %3499 = vmatpush1.msra.mxu0 0.0
        %3500 = vmatprep.subr.mxu0 0.0
        %3501 = vmatpush1.msra.mxu0 0.0
        %3502 = vmatprep.subr.mxu0 0.0
        %3503 = vmatpush1.msra.mxu0 0.0
        %3504 = vmatprep.subr.mxu0 0.0
        %3505 = vmatpush1.msra.mxu0 0.0
        %3506 = vmatprep.subr.mxu0 0.0
        %3507 = vmatpush1.msra.mxu0 0.0
        %3508 = vmatprep.subr.mxu0 0.0
        %3509 = vmatpush1.msra.mxu0 0.0
        %3510 = vmatprep.subr.mxu0 0.0
        %3511 = vmatpush1.msra.mxu0 0.0
        %3512 = vmatprep.subr.mxu0 0.0
        %3513 = vmatpush1.msra.mxu0 0.0
        %3514 = vmatprep.subr.mxu0 0.0
        %3515 = vmatpush1.msra.mxu0 0.0
        %3516 = vmatprep.subr.mxu0 0.0
        %3517 = vmatpush1.msra.mxu0 0.0
        %3518 = vmatprep.subr.mxu0 0.0
        %3519 = vmatpush1.msra.mxu0 0.0
        %3520 = vmatprep.subr.mxu0 0.0
        %3521 = vmatpush1.msra.mxu0 0.0
        %3522 = vmatprep.subr.mxu0 0.0
        %3523 = vmatpush1.msra.mxu0 0.0
        %3524 = vmatprep.subr.mxu0 0.0
        %3525 = vmatpush1.msra.mxu0 0.0
        %3526 = vmatprep.subr.mxu0 0.0
        %3527 = vmatpush1.msra.mxu0 0.0
        %3528 = vmatprep.subr.mxu0 0.0
        %3529 = vmatpush1.msra.mxu0 0.0
        %3530 = vmatprep.mubr.f32.mxu0 0.0
        %3531 = vmatmul.mubr.f32.gmra.mrb[0].mxu0 %v3464
        %v3532 = vpop.f32.mrb[0].mxu0
        %v3533 = vadd.f32 0.0, %v3532
        %v3534 = vpop.f32.mrb[0].mxu0
        %3535 = vdwg.mxu0
        %v3536 = vadd.f32 %v3452, %v3533
        %v3537 = vld [vmem:[#allocation3 + $0x4] sm:$0xff]
        %s3538 = scalar_lea.vmem [#allocation5], 1216
        %v3539 = vld [vmem:[%s3538] sm:$0xff]
        %v3540 = vld [vmem:[%s3538 + $0x8] sm:$0xff]
        %v3541 = vld [vmem:[%s3538 + $0x10] sm:$0xff]
        %v3542 = vld [vmem:[%s3538 + $0x18] sm:$0xff]
        %v3543 = vld [vmem:[%s3538 + $0x20] sm:$0xff]
        %v3544 = vld [vmem:[%s3538 + $0x28] sm:$0xff]
        %v3545 = vld [vmem:[%s3538 + $0x30] sm:$0xff]
        %v3546 = vld [vmem:[%s3538 + $0x38] sm:$0xff]
        %v3548 = vsel %vm1185, %v3537, 0
        %3550 = vmatprep.subr.mxu0 0.0
        %3551 = vmatpush1.msra.mxu0 %v3539
        %3552 = vmatprep.subr.mxu0 0.0
        %3553 = vmatpush1.msra.mxu0 %v3540
        %3554 = vmatprep.subr.mxu0 0.0
        %3555 = vmatpush1.msra.mxu0 %v3541
        %3556 = vmatprep.subr.mxu0 0.0
        %3557 = vmatpush1.msra.mxu0 %v3542
        %3558 = vmatprep.subr.mxu0 0.0
        %3559 = vmatpush1.msra.mxu0 %v3543
        %3560 = vmatprep.subr.mxu0 0.0
        %3561 = vmatpush1.msra.mxu0 %v3544
        %3562 = vmatprep.subr.mxu0 0.0
        %3563 = vmatpush1.msra.mxu0 %v3545
        %3564 = vmatprep.subr.mxu0 0.0
        %3565 = vmatpush1.msra.mxu0 %v3546
        %3566 = vmatprep.subr.mxu0 0.0
        %3567 = vmatpush1.msra.mxu0 0.0
        %3568 = vmatprep.subr.mxu0 0.0
        %3569 = vmatpush1.msra.mxu0 0.0
        %3570 = vmatprep.subr.mxu0 0.0
        %3571 = vmatpush1.msra.mxu0 0.0
        %3572 = vmatprep.subr.mxu0 0.0
        %3573 = vmatpush1.msra.mxu0 0.0
        %3574 = vmatprep.subr.mxu0 0.0
        %3575 = vmatpush1.msra.mxu0 0.0
        %3576 = vmatprep.subr.mxu0 0.0
        %3577 = vmatpush1.msra.mxu0 0.0
        %3578 = vmatprep.subr.mxu0 0.0
        %3579 = vmatpush1.msra.mxu0 0.0
        %3580 = vmatprep.subr.mxu0 0.0
        %3581 = vmatpush1.msra.mxu0 0.0
        %3582 = vmatprep.subr.mxu0 0.0
        %3583 = vmatpush1.msra.mxu0 0.0
        %3584 = vmatprep.subr.mxu0 0.0
        %3585 = vmatpush1.msra.mxu0 0.0
        %3586 = vmatprep.subr.mxu0 0.0
        %3587 = vmatpush1.msra.mxu0 0.0
        %3588 = vmatprep.subr.mxu0 0.0
        %3589 = vmatpush1.msra.mxu0 0.0
        %3590 = vmatprep.subr.mxu0 0.0
        %3591 = vmatpush1.msra.mxu0 0.0
        %3592 = vmatprep.subr.mxu0 0.0
        %3593 = vmatpush1.msra.mxu0 0.0
        %3594 = vmatprep.subr.mxu0 0.0
        %3595 = vmatpush1.msra.mxu0 0.0
        %3596 = vmatprep.subr.mxu0 0.0
        %3597 = vmatpush1.msra.mxu0 0.0
        %3598 = vmatprep.subr.mxu0 0.0
        %3599 = vmatpush1.msra.mxu0 0.0
        %3600 = vmatprep.subr.mxu0 0.0
        %3601 = vmatpush1.msra.mxu0 0.0
        %3602 = vmatprep.subr.mxu0 0.0
        %3603 = vmatpush1.msra.mxu0 0.0
        %3604 = vmatprep.subr.mxu0 0.0
        %3605 = vmatpush1.msra.mxu0 0.0
        %3606 = vmatprep.subr.mxu0 0.0
        %3607 = vmatpush1.msra.mxu0 0.0
        %3608 = vmatprep.subr.mxu0 0.0
        %3609 = vmatpush1.msra.mxu0 0.0
        %3610 = vmatprep.subr.mxu0 0.0
        %3611 = vmatpush1.msra.mxu0 0.0
        %3612 = vmatprep.subr.mxu0 0.0
        %3613 = vmatpush1.msra.mxu0 0.0
        %3614 = vmatprep.mubr.f32.mxu0 0.0
        %3615 = vmatmul.mubr.f32.gmra.mrb[0].mxu0 %v3548
        %v3616 = vpop.f32.mrb[0].mxu0
        %v3617 = vadd.f32 0.0, %v3616
        %v3618 = vpop.f32.mrb[0].mxu0
        %3619 = vdwg.mxu0
        %v3620 = vadd.f32 %v3536, %v3617
        %s3621 = scalar_lea.vmem %s6, 3
        %v3622 = vld [vmem:[%s3621] sm:$0x1]
        %v3624 = vlaneseq
        %v3625 = vshrl.u32 %v3624, 7
        %v3626 = vsub.s32 0, %v3625
        %v3627 = vrot.slane %v3622, %v3626
        %v3629 = vadd.f32 %v3620, %v3627
        %v3630 = vmax.f32 %v3629, 0.0
        %s3631 = scalar_lea.vmem %s7, 3
        %v3632 = vld [vmem:[%s3631] sm:$0x1]
        %v3634 = vlaneseq
        %v3635 = vshrl.u32 %v3634, 7
        %v3636 = vsub.s32 0, %v3635
        %v3637 = vrot.slane %v3632, %v3636
        %v3639 = vmul.f32 %v3630, %v3637
        %s3640 = scalar_lea.vmem %s8, 3
        %v3641 = vld [vmem:[%s3640] sm:$0x1]
        %v3643 = vlaneseq
        %v3644 = vshrl.u32 %v3643, 7
        %v3645 = vsub.s32 0, %v3644
        %v3646 = vrot.slane %v3641, %v3645
        %v3648 = vadd.f32 %v3639, %v3646
        %3649 = vst.msk [vmem:[#allocation4] sm:$0xff] %vm1185, %v3648
        %v3650 = vld [vmem:[#allocation4] ss:$2 sm:$0xf]
        %v3651 = vld [vmem:[%s1217] ss:$2 sm:$0xf]
        %v3652 = vmax.f32 %v3650, %v3651
        %vm3653 = vcmask 519168
        %v3654 = vsel %vm3653, %v3652, 0.0
        %v3655 = vrot.slane %v3654, 4
        %v3656 = vadd.f32 %v3654, %v3655
        %v3657 = vrot.slane %v3656, 2
        %v3658 = vadd.f32 %v3656, %v3657
        %v3659 = vrot.slane %v3658, 1
        %v3660 = vadd.f32 %v3658, %v3659
        %v3661 = vrcp.pop 4.0
        %v3662 = vmul.f32 %v3660, %v3661
        %v3663 = vld [vmem:[%s9] sm:$0xff]
        %v3664 = vld [vmem:[%s9 + $0x8] sm:$0xff]
        %v3665 = vld [vmem:[%s9 + $0x10] sm:$0xff]
        %v3666 = vld [vmem:[%s9 + $0x18] sm:$0xff]
        %v3667 = vld [vmem:[%s9 + $0x20] sm:$0xff]
        %v3668 = vld [vmem:[%s9 + $0x28] sm:$0xff]
        %v3669 = vld [vmem:[%s9 + $0x30] sm:$0xff]
        %v3670 = vld [vmem:[%s9 + $0x38] sm:$0xff]
        %v3671 = vld [vmem:[%s10] sm:$0x1]
        %v3673 = vsel %vm1185, %v3662, 0
        %3675 = vmatprep.subr.mxu0 0.0
        %3676 = vmatpush1.msra.mxu0 %v3663
        %3677 = vmatprep.subr.mxu0 0.0
        %3678 = vmatpush1.msra.mxu0 %v3664
        %3679 = vmatprep.subr.mxu0 0.0
        %3680 = vmatpush1.msra.mxu0 %v3665
        %3681 = vmatprep.subr.mxu0 0.0
        %3682 = vmatpush1.msra.mxu0 %v3666
        %3683 = vmatprep.subr.mxu0 0.0
        %3684 = vmatpush1.msra.mxu0 %v3667
        %3685 = vmatprep.subr.mxu0 0.0
        %3686 = vmatpush1.msra.mxu0 %v3668
        %3687 = vmatprep.subr.mxu0 0.0
        %3688 = vmatpush1.msra.mxu0 %v3669
        %3689 = vmatprep.subr.mxu0 0.0
        %3690 = vmatpush1.msra.mxu0 %v3670
        %3691 = vmatprep.subr.mxu0 0.0
        %3692 = vmatpush1.msra.mxu0 0.0
        %3693 = vmatprep.subr.mxu0 0.0
        %3694 = vmatpush1.msra.mxu0 0.0
        %3695 = vmatprep.subr.mxu0 0.0
        %3696 = vmatpush1.msra.mxu0 0.0
        %3697 = vmatprep.subr.mxu0 0.0
        %3698 = vmatpush1.msra.mxu0 0.0
        %3699 = vmatprep.subr.mxu0 0.0
        %3700 = vmatpush1.msra.mxu0 0.0
        %3701 = vmatprep.subr.mxu0 0.0
        %3702 = vmatpush1.msra.mxu0 0.0
        %3703 = vmatprep.subr.mxu0 0.0
        %3704 = vmatpush1.msra.mxu0 0.0
        %3705 = vmatprep.subr.mxu0 0.0
        %3706 = vmatpush1.msra.mxu0 0.0
        %3707 = vmatprep.subr.mxu0 0.0
        %3708 = vmatpush1.msra.mxu0 0.0
        %3709 = vmatprep.subr.mxu0 0.0
        %3710 = vmatpush1.msra.mxu0 0.0
        %3711 = vmatprep.subr.mxu0 0.0
        %3712 = vmatpush1.msra.mxu0 0.0
        %3713 = vmatprep.subr.mxu0 0.0
        %3714 = vmatpush1.msra.mxu0 0.0
        %3715 = vmatprep.subr.mxu0 0.0
        %3716 = vmatpush1.msra.mxu0 0.0
        %3717 = vmatprep.subr.mxu0 0.0
        %3718 = vmatpush1.msra.mxu0 0.0
        %3719 = vmatprep.subr.mxu0 0.0
        %3720 = vmatpush1.msra.mxu0 0.0
        %3721 = vmatprep.subr.mxu0 0.0
        %3722 = vmatpush1.msra.mxu0 0.0
        %3723 = vmatprep.subr.mxu0 0.0
        %3724 = vmatpush1.msra.mxu0 0.0
        %3725 = vmatprep.subr.mxu0 0.0
        %3726 = vmatpush1.msra.mxu0 0.0
        %3727 = vmatprep.subr.mxu0 0.0
        %3728 = vmatpush1.msra.mxu0 0.0
        %3729 = vmatprep.subr.mxu0 0.0
        %3730 = vmatpush1.msra.mxu0 0.0
        %3731 = vmatprep.subr.mxu0 0.0
        %3732 = vmatpush1.msra.mxu0 0.0
        %3733 = vmatprep.subr.mxu0 0.0
        %3734 = vmatpush1.msra.mxu0 0.0
        %3735 = vmatprep.subr.mxu0 0.0
        %3736 = vmatpush1.msra.mxu0 0.0
        %3737 = vmatprep.subr.mxu0 0.0
        %3738 = vmatpush1.msra.mxu0 0.0
        %3739 = vmatprep.mubr.f32.mxu0 0.0
        %3740 = vmatmul.mubr.f32.gmra.mrb[0].mxu0 %v3673
        %v3741 = vpop.f32.mrb[0].mxu0
        %v3742 = vadd.f32 %v3671, %v3741
        %v3743 = vpop.f32.mrb[0].mxu0
        %3744 = vdwg.mxu0
        %vm3745 = vcmask 57344
        %3746 = vst.msk [vmem:[%s393] sm:$0x1] %vm3745, %v3742
        %s3747 = sand.u32 %s270, 1
        %s3748 = scalar_lea.sflag [#allocation7], %s3747
        %s3749 = sand.u32 %s270, 1
        %s3750 = scalar_lea.vmem [#allocation8], %s3749
        // Predicated region
        $region69: #{cnn4_forward.1} parent=63 // pred_check
          %p3751 = pneg %p280
        $region70: #{cnn4_forward.1} parent=63 // pred_check_branch
          %3753 = sbr.rel (%p3751) target = $region72
        $region71: #{cnn4_forward.1} parent=63 // pred_region
          %s3755 = ssub.s32 16, 16
          %3756 = vsyncadd %s3748, %s3755
          %s3757 = smul.addr %s26, 16
          %s3758 = scalar_lea.hbm %s11, %s3757
          %s3760 = sshll.u32 %s3750, 4
          %s3761 = int_to_ptr.vmem [resolvable:$true] %s3760
          %3763 = dma.vmem_to_hbm [thread:$0]  %s3761, 16, %s3758, %s3748
        $region72: #{cnn4_forward.1} parent=63 // pred_fallthru
          _
      $region64: #{cnn4_forward.1} parent=5 // pred_fallthru
        _
      %p3764 = scmp.le.s32.totalorder 2, %s21
      // Predicated region
      $region73: #{cnn4_forward.1} parent=5 // pred_check
        %p3765 = pneg %p3764
      $region74: #{cnn4_forward.1} parent=5 // pred_check_branch
        %3767 = sbr.rel (%p3765) target = $region76
      $region75: #{cnn4_forward.1} parent=5 // pred_region
        %s3768 = ssub.s32 %s21, 2
        // Predicated region
        $region77: #{cnn4_forward.1} parent=75 // pred_check
          %p3769 = pneg %p286
        $region78: #{cnn4_forward.1} parent=75 // pred_check_branch
          %3771 = sbr.rel (%p3769) target = $region80
        $region79: #{cnn4_forward.1} parent=75 // pred_region
          %s3772 = sand.u32 %s271, 1
          %s3773 = scalar_lea.sflag [#allocation7], %s3772
          %s3774 = sand.u32 %s271, 1
          %s3775 = scalar_lea.vmem [#allocation8], %s3774
          %3776 = dma.done %s3773, 16
        $region80: #{cnn4_forward.1} parent=75 // pred_fallthru
          _
      $region76: #{cnn4_forward.1} parent=5 // pred_fallthru
        _
    $region6: #{cnn4_forward.1} parent=1 // loop_footer
      %s25 = sadd.s32 1, %s21
    $region7: #{cnn4_forward.1} parent=1 // loop_footer_branch
      %20 = sbr.rel target = $region3
    $region8: #{cnn4_forward.1} parent=1 // loop_exit
      _
    %3777 = vsyncpa [#allocation6], 1
    %s3778 = scalar_lea.sflag [#allocation6], 1
    %3779 = vsyncpa %s3778, 1
    %3780 = vsyncpa [#allocation7], 1
    %s3781 = scalar_lea.sflag [#allocation7], 1
    %3782 = vsyncpa %s3781, 1

</llo_original>
